<compile_context>
chip_gen: v7x
topology: tpu7x:2x2x1
jax: 0.10.0
libtpu: 0.0.40
codegen_flags: <defaults>
</compile_context>

<pallas_src>
import functools

import jax
import jax.numpy as jnp
from jax.experimental import pallas as pl
from jax.experimental.pallas import tpu as pltpu


def _round_up(x, m):
    return (x + m - 1) // m * m


# ----------------------------- Pallas kernels -----------------------------

def _mm_bias_kernel(x_ref, w_ref, b_ref, o_ref, *, relu):
    # bf16 x bf16 on the MXU, f32 accumulate, f32 epilogue (bias + ReLU).
    acc = jnp.dot(x_ref[...], w_ref[...], preferred_element_type=jnp.float32)
    acc = acc + b_ref[...]
    if relu:
        acc = jnp.maximum(acc, 0.0)
    o_ref[...] = acc.astype(o_ref.dtype)


def _pick_tm(m, target=512):
    """Row tile: multiple of 16 (bf16 sublane tiling), <= target, and at least
    two grid steps when M is large enough to pipeline."""
    if m <= 256:
        return max(16, _round_up(m, 16))
    return min(target, _round_up((m + 1) // 2, 16))


def matmul_bias(x, w, bias, relu=True, tm_target=512):
    """Fused conv core: (M,K)@(K,Cout) + bias (+ReLU), row-tiled.

    x, w are bf16 (halves the HBM traffic of the tap-expanded patch stream);
    accumulation, bias add and ReLU stay in f32 and the output is f32 so the
    epilogue numerics match the original module.  BatchNorm scale is folded
    into `w` by the callers, so only a single bias stream reaches the kernel.
    """
    M, K = x.shape
    Kw, Cout = w.shape
    assert K == Kw
    tm = _pick_tm(M, tm_target)
    grid_m = pl.cdiv(M, tm)
    kern = functools.partial(_mm_bias_kernel, relu=relu)
    return pl.pallas_call(
        kern,
        out_shape=jax.ShapeDtypeStruct((M, Cout), jnp.float32),
        grid=(grid_m,),
        in_specs=[
            pl.BlockSpec((tm, K), lambda i: (i, 0)),
            pl.BlockSpec((K, Cout), lambda i: (0, 0)),
            pl.BlockSpec((1, Cout), lambda i: (0, 0)),
        ],
        out_specs=pl.BlockSpec((tm, Cout), lambda i: (i, 0)),
        compiler_params=pltpu.CompilerParams(
            dimension_semantics=("parallel",),
            vmem_limit_bytes=32 * 1024 * 1024,
        ),
    )(x, w, bias.reshape(1, Cout).astype(jnp.float32))


def _logit_kernel(x_ref, w_ref, b_ref, o_ref):
    # 1x1 conv with Cout=1, K=8: pure VPU multiply + cross-lane sum (no MXU).
    o_ref[...] = jnp.sum(x_ref[...] * w_ref[...], axis=-1, keepdims=True) + b_ref[...]


def conv1x1_logit(x, w, b):
    """Conv2d(C -> 1, 1x1) with bias.  x: (N,H,W,C) f32, w: (1,C,1,1), b: (1,)."""
    N, H, W, C = x.shape
    M = N * H * W
    xr = x.reshape(M, C)
    wv = w.reshape(1, C).astype(jnp.float32)
    bv = b.reshape(1, 1).astype(jnp.float32)
    tm = _pick_tm(M)
    y = pl.pallas_call(
        _logit_kernel,
        out_shape=jax.ShapeDtypeStruct((M, 1), jnp.float32),
        grid=(pl.cdiv(M, tm),),
        in_specs=[
            pl.BlockSpec((tm, C), lambda i: (i, 0)),
            pl.BlockSpec((1, C), lambda i: (0, 0)),
            pl.BlockSpec((1, 1), lambda i: (0, 0)),
        ],
        out_specs=pl.BlockSpec((tm, 1), lambda i: (i, 0)),
        compiler_params=pltpu.CompilerParams(dimension_semantics=("parallel",)),
    )(xr, wv, bv)
    return y.reshape(N, H, W, 1)


def _tmax_kernel(x_ref, o_ref):
    o_ref[...] = jnp.max(x_ref[...], axis=1)


def _pick_lane_tile(L, target=1024):
    """Largest divisor of L that is a multiple of 128 and <= target (else L)."""
    if L <= target:
        return L
    t = min(target, (L // 128) * 128)
    while t >= 128:
        if L % t == 0:
            return t
        t -= 128
    return L


def temporal_max(x):
    """torch.max(f, dim=2)[0] on channels-last features: (N,T,H,W,C) -> (N,H,W,C).
    Tiled over the lane-flattened H*W*C axis (lane-dense blocks), grid parallel."""
    N, T, H, W, C = x.shape
    L = H * W * C
    xr = x.reshape(N, T, L)
    tl = _pick_lane_tile(L)
    out = pl.pallas_call(
        _tmax_kernel,
        out_shape=jax.ShapeDtypeStruct((N, L), x.dtype),
        grid=(L // tl,),
        in_specs=[pl.BlockSpec((N, T, tl), lambda l: (0, 0, l))],
        out_specs=pl.BlockSpec((N, tl), lambda l: (0, l)),
        compiler_params=pltpu.CompilerParams(dimension_semantics=("parallel",)),
    )(xr)
    return out.reshape(N, H, W, C)


# ------------------------ conv wrappers (channels-last) ------------------------

def conv3d_relu(x, w, strides):
    """3x3x3 Conv3d (pad=1, no bias) + ReLU, channels-last.
    x: (N,D,H,W,Cin) f32, w: (Cout,Cin,3,3,3) torch layout."""
    N, D, H, W, C = x.shape
    Cout = w.shape[0]
    sd, sh, sw = strides
    Do = (D + 2 - 3) // sd + 1
    Ho = (H + 2 - 3) // sh + 1
    Wo = (W + 2 - 3) // sw + 1
    xp = jnp.pad(x.astype(jnp.bfloat16),
                 ((0, 0), (1, 1), (1, 1), (1, 1), (0, 0)))
    # TODO(synk): the 27x tap-expanded patch stream is still materialized in HBM
    # (bf16, channels-last, no post-amplification transpose); a fully fused
    # version would tap-accumulate inside the kernel via manual halo DMA.
    cols = []
    for dz in range(3):
        for dy in range(3):
            for dx in range(3):
                cols.append(xp[:,
                               dz:dz + (Do - 1) * sd + 1:sd,
                               dy:dy + (Ho - 1) * sh + 1:sh,
                               dx:dx + (Wo - 1) * sw + 1:sw,
                               :])
    patches = jnp.concatenate(cols, axis=-1).reshape(N * Do * Ho * Wo, 27 * C)
    wk = w.transpose(2, 3, 4, 1, 0).reshape(27 * C, Cout).astype(jnp.bfloat16)
    y = matmul_bias(patches, wk, jnp.zeros((Cout,), jnp.float32), relu=True)
    return y.reshape(N, Do, Ho, Wo, Cout)


def conv3x3_bn_relu(x, w, gamma, beta, mean, var, eps=1e-5):
    """Conv2d(3x3, pad=1, no bias) + BatchNorm2d (eval) + ReLU, channels-last.
    The BN scale is folded into the bf16 weights; the bias stays f32."""
    N, H, W, C = x.shape
    Cout = w.shape[0]
    xp = jnp.pad(x.astype(jnp.bfloat16), ((0, 0), (1, 1), (1, 1), (0, 0)))
    cols = [xp[:, dy:dy + H, dx:dx + W, :] for dy in range(3) for dx in range(3)]
    patches = jnp.concatenate(cols, axis=-1).reshape(N * H * W, 9 * C)
    scale = gamma / jnp.sqrt(var + eps)
    bias = beta - mean * scale
    wk = (w.transpose(2, 3, 1, 0).reshape(9 * C, Cout) * scale[None, :]
          ).astype(jnp.bfloat16)
    y = matmul_bias(patches, wk, bias, relu=True)
    return y.reshape(N, H, W, Cout)


def upsample2x_bilinear(x):
    """F.interpolate(scale_factor=2, mode='bilinear', align_corners=False), NHWC.
    Pure gather/weighting glue kept in XLA.
    # TODO(synk): could be folded into the taps of the following 3x3 conv so the
    # full-resolution upsampled tensor never hits HBM."""
    def axis_idx(size):
        o = jnp.arange(2 * size, dtype=jnp.float32)
        src = (o + 0.5) / 2.0 - 0.5
        i0 = jnp.floor(src)
        frac = src - i0
        lo = jnp.clip(i0, 0, size - 1).astype(jnp.int32)
        hi = jnp.clip(i0 + 1, 0, size - 1).astype(jnp.int32)
        return lo, hi, frac

    N, H, W, C = x.shape
    lo, hi, fh = axis_idx(H)
    fh = fh[None, :, None, None].astype(x.dtype)
    xh = x[:, lo, :, :] * (1.0 - fh) + x[:, hi, :, :] * fh
    lo, hi, fw = axis_idx(W)
    fw = fw[None, None, :, None].astype(x.dtype)
    return xh[:, :, lo, :] * (1.0 - fw) + xh[:, :, hi, :] * fw


# ------------------------------ model params ------------------------------

ENCODER_DIMS = [8, 16, 32]   # [x.size(1) for x in backbone(...)] analogue


def init_params(key):
    ks = jax.random.split(key, 20)
    d = ENCODER_DIMS
    p = {}
    # TODO(synk): InceptionI3d(in_channels=1, num_classes=512, non_local=True)
    # source not provided; using a synthetic 3-stage strided Conv3d+ReLU feature
    # pyramid stand-in producing the same kind of multi-scale feature list.
    p["bb_w0"] = 0.3 * jax.random.normal(ks[0], (d[0], 1, 3, 3, 3), jnp.float32)
    p["bb_w1"] = 0.2 * jax.random.normal(ks[1], (d[1], d[0], 3, 3, 3), jnp.float32)
    p["bb_w2"] = 0.2 * jax.random.normal(ks[2], (d[2], d[1], 3, 3, 3), jnp.float32)
    # Decoder: convs[i-1]: Conv2d(d[i]+d[i-1] -> d[i-1], 3x3, no bias) + BN + ReLU
    p["dec_w1"] = 0.1 * jax.random.normal(ks[3], (d[0], d[0] + d[1], 3, 3), jnp.float32)
    p["dec_w2"] = 0.1 * jax.random.normal(ks[4], (d[1], d[1] + d[2], 3, 3), jnp.float32)
    for i, c in [(1, d[0]), (2, d[1])]:
        p[f"bn_gamma{i}"] = 1.0 + 0.1 * jax.random.normal(ks[4 + 2 * i], (c,), jnp.float32)
        p[f"bn_beta{i}"] = 0.1 * jax.random.normal(ks[5 + 2 * i], (c,), jnp.float32)
        p[f"bn_mean{i}"] = 0.05 * jax.random.normal(ks[9 + 2 * i], (c,), jnp.float32)
        p[f"bn_var{i}"] = 1.0 + 0.2 * jax.random.uniform(ks[10 + 2 * i], (c,), jnp.float32)
    # logit: Conv2d(d[0] -> 1, 1x1) with bias
    p["logit_w"] = 0.1 * jax.random.normal(ks[16], (1, d[0], 1, 1), jnp.float32)
    p["logit_b"] = 0.01 * jax.random.normal(ks[17], (1,), jnp.float32)
    return p


# ------------------------------- forward pass -------------------------------

@jax.jit
def i3dd_forward(params, x):
    if x.ndim == 4:                          # (N,T,H,W) -> (N,1,T,H,W)
        x = x[:, None]
    x = jnp.transpose(x, (0, 2, 3, 4, 1))    # channels-last ONCE: (N,T,H,W,C)
    # backbone stand-in: multi-scale 3D feature maps (2x spatial drop per stage)
    f0 = conv3d_relu(x, params["bb_w0"], (1, 2, 2))
    f1 = conv3d_relu(f0, params["bb_w1"], (2, 2, 2))
    f2 = conv3d_relu(f1, params["bb_w2"], (2, 2, 2))
    # torch.max(f, dim=2)[0]
    fm = [temporal_max(f) for f in (f0, f1, f2)]
    # Decoder.forward (all channels-last; channel concat along the last axis)
    for i in range(len(fm) - 1, 0, -1):
        f_up = upsample2x_bilinear(fm[i])
        f = jnp.concatenate([fm[i - 1], f_up], axis=-1)
        fm[i - 1] = conv3x3_bn_relu(
            f, params[f"dec_w{i}"],
            params[f"bn_gamma{i}"], params[f"bn_beta{i}"],
            params[f"bn_mean{i}"], params[f"bn_var{i}"])
    y = conv1x1_logit(fm[0], params["logit_w"], params["logit_b"])  # (N,H,W,1)
    # self.up = nn.Upsample(scale_factor=1, mode='bilinear') -> identity resize
    return jnp.transpose(y, (0, 3, 1, 2))    # back to NCHW only at the boundary


if __name__ == "__main__":
    key = jax.random.PRNGKey(0)
    k_param, k_x = jax.random.split(key)
    params = init_params(k_param)
    # small 4-D input (N, T, H, W); forward adds the channel dim like the torch module
    x = jax.random.normal(k_x, (2, 8, 32, 32), jnp.float32)
    out = i3dd_forward(params, x)
    out = jax.block_until_ready(out)
    assert out.shape == (2, 1, 16, 16), out.shape
    assert jnp.isfinite(out).all()
    print("KERNEL_OK")
</pallas_src>

<mosaic_0001>
module attributes {stable_mosaic.version = 11 : i64} {
  func.func @_mm_bias_kernel(%arg0: i32, %arg1: memref<512x27xbf16, #tpu.memory_space<vmem>>, %arg2: memref<27x8xbf16, #tpu.memory_space<vmem>>, %arg3: memref<1x8xf32, #tpu.memory_space<vmem>>, %arg4: memref<512x8xf32, #tpu.memory_space<vmem>>) attributes {dimension_semantics = [#tpu.dimension_semantics<parallel>], iteration_bounds = array<i64: 8>, scalar_prefetch = 0 : i64, scratch_operands = 0 : i64, tpu.core_type = #tpu.core_type<tc>, window_params = [{transform_indices = @transform_0, window_bounds = array<i64: 512, 27>}, {pipeline_mode = #tpu.pipeline_mode<synchronous>, transform_indices = @transform_1, window_bounds = array<i64: 27, 8>}, {pipeline_mode = #tpu.pipeline_mode<synchronous>, transform_indices = @transform_2, window_bounds = array<i64: 1, 8>}, {transform_indices = @transform_3, window_bounds = array<i64: 512, 8>}]} {
    %c0 = arith.constant 0 : index
    %c0_0 = arith.constant 0 : index
    %0 = vector.load %arg1[%c0, %c0_0] : memref<512x27xbf16, #tpu.memory_space<vmem>>, vector<512x27xbf16>
    %c0_1 = arith.constant 0 : index
    %c0_2 = arith.constant 0 : index
    %1 = vector.load %arg2[%c0_1, %c0_2] : memref<27x8xbf16, #tpu.memory_space<vmem>>, vector<27x8xbf16>
    %cst = arith.constant dense<0.000000e+00> : vector<512x8xf32>
    %2 = tpu.matmul %0, %1, %cst {dimension_numbers = #tpu.dot_dimension_numbers<[1], [0], [0], [1], [0, 0, 1, 1], [], []>} : vector<512x27xbf16>, vector<27x8xbf16>, vector<512x8xf32> -> vector<512x8xf32>
    %c0_3 = arith.constant 0 : index
    %c0_4 = arith.constant 0 : index
    %3 = vector.load %arg3[%c0_3, %c0_4] : memref<1x8xf32, #tpu.memory_space<vmem>>, vector<1x8xf32>
    %4 = vector.broadcast %3 : vector<1x8xf32> to vector<512x8xf32>
    %5 = arith.addf %2, %4 : vector<512x8xf32>
    %cst_5 = arith.constant 0.000000e+00 : f32
    %6 = vector.broadcast %cst_5 : f32 to vector<512x8xf32>
    %7 = arith.maximumf %5, %6 : vector<512x8xf32>
    %c0_6 = arith.constant 0 : index
    %c0_7 = arith.constant 0 : index
    %8 = vector.load %arg4[%c0_6, %c0_7] : memref<512x8xf32, #tpu.memory_space<vmem>>, vector<512x8xf32>
    tpu.vector_store %arg4[%c0_6, %c0_7], %7 {strides = array<i32>} : memref<512x8xf32, #tpu.memory_space<vmem>>, vector<512x8xf32>,
    return
  }
  func.func @transform_0(%arg0: i32) -> (i32, i32) {
    %c0_i32 = arith.constant 0 : i32
    %c0_i32_0 = arith.constant 0 : i32
    return %arg0, %c0_i32 : i32, i32
  }
  func.func @transform_1(%arg0: i32) -> (i32, i32) {
    %c0_i32 = arith.constant 0 : i32
    %c0_i32_0 = arith.constant 0 : i32
    %c0_i32_1 = arith.constant 0 : i32
    return %c0_i32, %c0_i32_0 : i32, i32
  }
  func.func @transform_2(%arg0: i32) -> (i32, i32) {
    %c0_i32 = arith.constant 0 : i32
    %c0_i32_0 = arith.constant 0 : i32
    %c0_i32_1 = arith.constant 0 : i32
    return %c0_i32, %c0_i32_0 : i32, i32
  }
  func.func @transform_3(%arg0: i32) -> (i32, i32) {
    %c0_i32 = arith.constant 0 : i32
    %c0_i32_0 = arith.constant 0 : i32
    return %arg0, %c0_i32 : i32, i32
  }
}

module attributes {stable_mosaic.version = 11 : i64} {
  func.func @_tmax_kernel(%arg0: i32, %arg1: memref<2x8x1024xf32, #tpu.memory_space<vmem>>, %arg2: memref<2x1024xf32, #tpu.memory_space<vmem>>) attributes {dimension_semantics = [#tpu.dimension_semantics<parallel>], iteration_bounds = array<i64: 2>, scalar_prefetch = 0 : i64, scratch_operands = 0 : i64, tpu.core_type = #tpu.core_type<tc>, window_params = [{transform_indices = @transform_0, window_bounds = array<i64: 2, 8, 1024>}, {transform_indices = @transform_1, window_bounds = array<i64: 2, 1024>}]} {
    %c0 = arith.constant 0 : index
    %c0_0 = arith.constant 0 : index
    %c0_1 = arith.constant 0 : index
    %0 = vector.load %arg1[%c0, %c0_0, %c0_1] : memref<2x8x1024xf32, #tpu.memory_space<vmem>>, vector<2x8x1024xf32>
    %cst = arith.constant dense<0xFF800000> : vector<2x1024xf32>
    %1 = vector.multi_reduction <maximumf>, %0, %cst [1] : vector<2x8x1024xf32> to vector<2x1024xf32>
    %c0_2 = arith.constant 0 : index
    %c0_3 = arith.constant 0 : index
    %2 = vector.load %arg2[%c0_2, %c0_3] : memref<2x1024xf32, #tpu.memory_space<vmem>>, vector<2x1024xf32>
    tpu.vector_store %arg2[%c0_2, %c0_3], %1 {strides = array<i32>} : memref<2x1024xf32, #tpu.memory_space<vmem>>, vector<2x1024xf32>,
    return
  }
  func.func @transform_0(%arg0: i32) -> (i32, i32, i32) {
    %c0_i32 = arith.constant 0 : i32
    %c0_i32_0 = arith.constant 0 : i32
    %c0_i32_1 = arith.constant 0 : i32
    return %c0_i32, %c0_i32_0, %arg0 : i32, i32, i32
  }
  func.func @transform_1(%arg0: i32) -> (i32, i32) {
    %c0_i32 = arith.constant 0 : i32
    %c0_i32_0 = arith.constant 0 : i32
    return %c0_i32, %arg0 : i32, i32
  }
}

module attributes {stable_mosaic.version = 11 : i64} {
  func.func @_mm_bias_kernel(%arg0: i32, %arg1: memref<256x216xbf16, #tpu.memory_space<vmem>>, %arg2: memref<216x16xbf16, #tpu.memory_space<vmem>>, %arg3: memref<1x16xf32, #tpu.memory_space<vmem>>, %arg4: memref<256x16xf32, #tpu.memory_space<vmem>>) attributes {dimension_semantics = [#tpu.dimension_semantics<parallel>], iteration_bounds = array<i64: 2>, scalar_prefetch = 0 : i64, scratch_operands = 0 : i64, tpu.core_type = #tpu.core_type<tc>, window_params = [{transform_indices = @transform_0, window_bounds = array<i64: 256, 216>}, {pipeline_mode = #tpu.pipeline_mode<synchronous>, transform_indices = @transform_1, window_bounds = array<i64: 216, 16>}, {pipeline_mode = #tpu.pipeline_mode<synchronous>, transform_indices = @transform_2, window_bounds = array<i64: 1, 16>}, {transform_indices = @transform_3, window_bounds = array<i64: 256, 16>}]} {
    %c0 = arith.constant 0 : index
    %c0_0 = arith.constant 0 : index
    %0 = vector.load %arg1[%c0, %c0_0] : memref<256x216xbf16, #tpu.memory_space<vmem>>, vector<256x216xbf16>
    %c0_1 = arith.constant 0 : index
    %c0_2 = arith.constant 0 : index
    %1 = vector.load %arg2[%c0_1, %c0_2] : memref<216x16xbf16, #tpu.memory_space<vmem>>, vector<216x16xbf16>
    %cst = arith.constant dense<0.000000e+00> : vector<256x16xf32>
    %2 = tpu.matmul %0, %1, %cst {dimension_numbers = #tpu.dot_dimension_numbers<[1], [0], [0], [1], [0, 0, 1, 1], [], []>} : vector<256x216xbf16>, vector<216x16xbf16>, vector<256x16xf32> -> vector<256x16xf32>
    %c0_3 = arith.constant 0 : index
    %c0_4 = arith.constant 0 : index
    %3 = vector.load %arg3[%c0_3, %c0_4] : memref<1x16xf32, #tpu.memory_space<vmem>>, vector<1x16xf32>
    %4 = vector.broadcast %3 : vector<1x16xf32> to vector<256x16xf32>
    %5 = arith.addf %2, %4 : vector<256x16xf32>
    %cst_5 = arith.constant 0.000000e+00 : f32
    %6 = vector.broadcast %cst_5 : f32 to vector<256x16xf32>
    %7 = arith.maximumf %5, %6 : vector<256x16xf32>
    %c0_6 = arith.constant 0 : index
    %c0_7 = arith.constant 0 : index
    %8 = vector.load %arg4[%c0_6, %c0_7] : memref<256x16xf32, #tpu.memory_space<vmem>>, vector<256x16xf32>
    tpu.vector_store %arg4[%c0_6, %c0_7], %7 {strides = array<i32>} : memref<256x16xf32, #tpu.memory_space<vmem>>, vector<256x16xf32>,
    return
  }
  func.func @transform_0(%arg0: i32) -> (i32, i32) {
    %c0_i32 = arith.constant 0 : i32
    %c0_i32_0 = arith.constant 0 : i32
    return %arg0, %c0_i32 : i32, i32
  }
  func.func @transform_1(%arg0: i32) -> (i32, i32) {
    %c0_i32 = arith.constant 0 : i32
    %c0_i32_0 = arith.constant 0 : i32
    %c0_i32_1 = arith.constant 0 : i32
    return %c0_i32, %c0_i32_0 : i32, i32
  }
  func.func @transform_2(%arg0: i32) -> (i32, i32) {
    %c0_i32 = arith.constant 0 : i32
    %c0_i32_0 = arith.constant 0 : i32
    %c0_i32_1 = arith.constant 0 : i32
    return %c0_i32, %c0_i32_0 : i32, i32
  }
  func.func @transform_3(%arg0: i32) -> (i32, i32) {
    %c0_i32 = arith.constant 0 : i32
    %c0_i32_0 = arith.constant 0 : i32
    return %arg0, %c0_i32 : i32, i32
  }
}

module attributes {stable_mosaic.version = 11 : i64} {
  func.func @_tmax_kernel(%arg0: i32, %arg1: memref<2x4x1024xf32, #tpu.memory_space<vmem>>, %arg2: memref<2x1024xf32, #tpu.memory_space<vmem>>) attributes {dimension_semantics = [#tpu.dimension_semantics<parallel>], iteration_bounds = array<i64: 1>, scalar_prefetch = 0 : i64, scratch_operands = 0 : i64, tpu.core_type = #tpu.core_type<tc>, window_params = [{transform_indices = @transform_0, window_bounds = array<i64: 2, 4, 1024>}, {transform_indices = @transform_1, window_bounds = array<i64: 2, 1024>}]} {
    %c0 = arith.constant 0 : index
    %c0_0 = arith.constant 0 : index
    %c0_1 = arith.constant 0 : index
    %0 = vector.load %arg1[%c0, %c0_0, %c0_1] : memref<2x4x1024xf32, #tpu.memory_space<vmem>>, vector<2x4x1024xf32>
    %cst = arith.constant dense<0xFF800000> : vector<2x1024xf32>
    %1 = vector.multi_reduction <maximumf>, %0, %cst [1] : vector<2x4x1024xf32> to vector<2x1024xf32>
    %c0_2 = arith.constant 0 : index
    %c0_3 = arith.constant 0 : index
    %2 = vector.load %arg2[%c0_2, %c0_3] : memref<2x1024xf32, #tpu.memory_space<vmem>>, vector<2x1024xf32>
    tpu.vector_store %arg2[%c0_2, %c0_3], %1 {strides = array<i32>} : memref<2x1024xf32, #tpu.memory_space<vmem>>, vector<2x1024xf32>,
    return
  }
  func.func @transform_0(%arg0: i32) -> (i32, i32, i32) {
    %c0_i32 = arith.constant 0 : i32
    %c0_i32_0 = arith.constant 0 : i32
    %c0_i32_1 = arith.constant 0 : i32
    return %c0_i32, %c0_i32_0, %arg0 : i32, i32, i32
  }
  func.func @transform_1(%arg0: i32) -> (i32, i32) {
    %c0_i32 = arith.constant 0 : i32
    %c0_i32_0 = arith.constant 0 : i32
    return %c0_i32, %arg0 : i32, i32
  }
}

module attributes {stable_mosaic.version = 11 : i64} {
  func.func @_mm_bias_kernel(%arg0: i32, %arg1: memref<64x432xbf16, #tpu.memory_space<vmem>>, %arg2: memref<432x32xbf16, #tpu.memory_space<vmem>>, %arg3: memref<1x32xf32, #tpu.memory_space<vmem>>, %arg4: memref<64x32xf32, #tpu.memory_space<vmem>>) attributes {dimension_semantics = [#tpu.dimension_semantics<parallel>], iteration_bounds = array<i64: 1>, scalar_prefetch = 0 : i64, scratch_operands = 0 : i64, tpu.core_type = #tpu.core_type<tc>, window_params = [{transform_indices = @transform_0, window_bounds = array<i64: 64, 432>}, {pipeline_mode = #tpu.pipeline_mode<synchronous>, transform_indices = @transform_1, window_bounds = array<i64: 432, 32>}, {pipeline_mode = #tpu.pipeline_mode<synchronous>, transform_indices = @transform_2, window_bounds = array<i64: 1, 32>}, {transform_indices = @transform_3, window_bounds = array<i64: 64, 32>}]} {
    %c0 = arith.constant 0 : index
    %c0_0 = arith.constant 0 : index
    %0 = vector.load %arg1[%c0, %c0_0] : memref<64x432xbf16, #tpu.memory_space<vmem>>, vector<64x432xbf16>
    %c0_1 = arith.constant 0 : index
    %c0_2 = arith.constant 0 : index
    %1 = vector.load %arg2[%c0_1, %c0_2] : memref<432x32xbf16, #tpu.memory_space<vmem>>, vector<432x32xbf16>
    %cst = arith.constant dense<0.000000e+00> : vector<64x32xf32>
    %2 = tpu.matmul %0, %1, %cst {dimension_numbers = #tpu.dot_dimension_numbers<[1], [0], [0], [1], [0, 0, 1, 1], [], []>} : vector<64x432xbf16>, vector<432x32xbf16>, vector<64x32xf32> -> vector<64x32xf32>
    %c0_3 = arith.constant 0 : index
    %c0_4 = arith.constant 0 : index
    %3 = vector.load %arg3[%c0_3, %c0_4] : memref<1x32xf32, #tpu.memory_space<vmem>>, vector<1x32xf32>
    %4 = vector.broadcast %3 : vector<1x32xf32> to vector<64x32xf32>
    %5 = arith.addf %2, %4 : vector<64x32xf32>
    %cst_5 = arith.constant 0.000000e+00 : f32
    %6 = vector.broadcast %cst_5 : f32 to vector<64x32xf32>
    %7 = arith.maximumf %5, %6 : vector<64x32xf32>
    %c0_6 = arith.constant 0 : index
    %c0_7 = arith.constant 0 : index
    %8 = vector.load %arg4[%c0_6, %c0_7] : memref<64x32xf32, #tpu.memory_space<vmem>>, vector<64x32xf32>
    tpu.vector_store %arg4[%c0_6, %c0_7], %7 {strides = array<i32>} : memref<64x32xf32, #tpu.memory_space<vmem>>, vector<64x32xf32>,
    return
  }
  func.func @transform_0(%arg0: i32) -> (i32, i32) {
    %c0_i32 = arith.constant 0 : i32
    %c0_i32_0 = arith.constant 0 : i32
    return %arg0, %c0_i32 : i32, i32
  }
  func.func @transform_1(%arg0: i32) -> (i32, i32) {
    %c0_i32 = arith.constant 0 : i32
    %c0_i32_0 = arith.constant 0 : i32
    %c0_i32_1 = arith.constant 0 : i32
    return %c0_i32, %c0_i32_0 : i32, i32
  }
  func.func @transform_2(%arg0: i32) -> (i32, i32) {
    %c0_i32 = arith.constant 0 : i32
    %c0_i32_0 = arith.constant 0 : i32
    %c0_i32_1 = arith.constant 0 : i32
    return %c0_i32, %c0_i32_0 : i32, i32
  }
  func.func @transform_3(%arg0: i32) -> (i32, i32) {
    %c0_i32 = arith.constant 0 : i32
    %c0_i32_0 = arith.constant 0 : i32
    return %arg0, %c0_i32 : i32, i32
  }
}

module attributes {stable_mosaic.version = 11 : i64} {
  func.func @_tmax_kernel(%arg0: i32, %arg1: memref<2x2x512xf32, #tpu.memory_space<vmem>>, %arg2: memref<2x512xf32, #tpu.memory_space<vmem>>) attributes {dimension_semantics = [#tpu.dimension_semantics<parallel>], iteration_bounds = array<i64: 1>, scalar_prefetch = 0 : i64, scratch_operands = 0 : i64, tpu.core_type = #tpu.core_type<tc>, window_params = [{transform_indices = @transform_0, window_bounds = array<i64: 2, 2, 512>}, {transform_indices = @transform_1, window_bounds = array<i64: 2, 512>}]} {
    %c0 = arith.constant 0 : index
    %c0_0 = arith.constant 0 : index
    %c0_1 = arith.constant 0 : index
    %0 = vector.load %arg1[%c0, %c0_0, %c0_1] : memref<2x2x512xf32, #tpu.memory_space<vmem>>, vector<2x2x512xf32>
    %cst = arith.constant dense<0xFF800000> : vector<2x512xf32>
    %1 = vector.multi_reduction <maximumf>, %0, %cst [1] : vector<2x2x512xf32> to vector<2x512xf32>
    %c0_2 = arith.constant 0 : index
    %c0_3 = arith.constant 0 : index
    %2 = vector.load %arg2[%c0_2, %c0_3] : memref<2x512xf32, #tpu.memory_space<vmem>>, vector<2x512xf32>
    tpu.vector_store %arg2[%c0_2, %c0_3], %1 {strides = array<i32>} : memref<2x512xf32, #tpu.memory_space<vmem>>, vector<2x512xf32>,
    return
  }
  func.func @transform_0(%arg0: i32) -> (i32, i32, i32) {
    %c0_i32 = arith.constant 0 : i32
    %c0_i32_0 = arith.constant 0 : i32
    %c0_i32_1 = arith.constant 0 : i32
    return %c0_i32, %c0_i32_0, %arg0 : i32, i32, i32
  }
  func.func @transform_1(%arg0: i32) -> (i32, i32) {
    %c0_i32 = arith.constant 0 : i32
    %c0_i32_0 = arith.constant 0 : i32
    return %c0_i32, %arg0 : i32, i32
  }
}

module attributes {stable_mosaic.version = 11 : i64} {
  func.func @_mm_bias_kernel(%arg0: i32, %arg1: memref<128x432xbf16, #tpu.memory_space<vmem>>, %arg2: memref<432x16xbf16, #tpu.memory_space<vmem>>, %arg3: memref<1x16xf32, #tpu.memory_space<vmem>>, %arg4: memref<128x16xf32, #tpu.memory_space<vmem>>) attributes {dimension_semantics = [#tpu.dimension_semantics<parallel>], iteration_bounds = array<i64: 1>, scalar_prefetch = 0 : i64, scratch_operands = 0 : i64, tpu.core_type = #tpu.core_type<tc>, window_params = [{transform_indices = @transform_0, window_bounds = array<i64: 128, 432>}, {pipeline_mode = #tpu.pipeline_mode<synchronous>, transform_indices = @transform_1, window_bounds = array<i64: 432, 16>}, {pipeline_mode = #tpu.pipeline_mode<synchronous>, transform_indices = @transform_2, window_bounds = array<i64: 1, 16>}, {transform_indices = @transform_3, window_bounds = array<i64: 128, 16>}]} {
    %c0 = arith.constant 0 : index
    %c0_0 = arith.constant 0 : index
    %0 = vector.load %arg1[%c0, %c0_0] : memref<128x432xbf16, #tpu.memory_space<vmem>>, vector<128x432xbf16>
    %c0_1 = arith.constant 0 : index
    %c0_2 = arith.constant 0 : index
    %1 = vector.load %arg2[%c0_1, %c0_2] : memref<432x16xbf16, #tpu.memory_space<vmem>>, vector<432x16xbf16>
    %cst = arith.constant dense<0.000000e+00> : vector<128x16xf32>
    %2 = tpu.matmul %0, %1, %cst {dimension_numbers = #tpu.dot_dimension_numbers<[1], [0], [0], [1], [0, 0, 1, 1], [], []>} : vector<128x432xbf16>, vector<432x16xbf16>, vector<128x16xf32> -> vector<128x16xf32>
    %c0_3 = arith.constant 0 : index
    %c0_4 = arith.constant 0 : index
    %3 = vector.load %arg3[%c0_3, %c0_4] : memref<1x16xf32, #tpu.memory_space<vmem>>, vector<1x16xf32>
    %4 = vector.broadcast %3 : vector<1x16xf32> to vector<128x16xf32>
    %5 = arith.addf %2, %4 : vector<128x16xf32>
    %cst_5 = arith.constant 0.000000e+00 : f32
    %6 = vector.broadcast %cst_5 : f32 to vector<128x16xf32>
    %7 = arith.maximumf %5, %6 : vector<128x16xf32>
    %c0_6 = arith.constant 0 : index
    %c0_7 = arith.constant 0 : index
    %8 = vector.load %arg4[%c0_6, %c0_7] : memref<128x16xf32, #tpu.memory_space<vmem>>, vector<128x16xf32>
    tpu.vector_store %arg4[%c0_6, %c0_7], %7 {strides = array<i32>} : memref<128x16xf32, #tpu.memory_space<vmem>>, vector<128x16xf32>,
    return
  }
  func.func @transform_0(%arg0: i32) -> (i32, i32) {
    %c0_i32 = arith.constant 0 : i32
    %c0_i32_0 = arith.constant 0 : i32
    return %arg0, %c0_i32 : i32, i32
  }
  func.func @transform_1(%arg0: i32) -> (i32, i32) {
    %c0_i32 = arith.constant 0 : i32
    %c0_i32_0 = arith.constant 0 : i32
    %c0_i32_1 = arith.constant 0 : i32
    return %c0_i32, %c0_i32_0 : i32, i32
  }
  func.func @transform_2(%arg0: i32) -> (i32, i32) {
    %c0_i32 = arith.constant 0 : i32
    %c0_i32_0 = arith.constant 0 : i32
    %c0_i32_1 = arith.constant 0 : i32
    return %c0_i32, %c0_i32_0 : i32, i32
  }
  func.func @transform_3(%arg0: i32) -> (i32, i32) {
    %c0_i32 = arith.constant 0 : i32
    %c0_i32_0 = arith.constant 0 : i32
    return %arg0, %c0_i32 : i32, i32
  }
}

module attributes {stable_mosaic.version = 11 : i64} {
  func.func @_mm_bias_kernel(%arg0: i32, %arg1: memref<256x216xbf16, #tpu.memory_space<vmem>>, %arg2: memref<216x8xbf16, #tpu.memory_space<vmem>>, %arg3: memref<1x8xf32, #tpu.memory_space<vmem>>, %arg4: memref<256x8xf32, #tpu.memory_space<vmem>>) attributes {dimension_semantics = [#tpu.dimension_semantics<parallel>], iteration_bounds = array<i64: 2>, scalar_prefetch = 0 : i64, scratch_operands = 0 : i64, tpu.core_type = #tpu.core_type<tc>, window_params = [{transform_indices = @transform_0, window_bounds = array<i64: 256, 216>}, {pipeline_mode = #tpu.pipeline_mode<synchronous>, transform_indices = @transform_1, window_bounds = array<i64: 216, 8>}, {pipeline_mode = #tpu.pipeline_mode<synchronous>, transform_indices = @transform_2, window_bounds = array<i64: 1, 8>}, {transform_indices = @transform_3, window_bounds = array<i64: 256, 8>}]} {
    %c0 = arith.constant 0 : index
    %c0_0 = arith.constant 0 : index
    %0 = vector.load %arg1[%c0, %c0_0] : memref<256x216xbf16, #tpu.memory_space<vmem>>, vector<256x216xbf16>
    %c0_1 = arith.constant 0 : index
    %c0_2 = arith.constant 0 : index
    %1 = vector.load %arg2[%c0_1, %c0_2] : memref<216x8xbf16, #tpu.memory_space<vmem>>, vector<216x8xbf16>
    %cst = arith.constant dense<0.000000e+00> : vector<256x8xf32>
    %2 = tpu.matmul %0, %1, %cst {dimension_numbers = #tpu.dot_dimension_numbers<[1], [0], [0], [1], [0, 0, 1, 1], [], []>} : vector<256x216xbf16>, vector<216x8xbf16>, vector<256x8xf32> -> vector<256x8xf32>
    %c0_3 = arith.constant 0 : index
    %c0_4 = arith.constant 0 : index
    %3 = vector.load %arg3[%c0_3, %c0_4] : memref<1x8xf32, #tpu.memory_space<vmem>>, vector<1x8xf32>
    %4 = vector.broadcast %3 : vector<1x8xf32> to vector<256x8xf32>
    %5 = arith.addf %2, %4 : vector<256x8xf32>
    %cst_5 = arith.constant 0.000000e+00 : f32
    %6 = vector.broadcast %cst_5 : f32 to vector<256x8xf32>
    %7 = arith.maximumf %5, %6 : vector<256x8xf32>
    %c0_6 = arith.constant 0 : index
    %c0_7 = arith.constant 0 : index
    %8 = vector.load %arg4[%c0_6, %c0_7] : memref<256x8xf32, #tpu.memory_space<vmem>>, vector<256x8xf32>
    tpu.vector_store %arg4[%c0_6, %c0_7], %7 {strides = array<i32>} : memref<256x8xf32, #tpu.memory_space<vmem>>, vector<256x8xf32>,
    return
  }
  func.func @transform_0(%arg0: i32) -> (i32, i32) {
    %c0_i32 = arith.constant 0 : i32
    %c0_i32_0 = arith.constant 0 : i32
    return %arg0, %c0_i32 : i32, i32
  }
  func.func @transform_1(%arg0: i32) -> (i32, i32) {
    %c0_i32 = arith.constant 0 : i32
    %c0_i32_0 = arith.constant 0 : i32
    %c0_i32_1 = arith.constant 0 : i32
    return %c0_i32, %c0_i32_0 : i32, i32
  }
  func.func @transform_2(%arg0: i32) -> (i32, i32) {
    %c0_i32 = arith.constant 0 : i32
    %c0_i32_0 = arith.constant 0 : i32
    %c0_i32_1 = arith.constant 0 : i32
    return %c0_i32, %c0_i32_0 : i32, i32
  }
  func.func @transform_3(%arg0: i32) -> (i32, i32) {
    %c0_i32 = arith.constant 0 : i32
    %c0_i32_0 = arith.constant 0 : i32
    return %arg0, %c0_i32 : i32, i32
  }
}

module attributes {stable_mosaic.version = 11 : i64} {
  func.func @_logit_kernel(%arg0: i32, %arg1: memref<256x8xf32, #tpu.memory_space<vmem>>, %arg2: memref<1x8xf32, #tpu.memory_space<vmem>>, %arg3: memref<1x1xf32, #tpu.memory_space<vmem>>, %arg4: memref<256x1xf32, #tpu.memory_space<vmem>>) attributes {dimension_semantics = [#tpu.dimension_semantics<parallel>], iteration_bounds = array<i64: 2>, scalar_prefetch = 0 : i64, scratch_operands = 0 : i64, tpu.core_type = #tpu.core_type<tc>, window_params = [{transform_indices = @transform_0, window_bounds = array<i64: 256, 8>}, {pipeline_mode = #tpu.pipeline_mode<synchronous>, transform_indices = @transform_1, window_bounds = array<i64: 1, 8>}, {pipeline_mode = #tpu.pipeline_mode<synchronous>, transform_indices = @transform_2, window_bounds = array<i64: 1, 1>}, {transform_indices = @transform_3, window_bounds = array<i64: 256, 1>}]} {
    %c0 = arith.constant 0 : index
    %c0_0 = arith.constant 0 : index
    %0 = vector.load %arg1[%c0, %c0_0] : memref<256x8xf32, #tpu.memory_space<vmem>>, vector<256x8xf32>
    %c0_1 = arith.constant 0 : index
    %c0_2 = arith.constant 0 : index
    %1 = vector.load %arg2[%c0_1, %c0_2] : memref<1x8xf32, #tpu.memory_space<vmem>>, vector<1x8xf32>
    %2 = vector.broadcast %1 : vector<1x8xf32> to vector<256x8xf32>
    %3 = arith.mulf %0, %2 : vector<256x8xf32>
    %cst = arith.constant dense<0.000000e+00> : vector<256xf32>
    %4 = vector.multi_reduction <add>, %3, %cst [1] : vector<256x8xf32> to vector<256xf32>
    %5 = vector.shape_cast %4 : vector<256xf32> to vector<256x1xf32>
    %c0_3 = arith.constant 0 : index
    %c0_4 = arith.constant 0 : index
    %6 = vector.load %arg3[%c0_3, %c0_4] : memref<1x1xf32, #tpu.memory_space<vmem>>, vector<1x1xf32>
    %7 = vector.broadcast %6 : vector<1x1xf32> to vector<256x1xf32>
    %8 = arith.addf %5, %7 : vector<256x1xf32>
    %c0_5 = arith.constant 0 : index
    %c0_6 = arith.constant 0 : index
    %9 = vector.load %arg4[%c0_5, %c0_6] : memref<256x1xf32, #tpu.memory_space<vmem>>, vector<256x1xf32>
    tpu.vector_store %arg4[%c0_5, %c0_6], %8 {strides = array<i32>} : memref<256x1xf32, #tpu.memory_space<vmem>>, vector<256x1xf32>,
    return
  }
  func.func @transform_0(%arg0: i32) -> (i32, i32) {
    %c0_i32 = arith.constant 0 : i32
    %c0_i32_0 = arith.constant 0 : i32
    return %arg0, %c0_i32 : i32, i32
  }
  func.func @transform_1(%arg0: i32) -> (i32, i32) {
    %c0_i32 = arith.constant 0 : i32
    %c0_i32_0 = arith.constant 0 : i32
    %c0_i32_1 = arith.constant 0 : i32
    return %c0_i32, %c0_i32_0 : i32, i32
  }
  func.func @transform_2(%arg0: i32) -> (i32, i32) {
    %c0_i32 = arith.constant 0 : i32
    %c0_i32_0 = arith.constant 0 : i32
    %c0_i32_1 = arith.constant 0 : i32
    return %c0_i32, %c0_i32_0 : i32, i32
  }
  func.func @transform_3(%arg0: i32) -> (i32, i32) {
    %c0_i32 = arith.constant 0 : i32
    %c0_i32_0 = arith.constant 0 : i32
    return %arg0, %c0_i32 : i32, i32
  }
}

</mosaic_0001>

<llo_original>
// kernel: i3dd_forward.9
$region0: #{i3dd_forward.9}
  #allocation0 [shape = 'u32[]', space=smem, size = 0x4, offset = 0x4, fixed_abs, tag = 'smem constant byte address 0x4 - core index']
  #allocation1 [shape = 'u32[144,128]{1,0:T(1,128)}', space=vmem, size = 0x12000, scoped, tag = 'internal scratch']
  %s0 = inlined_call_operand.vmem [shape: bf16[4096,27], index: 0, kind: input, shape index: {}]
  %s1 = inlined_call_operand.vmem [shape: bf16[27,8], index: 1, kind: input, shape index: {}]
  %s2 = inlined_call_operand.vmem [shape: f32[1,8], index: 2, kind: input, shape index: {}]
  %s3 = inlined_call_operand.vmem [shape: f32[4096,8], index: 3, kind: output, shape index: {}]
  %s4 = sld [smem:[#allocation0]]
  $region45: #{i3dd_forward.9} parent=0
    _
  %s6 = ssub.s32 1, %s4
  %s7 = scalar_select 0, %s6, %s4
  loop: start=0, step=1, limit=10
  $region2: #{i3dd_forward.9} parent=0 // loop_pre_header
    _
  $region3: #{i3dd_forward.9} parent=0 // loop_header
    %s9 = sphi 0, %s13
    %p10 = scmp.ge.s32.totalorder %s9, 10
    %s19 = sphi 0, %s21
    %s22 = sphi 0, %s19
    %s23 = sphi 0, %s22
    %s39 = sphi 0, %s23
    %s43 = sphi 0, %s43
    %s45 = sphi 0, %s43
    %s46 = sphi 0, %s45
    %s60 = sphi 0, %s46
    %s64 = sphi 0, %s64
    %s66 = sphi 0, %s64
    %s67 = sphi 0, %s66
    %s81 = sphi 0, %s67
    %s87 = sphi 0, %s89
    %s90 = sphi 0, %s87
    %s91 = sphi 0, %s90
    %s107 = sphi 0, %s91
  $region4: #{i3dd_forward.9} parent=0 // loop_header_branch
    %12 = sbr.rel (%p10) target = $region8
  $region5: #{i3dd_forward.9} parent=0 // loop_body
    %s14 = ssub.s32 %s9, 1
    %s15 = ssub.s32 %s9, 2
    %s16 = sadd.s32 %s9, 1
    %s17 = ssub.s32 %s9, %s16
    %p18 = scmp.eq.s32.totalorder %s17, 0
    %s20 = sadd.s32 %s19, 1
    %s21 = scalar_select %p18, %s19, %s20
    %p24 = pneg %p18
    %p25 = scmp.eq.s32.totalorder %s9, 7
    %p26 = por %p24, %p25
    %p27 = scmp.ne.s32.totalorder %s19, %s22
    %p28 = scmp.eq.s32.totalorder %s9, 0
    %p29 = por %p27, %p28
    %p30 = scmp.ne.s32.totalorder %s19, %s22
    %p31 = scmp.eq.s32.totalorder %s14, 7
    %p32 = por %p30, %p31
    %p33 = scmp.ne.s32.totalorder %s22, %s23
    %p34 = scmp.eq.s32.totalorder %s14, 0
    %p35 = por %p33, %p34
    %p36 = scmp.ne.s32.totalorder %s22, %s23
    %p37 = scmp.eq.s32.totalorder %s15, 7
    %p38 = por %p36, %p37
    %p40 = scmp.ne.s32.totalorder %s23, %s39
    %p41 = scmp.eq.s32.totalorder %s15, 0
    %p42 = por %p40, %p41
    %s44 = sadd.s32 %s43, 1
    %p47 = scmp.eq.s32.totalorder %s9, 7
    %p48 = scmp.ne.s32.totalorder %s43, %s45
    %p49 = scmp.eq.s32.totalorder %s9, 0
    %p50 = por %p48, %p49
    %p51 = scmp.ne.s32.totalorder %s43, %s45
    %p52 = scmp.eq.s32.totalorder %s14, 7
    %p53 = por %p51, %p52
    %p54 = scmp.ne.s32.totalorder %s45, %s46
    %p55 = scmp.eq.s32.totalorder %s14, 0
    %p56 = por %p54, %p55
    %p57 = scmp.ne.s32.totalorder %s45, %s46
    %p58 = scmp.eq.s32.totalorder %s15, 7
    %p59 = por %p57, %p58
    %p61 = scmp.ne.s32.totalorder %s46, %s60
    %p62 = scmp.eq.s32.totalorder %s15, 0
    %p63 = por %p61, %p62
    %s65 = sadd.s32 %s64, 1
    %p68 = scmp.eq.s32.totalorder %s9, 7
    %p69 = scmp.ne.s32.totalorder %s64, %s66
    %p70 = scmp.eq.s32.totalorder %s9, 0
    %p71 = por %p69, %p70
    %p72 = scmp.ne.s32.totalorder %s64, %s66
    %p73 = scmp.eq.s32.totalorder %s14, 7
    %p74 = por %p72, %p73
    %p75 = scmp.ne.s32.totalorder %s66, %s67
    %p76 = scmp.eq.s32.totalorder %s14, 0
    %p77 = por %p75, %p76
    %p78 = scmp.ne.s32.totalorder %s66, %s67
    %p79 = scmp.eq.s32.totalorder %s15, 7
    %p80 = por %p78, %p79
    %p82 = scmp.ne.s32.totalorder %s67, %s81
    %p83 = scmp.eq.s32.totalorder %s15, 0
    %p84 = por %p82, %p83
    %s85 = ssub.s32 %s9, %s16
    %p86 = scmp.eq.s32.totalorder %s85, 0
    %s88 = sadd.s32 %s87, 1
    %s89 = scalar_select %p86, %s87, %s88
    %p92 = pneg %p86
    %p93 = scmp.eq.s32.totalorder %s9, 7
    %p94 = por %p92, %p93
    %p95 = scmp.ne.s32.totalorder %s87, %s90
    %p96 = scmp.eq.s32.totalorder %s9, 0
    %p97 = por %p95, %p96
    %p98 = scmp.ne.s32.totalorder %s87, %s90
    %p99 = scmp.eq.s32.totalorder %s14, 7
    %p100 = por %p98, %p99
    %p101 = scmp.ne.s32.totalorder %s90, %s91
    %p102 = scmp.eq.s32.totalorder %s14, 0
    %p103 = por %p101, %p102
    %p104 = scmp.ne.s32.totalorder %s90, %s91
    %p105 = scmp.eq.s32.totalorder %s15, 7
    %p106 = por %p104, %p105
    %p108 = scmp.ne.s32.totalorder %s91, %s107
    %p109 = scmp.eq.s32.totalorder %s15, 0
    %p110 = por %p108, %p109
    %p111 = scmp.le.s32.totalorder 1, %s9
    %p112 = scmp.lt.s32.totalorder %s9, 9
    %p113 = pnand %p111, %p112
    %p114 = pneg %p113
    // Predicated region
    $region9: #{i3dd_forward.9} parent=5 // pred_check
      _
    $region10: #{i3dd_forward.9} parent=5 // pred_check_branch
      %116 = sbr.rel (%p113) target = $region12
    $region11: #{i3dd_forward.9} parent=5 // pred_region
      %s117 = ssub.s32 %s9, 1
      // Predicated region
      $region13: #{i3dd_forward.9} parent=11 // pred_check
        %p118 = pneg %p56
      $region14: #{i3dd_forward.9} parent=11 // pred_check_branch
        %120 = sbr.rel (%p118) target = $region16
      $region15: #{i3dd_forward.9} parent=11 // pred_region
        _
      $region16: #{i3dd_forward.9} parent=11 // pred_fallthru
        _
      // Predicated region
      $region17: #{i3dd_forward.9} parent=11 // pred_check
        %p121 = pneg %p77
      $region18: #{i3dd_forward.9} parent=11 // pred_check_branch
        %123 = sbr.rel (%p121) target = $region20
      $region19: #{i3dd_forward.9} parent=11 // pred_region
        _
      $region20: #{i3dd_forward.9} parent=11 // pred_fallthru
        _
    $region12: #{i3dd_forward.9} parent=5 // pred_fallthru
      _
    %p124 = scmp.lt.s32.totalorder %s9, 8
    // Predicated region
    $region21: #{i3dd_forward.9} parent=5 // pred_check
      %p125 = pneg %p124
    $region22: #{i3dd_forward.9} parent=5 // pred_check_branch
      %127 = sbr.rel (%p125) target = $region24
    $region23: #{i3dd_forward.9} parent=5 // pred_region
      // Predicated region
      $region25: #{i3dd_forward.9} parent=23 // pred_check
        %p128 = pneg %p29
      $region26: #{i3dd_forward.9} parent=23 // pred_check_branch
        %130 = sbr.rel (%p128) target = $region28
      $region27: #{i3dd_forward.9} parent=23 // pred_region
        %s131 = smul.u32 64, %s9
        %p132 = scmp.lt.s32.totalorder %s131, 511
        %s133 = scalar_select %p132, %s131, 511
        %s134 = smul.addr %s133, 4
        %s135 = scalar_lea.vmem %s0, %s134
        %s136 = smul.u32 64, %s9
      $region28: #{i3dd_forward.9} parent=23 // pred_fallthru
        _
    $region24: #{i3dd_forward.9} parent=5 // pred_fallthru
      _
    %p137 = scmp.le.s32.totalorder 1, %s9
    %p138 = scmp.lt.s32.totalorder %s9, 9
    %p139 = pnand %p137, %p138
    %p140 = pneg %p139
    // Predicated region
    $region29: #{i3dd_forward.9} parent=5 // pred_check
      _
    $region30: #{i3dd_forward.9} parent=5 // pred_check_branch
      %142 = sbr.rel (%p139) target = $region32
    $region31: #{i3dd_forward.9} parent=5 // pred_region
      %s143 = ssub.s32 %s9, 1
      %s144 = smul.u32 64, %s14
      %p145 = scmp.lt.s32.totalorder %s144, 511
      %s146 = scalar_select %p145, %s144, 511
      %s147 = smul.addr %s146, 4
      %s148 = scalar_lea.vmem %s0, %s147
      %p149 = pneg %p35
      %p150 = pneg %p32
      %p151 = pneg %p56
      %p152 = pneg %p53
      %p153 = pneg %p77
      %p154 = pneg %p74
      %p155 = pneg %p103
      %p156 = pneg %p100
      %s157 = smul.u32 64, %s14
      %p158 = scmp.lt.s32.totalorder %s157, 511
      %s159 = scalar_select %p158, %s157, 511
      %s160 = smul.addr %s159, 8
      %s161 = scalar_lea.vmem %s3, %s160
      %s162 = smul.u32 64, %s14
      %p163 = scmp.lt.s32.totalorder %s162, 511
      %s164 = scalar_select %p163, %s162, 511
      %s165 = smul.addr %s164, 4
      %s166 = scalar_lea.vmem %s0, %s165
      %s167 = smul.u32 64, %s14
      %s168 = smul.u32 64, %s14
      %p169 = scmp.lt.s32.totalorder %s168, 511
      %s170 = scalar_select %p169, %s168, 511
      %s171 = smul.addr %s170, 8
      %s172 = scalar_lea.vmem %s3, %s171
      %s173 = smul.u32 64, %s14
      %v175 = vld [vmem:[%s166] sm:$0xf]
      %v176 = vld [vmem:[%s166 + $0x4] sm:$0xf]
      %v177 = vld [vmem:[%s166 + $0x8] sm:$0xf]
      %v178 = vld [vmem:[%s166 + $0xc] sm:$0xf]
      %v179 = vld [vmem:[%s166 + $0x10] sm:$0xf]
      %v180 = vld [vmem:[%s166 + $0x14] sm:$0xf]
      %v181 = vld [vmem:[%s166 + $0x18] sm:$0xf]
      %v182 = vld [vmem:[%s166 + $0x1c] sm:$0xf]
      %v183 = vld [vmem:[%s166 + $0x20] sm:$0xf]
      %v184 = vld [vmem:[%s166 + $0x24] sm:$0xf]
      %v185 = vld [vmem:[%s166 + $0x28] sm:$0xf]
      %v186 = vld [vmem:[%s166 + $0x2c] sm:$0xf]
      %v187 = vld [vmem:[%s166 + $0x30] sm:$0xf]
      %v188 = vld [vmem:[%s166 + $0x34] sm:$0xf]
      %v189 = vld [vmem:[%s166 + $0x38] sm:$0xf]
      %v190 = vld [vmem:[%s166 + $0x3c] sm:$0xf]
      %v191 = vld [vmem:[%s166 + $0x40] sm:$0xf]
      %v192 = vld [vmem:[%s166 + $0x44] sm:$0xf]
      %v193 = vld [vmem:[%s166 + $0x48] sm:$0xf]
      %v194 = vld [vmem:[%s166 + $0x4c] sm:$0xf]
      %v195 = vld [vmem:[%s166 + $0x50] sm:$0xf]
      %v196 = vld [vmem:[%s166 + $0x54] sm:$0xf]
      %v197 = vld [vmem:[%s166 + $0x58] sm:$0xf]
      %v198 = vld [vmem:[%s166 + $0x5c] sm:$0xf]
      %v199 = vld [vmem:[%s166 + $0x60] sm:$0xf]
      %v200 = vld [vmem:[%s166 + $0x64] sm:$0xf]
      %v201 = vld [vmem:[%s166 + $0x68] sm:$0xf]
      %v202 = vld [vmem:[%s166 + $0x6c] sm:$0xf]
      %v203 = vld [vmem:[%s166 + $0x70] sm:$0xf]
      %v204 = vld [vmem:[%s166 + $0x74] sm:$0xf]
      %v205 = vld [vmem:[%s166 + $0x78] sm:$0xf]
      %v206 = vld [vmem:[%s166 + $0x7c] sm:$0xf]
      %v207 = vld [vmem:[%s166 + $0x80] sm:$0xf]
      %v208 = vld [vmem:[%s166 + $0x84] sm:$0xf]
      %v209 = vld [vmem:[%s166 + $0x88] sm:$0xf]
      %v210 = vld [vmem:[%s166 + $0x8c] sm:$0xf]
      %v211 = vld [vmem:[%s166 + $0x90] sm:$0xf]
      %v212 = vld [vmem:[%s166 + $0x94] sm:$0xf]
      %v213 = vld [vmem:[%s166 + $0x98] sm:$0xf]
      %v214 = vld [vmem:[%s166 + $0x9c] sm:$0xf]
      %v215 = vld [vmem:[%s166 + $0xa0] sm:$0xf]
      %v216 = vld [vmem:[%s166 + $0xa4] sm:$0xf]
      %v217 = vld [vmem:[%s166 + $0xa8] sm:$0xf]
      %v218 = vld [vmem:[%s166 + $0xac] sm:$0xf]
      %v219 = vld [vmem:[%s166 + $0xb0] sm:$0xf]
      %v220 = vld [vmem:[%s166 + $0xb4] sm:$0xf]
      %v221 = vld [vmem:[%s166 + $0xb8] sm:$0xf]
      %v222 = vld [vmem:[%s166 + $0xbc] sm:$0xf]
      %v223 = vld [vmem:[%s166 + $0xc0] sm:$0xf]
      %v224 = vld [vmem:[%s166 + $0xc4] sm:$0xf]
      %v225 = vld [vmem:[%s166 + $0xc8] sm:$0xf]
      %v226 = vld [vmem:[%s166 + $0xcc] sm:$0xf]
      %v227 = vld [vmem:[%s166 + $0xd0] sm:$0xf]
      %v228 = vld [vmem:[%s166 + $0xd4] sm:$0xf]
      %v229 = vld [vmem:[%s166 + $0xd8] sm:$0xf]
      %v230 = vld [vmem:[%s166 + $0xdc] sm:$0xf]
      %v231 = vld [vmem:[%s166 + $0xe0] sm:$0xf]
      %v232 = vld [vmem:[%s166 + $0xe4] sm:$0xf]
      %v233 = vld [vmem:[%s166 + $0xe8] sm:$0xf]
      %v234 = vld [vmem:[%s166 + $0xec] sm:$0xf]
      %v235 = vld [vmem:[%s166 + $0xf0] sm:$0xf]
      %v236 = vld [vmem:[%s166 + $0xf4] sm:$0xf]
      %v237 = vld [vmem:[%s166 + $0xf8] sm:$0xf]
      %v238 = vld [vmem:[%s166 + $0xfc] sm:$0xf]
      %v239 = vld [vmem:[%s1] sm:$0xf]
      %v240 = vld [vmem:[%s1 + $0x4] sm:$0xf]
      %v241 = vld [vmem:[%s1 + $0x8] sm:$0xf]
      %v242 = vld [vmem:[%s1 + $0xc] sm:$0x3]
      %v243 = vld [vmem:[%s2] sm:$0x1]
      %v245 = vlaneseq
      %v246 = vshrl.u32 %v245, 7
      %v247 = vsub.s32 0, %v246
      %v248 = vrot.slane %v243, %v247
      %v314 = vunpack.c.l.b16 %v175
      %v315 = vunpack.c.l.b16 %v176
      %v316 = vunpack.c.l.b16 %v177
      %v317 = vunpack.c.l.b16 %v178
      %v318 = vunpack.c.l.b16 %v179
      %v319 = vunpack.c.l.b16 %v180
      %v320 = vunpack.c.l.b16 %v181
      %v321 = vunpack.c.l.b16 %v182
      %v322 = vunpack.c.l.b16 %v183
      %v323 = vunpack.c.l.b16 %v184
      %v324 = vunpack.c.l.b16 %v185
      %v325 = vunpack.c.l.b16 %v186
      %v326 = vunpack.c.l.b16 %v187
      %v327 = vunpack.c.l.b16 %v188
      %v328 = vunpack.c.l.b16 %v189
      %v329 = vunpack.c.l.b16 %v190
      %v330 = vunpack.c.l.b16 %v191
      %v331 = vunpack.c.l.b16 %v192
      %v332 = vunpack.c.l.b16 %v193
      %v333 = vunpack.c.l.b16 %v194
      %v334 = vunpack.c.l.b16 %v195
      %v335 = vunpack.c.l.b16 %v196
      %v336 = vunpack.c.l.b16 %v197
      %v337 = vunpack.c.l.b16 %v198
      %v338 = vunpack.c.l.b16 %v199
      %v339 = vunpack.c.l.b16 %v200
      %v340 = vunpack.c.l.b16 %v201
      %v341 = vunpack.c.l.b16 %v202
      %v342 = vunpack.c.l.b16 %v203
      %v343 = vunpack.c.l.b16 %v204
      %v344 = vunpack.c.l.b16 %v205
      %v345 = vunpack.c.l.b16 %v206
      %v346 = vunpack.c.l.b16 %v207
      %v347 = vunpack.c.l.b16 %v208
      %v348 = vunpack.c.l.b16 %v209
      %v349 = vunpack.c.l.b16 %v210
      %v350 = vunpack.c.l.b16 %v211
      %v351 = vunpack.c.l.b16 %v212
      %v352 = vunpack.c.l.b16 %v213
      %v353 = vunpack.c.l.b16 %v214
      %v354 = vunpack.c.l.b16 %v215
      %v355 = vunpack.c.l.b16 %v216
      %v356 = vunpack.c.l.b16 %v217
      %v357 = vunpack.c.l.b16 %v218
      %v358 = vunpack.c.l.b16 %v219
      %v359 = vunpack.c.l.b16 %v220
      %v360 = vunpack.c.l.b16 %v221
      %v361 = vunpack.c.l.b16 %v222
      %v362 = vunpack.c.l.b16 %v223
      %v363 = vunpack.c.l.b16 %v224
      %v364 = vunpack.c.l.b16 %v225
      %v365 = vunpack.c.l.b16 %v226
      %v366 = vunpack.c.l.b16 %v227
      %v367 = vunpack.c.l.b16 %v228
      %v368 = vunpack.c.l.b16 %v229
      %v369 = vunpack.c.l.b16 %v230
      %v370 = vunpack.c.l.b16 %v231
      %v371 = vunpack.c.l.b16 %v232
      %v372 = vunpack.c.l.b16 %v233
      %v373 = vunpack.c.l.b16 %v234
      %v374 = vunpack.c.l.b16 %v235
      %v375 = vunpack.c.l.b16 %v236
      %v376 = vunpack.c.l.b16 %v237
      %v377 = vunpack.c.l.b16 %v238
      %v378 = vpack.c.b16 %v315, %v314
      %v379 = vpack.c.b16 %v317, %v316
      %v380 = vpack.c.b16 %v319, %v318
      %v381 = vpack.c.b16 %v321, %v320
      %v382 = vpack.c.b16 %v323, %v322
      %v383 = vpack.c.b16 %v325, %v324
      %v384 = vpack.c.b16 %v327, %v326
      %v385 = vpack.c.b16 %v329, %v328
      %v386 = vpack.c.b16 %v331, %v330
      %v387 = vpack.c.b16 %v333, %v332
      %v388 = vpack.c.b16 %v335, %v334
      %v389 = vpack.c.b16 %v337, %v336
      %v390 = vpack.c.b16 %v339, %v338
      %v391 = vpack.c.b16 %v341, %v340
      %v392 = vpack.c.b16 %v343, %v342
      %v393 = vpack.c.b16 %v345, %v344
      %v394 = vpack.c.b16 %v347, %v346
      %v395 = vpack.c.b16 %v349, %v348
      %v396 = vpack.c.b16 %v351, %v350
      %v397 = vpack.c.b16 %v353, %v352
      %v398 = vpack.c.b16 %v355, %v354
      %v399 = vpack.c.b16 %v357, %v356
      %v400 = vpack.c.b16 %v359, %v358
      %v401 = vpack.c.b16 %v361, %v360
      %v402 = vpack.c.b16 %v363, %v362
      %v403 = vpack.c.b16 %v365, %v364
      %v404 = vpack.c.b16 %v367, %v366
      %v405 = vpack.c.b16 %v369, %v368
      %v406 = vpack.c.b16 %v371, %v370
      %v407 = vpack.c.b16 %v373, %v372
      %v408 = vpack.c.b16 %v375, %v374
      %v409 = vpack.c.b16 %v377, %v376
      %v414 = vunpack.c.l.b16 %v239
      %v415 = vunpack.c.l.b16 %v240
      %v416 = vunpack.c.l.b16 %v241
      %v417 = vunpack.c.l.b16 %v242
      %v418 = vpack.c.b16 %v415, %v414
      %v419 = vpack.c.b16 %v417, %v416
      %vm421 = vcmask 220160
      %v423 = vsel %vm421, %v378, 0
      %v426 = vsel %vm421, %v379, 0
      %v429 = vsel %vm421, %v380, 0
      %v432 = vsel %vm421, %v381, 0
      %v435 = vsel %vm421, %v382, 0
      %v438 = vsel %vm421, %v383, 0
      %v441 = vsel %vm421, %v384, 0
      %v444 = vsel %vm421, %v385, 0
      %v447 = vsel %vm421, %v386, 0
      %v450 = vsel %vm421, %v387, 0
      %v453 = vsel %vm421, %v388, 0
      %v456 = vsel %vm421, %v389, 0
      %v459 = vsel %vm421, %v390, 0
      %v462 = vsel %vm421, %v391, 0
      %v465 = vsel %vm421, %v392, 0
      %v468 = vsel %vm421, %v393, 0
      %v471 = vsel %vm421, %v394, 0
      %v474 = vsel %vm421, %v395, 0
      %v477 = vsel %vm421, %v396, 0
      %v480 = vsel %vm421, %v397, 0
      %v483 = vsel %vm421, %v398, 0
      %v486 = vsel %vm421, %v399, 0
      %v489 = vsel %vm421, %v400, 0
      %v492 = vsel %vm421, %v401, 0
      %v495 = vsel %vm421, %v402, 0
      %v498 = vsel %vm421, %v403, 0
      %v501 = vsel %vm421, %v404, 0
      %v504 = vsel %vm421, %v405, 0
      %v507 = vsel %vm421, %v406, 0
      %v510 = vsel %vm421, %v407, 0
      %v513 = vsel %vm421, %v408, 0
      %v516 = vsel %vm421, %v409, 0
      %vm518 = vcmask 1044480
      %vm519 = vcmask 1045504
      %v520 = vsel %vm518, 4294967295, 65535
      %v521 = vsel %vm519, %v520, 0
      %v523 = vand.u32 %v419, %v521
      %525 = vmatprep.subr.bf16.mxu0 0
      %526 = vmatpush1.bf16.msra.mxu0 %v418
      %527 = vmatprep.subr.bf16.mxu0 0
      %528 = vmatpush1.bf16.msra.mxu0 %v523
      %529 = vmatprep.subr.bf16.mxu0 0
      %530 = vmatpush1.bf16.msra.mxu0 0
      %531 = vmatprep.subr.bf16.mxu0 0
      %532 = vmatpush1.bf16.msra.mxu0 0
      %533 = vmatprep.subr.bf16.mxu0 0
      %534 = vmatpush1.bf16.msra.mxu0 0
      %535 = vmatprep.subr.bf16.mxu0 0
      %536 = vmatpush1.bf16.msra.mxu0 0
      %537 = vmatprep.subr.bf16.mxu0 0
      %538 = vmatpush1.bf16.msra.mxu0 0
      %539 = vmatprep.subr.bf16.mxu0 0
      %540 = vmatpush1.bf16.msra.mxu0 0
      %541 = vmatprep.subr.bf16.mxu0 0
      %542 = vmatpush1.bf16.msra.mxu0 0
      %543 = vmatprep.subr.bf16.mxu0 0
      %544 = vmatpush1.bf16.msra.mxu0 0
      %545 = vmatprep.subr.bf16.mxu0 0
      %546 = vmatpush1.bf16.msra.mxu0 0
      %547 = vmatprep.subr.bf16.mxu0 0
      %548 = vmatpush1.bf16.msra.mxu0 0
      %549 = vmatprep.subr.bf16.mxu0 0
      %550 = vmatpush1.bf16.msra.mxu0 0
      %551 = vmatprep.subr.bf16.mxu0 0
      %552 = vmatpush1.bf16.msra.mxu0 0
      %553 = vmatprep.subr.bf16.mxu0 0
      %554 = vmatpush1.bf16.msra.mxu0 0
      %555 = vmatprep.subr.bf16.mxu0 0
      %556 = vmatpush1.bf16.msra.mxu0 0
      %557 = vmatprep.mubr.bf16.mxu0 0
      %558 = vmatmul.mubr.bf16.gmra.mrb[0].mxu0 %v423
      %v559 = vpop.f32.mrb[0].mxu0
      %v560 = vadd.f32 %v248, %v559
      %v561 = vpop.f32.mrb[0].mxu0
      %v562 = vpop.f32.mrb[0].mxu0
      %v563 = vadd.f32 %v248, %v562
      %v564 = vpop.f32.mrb[0].mxu0
      %565 = vmatprep.mubr.bf16.mxu0 0
      %566 = vmatmul.mubr.bf16.gmra.mrb[0].mxu0 %v426
      %v567 = vpop.f32.mrb[0].mxu0
      %v568 = vadd.f32 %v248, %v567
      %v569 = vpop.f32.mrb[0].mxu0
      %v570 = vpop.f32.mrb[0].mxu0
      %v571 = vadd.f32 %v248, %v570
      %v572 = vpop.f32.mrb[0].mxu0
      %573 = vmatprep.mubr.bf16.mxu0 0
      %574 = vmatmul.mubr.bf16.gmra.mrb[0].mxu0 %v429
      %v575 = vpop.f32.mrb[0].mxu0
      %v576 = vadd.f32 %v248, %v575
      %v577 = vpop.f32.mrb[0].mxu0
      %v578 = vpop.f32.mrb[0].mxu0
      %v579 = vadd.f32 %v248, %v578
      %v580 = vpop.f32.mrb[0].mxu0
      %581 = vmatprep.mubr.bf16.mxu0 0
      %582 = vmatmul.mubr.bf16.gmra.mrb[0].mxu0 %v432
      %v583 = vpop.f32.mrb[0].mxu0
      %v584 = vadd.f32 %v248, %v583
      %v585 = vpop.f32.mrb[0].mxu0
      %v586 = vpop.f32.mrb[0].mxu0
      %v587 = vadd.f32 %v248, %v586
      %v588 = vpop.f32.mrb[0].mxu0
      %589 = vmatprep.mubr.bf16.mxu0 0
      %590 = vmatmul.mubr.bf16.gmra.mrb[0].mxu0 %v435
      %v591 = vpop.f32.mrb[0].mxu0
      %v592 = vadd.f32 %v248, %v591
      %v593 = vpop.f32.mrb[0].mxu0
      %v594 = vpop.f32.mrb[0].mxu0
      %v595 = vadd.f32 %v248, %v594
      %v596 = vpop.f32.mrb[0].mxu0
      %597 = vmatprep.mubr.bf16.mxu0 0
      %598 = vmatmul.mubr.bf16.gmra.mrb[0].mxu0 %v438
      %v599 = vpop.f32.mrb[0].mxu0
      %v600 = vadd.f32 %v248, %v599
      %v601 = vpop.f32.mrb[0].mxu0
      %v602 = vpop.f32.mrb[0].mxu0
      %v603 = vadd.f32 %v248, %v602
      %v604 = vpop.f32.mrb[0].mxu0
      %605 = vmatprep.mubr.bf16.mxu0 0
      %606 = vmatmul.mubr.bf16.gmra.mrb[0].mxu0 %v441
      %v607 = vpop.f32.mrb[0].mxu0
      %v608 = vadd.f32 %v248, %v607
      %v609 = vpop.f32.mrb[0].mxu0
      %v610 = vpop.f32.mrb[0].mxu0
      %v611 = vadd.f32 %v248, %v610
      %v612 = vpop.f32.mrb[0].mxu0
      %613 = vmatprep.mubr.bf16.mxu0 0
      %614 = vmatmul.mubr.bf16.gmra.mrb[0].mxu0 %v444
      %v615 = vpop.f32.mrb[0].mxu0
      %v616 = vadd.f32 %v248, %v615
      %v617 = vpop.f32.mrb[0].mxu0
      %v618 = vpop.f32.mrb[0].mxu0
      %v619 = vadd.f32 %v248, %v618
      %v620 = vpop.f32.mrb[0].mxu0
      %621 = vmatprep.mubr.bf16.mxu0 0
      %622 = vmatmul.mubr.bf16.gmra.mrb[0].mxu0 %v447
      %v623 = vpop.f32.mrb[0].mxu0
      %v624 = vadd.f32 %v248, %v623
      %v625 = vpop.f32.mrb[0].mxu0
      %v626 = vpop.f32.mrb[0].mxu0
      %v627 = vadd.f32 %v248, %v626
      %v628 = vpop.f32.mrb[0].mxu0
      %629 = vmatprep.mubr.bf16.mxu0 0
      %630 = vmatmul.mubr.bf16.gmra.mrb[0].mxu0 %v450
      %v631 = vpop.f32.mrb[0].mxu0
      %v632 = vadd.f32 %v248, %v631
      %v633 = vpop.f32.mrb[0].mxu0
      %v634 = vpop.f32.mrb[0].mxu0
      %v635 = vadd.f32 %v248, %v634
      %v636 = vpop.f32.mrb[0].mxu0
      %637 = vmatprep.mubr.bf16.mxu0 0
      %638 = vmatmul.mubr.bf16.gmra.mrb[0].mxu0 %v453
      %v639 = vpop.f32.mrb[0].mxu0
      %v640 = vadd.f32 %v248, %v639
      %v641 = vpop.f32.mrb[0].mxu0
      %v642 = vpop.f32.mrb[0].mxu0
      %v643 = vadd.f32 %v248, %v642
      %v644 = vpop.f32.mrb[0].mxu0
      %645 = vmatprep.mubr.bf16.mxu0 0
      %646 = vmatmul.mubr.bf16.gmra.mrb[0].mxu0 %v456
      %v647 = vpop.f32.mrb[0].mxu0
      %v648 = vadd.f32 %v248, %v647
      %v649 = vpop.f32.mrb[0].mxu0
      %v650 = vpop.f32.mrb[0].mxu0
      %v651 = vadd.f32 %v248, %v650
      %v652 = vpop.f32.mrb[0].mxu0
      %653 = vmatprep.mubr.bf16.mxu0 0
      %654 = vmatmul.mubr.bf16.gmra.mrb[0].mxu0 %v459
      %v655 = vpop.f32.mrb[0].mxu0
      %v656 = vadd.f32 %v248, %v655
      %v657 = vpop.f32.mrb[0].mxu0
      %v658 = vpop.f32.mrb[0].mxu0
      %v659 = vadd.f32 %v248, %v658
      %v660 = vpop.f32.mrb[0].mxu0
      %661 = vmatprep.mubr.bf16.mxu0 0
      %662 = vmatmul.mubr.bf16.gmra.mrb[0].mxu0 %v462
      %v663 = vpop.f32.mrb[0].mxu0
      %v664 = vadd.f32 %v248, %v663
      %v665 = vpop.f32.mrb[0].mxu0
      %v666 = vpop.f32.mrb[0].mxu0
      %v667 = vadd.f32 %v248, %v666
      %v668 = vpop.f32.mrb[0].mxu0
      %669 = vmatprep.mubr.bf16.mxu0 0
      %670 = vmatmul.mubr.bf16.gmra.mrb[0].mxu0 %v465
      %v671 = vpop.f32.mrb[0].mxu0
      %v672 = vadd.f32 %v248, %v671
      %v673 = vpop.f32.mrb[0].mxu0
      %v674 = vpop.f32.mrb[0].mxu0
      %v675 = vadd.f32 %v248, %v674
      %v676 = vpop.f32.mrb[0].mxu0
      %677 = vmatprep.mubr.bf16.mxu0 0
      %678 = vmatmul.mubr.bf16.gmra.mrb[0].mxu0 %v468
      %v679 = vpop.f32.mrb[0].mxu0
      %v680 = vadd.f32 %v248, %v679
      %v681 = vpop.f32.mrb[0].mxu0
      %v682 = vpop.f32.mrb[0].mxu0
      %v683 = vadd.f32 %v248, %v682
      %v684 = vpop.f32.mrb[0].mxu0
      %685 = vmatprep.mubr.bf16.mxu0 0
      %686 = vmatmul.mubr.bf16.gmra.mrb[0].mxu0 %v471
      %v687 = vpop.f32.mrb[0].mxu0
      %v688 = vadd.f32 %v248, %v687
      %v689 = vpop.f32.mrb[0].mxu0
      %v690 = vpop.f32.mrb[0].mxu0
      %v691 = vadd.f32 %v248, %v690
      %v692 = vpop.f32.mrb[0].mxu0
      %693 = vmatprep.mubr.bf16.mxu0 0
      %694 = vmatmul.mubr.bf16.gmra.mrb[0].mxu0 %v474
      %v695 = vpop.f32.mrb[0].mxu0
      %v696 = vadd.f32 %v248, %v695
      %v697 = vpop.f32.mrb[0].mxu0
      %v698 = vpop.f32.mrb[0].mxu0
      %v699 = vadd.f32 %v248, %v698
      %v700 = vpop.f32.mrb[0].mxu0
      %701 = vmatprep.mubr.bf16.mxu0 0
      %702 = vmatmul.mubr.bf16.gmra.mrb[0].mxu0 %v477
      %v703 = vpop.f32.mrb[0].mxu0
      %v704 = vadd.f32 %v248, %v703
      %v705 = vpop.f32.mrb[0].mxu0
      %v706 = vpop.f32.mrb[0].mxu0
      %v707 = vadd.f32 %v248, %v706
      %v708 = vpop.f32.mrb[0].mxu0
      %709 = vmatprep.mubr.bf16.mxu0 0
      %710 = vmatmul.mubr.bf16.gmra.mrb[0].mxu0 %v480
      %v711 = vpop.f32.mrb[0].mxu0
      %v712 = vadd.f32 %v248, %v711
      %v713 = vpop.f32.mrb[0].mxu0
      %v714 = vpop.f32.mrb[0].mxu0
      %v715 = vadd.f32 %v248, %v714
      %v716 = vpop.f32.mrb[0].mxu0
      %717 = vmatprep.mubr.bf16.mxu0 0
      %718 = vmatmul.mubr.bf16.gmra.mrb[0].mxu0 %v483
      %v719 = vpop.f32.mrb[0].mxu0
      %v720 = vadd.f32 %v248, %v719
      %v721 = vpop.f32.mrb[0].mxu0
      %v722 = vpop.f32.mrb[0].mxu0
      %v723 = vadd.f32 %v248, %v722
      %v724 = vpop.f32.mrb[0].mxu0
      %725 = vmatprep.mubr.bf16.mxu0 0
      %726 = vmatmul.mubr.bf16.gmra.mrb[0].mxu0 %v486
      %v727 = vpop.f32.mrb[0].mxu0
      %v728 = vadd.f32 %v248, %v727
      %v729 = vpop.f32.mrb[0].mxu0
      %v730 = vpop.f32.mrb[0].mxu0
      %v731 = vadd.f32 %v248, %v730
      %v732 = vpop.f32.mrb[0].mxu0
      %733 = vmatprep.mubr.bf16.mxu0 0
      %734 = vmatmul.mubr.bf16.gmra.mrb[0].mxu0 %v489
      %v735 = vpop.f32.mrb[0].mxu0
      %v736 = vadd.f32 %v248, %v735
      %v737 = vpop.f32.mrb[0].mxu0
      %v738 = vpop.f32.mrb[0].mxu0
      %v739 = vadd.f32 %v248, %v738
      %v740 = vpop.f32.mrb[0].mxu0
      %741 = vmatprep.mubr.bf16.mxu0 0
      %742 = vmatmul.mubr.bf16.gmra.mrb[0].mxu0 %v492
      %v743 = vpop.f32.mrb[0].mxu0
      %v744 = vadd.f32 %v248, %v743
      %v745 = vpop.f32.mrb[0].mxu0
      %v746 = vpop.f32.mrb[0].mxu0
      %v747 = vadd.f32 %v248, %v746
      %v748 = vpop.f32.mrb[0].mxu0
      %749 = vmatprep.mubr.bf16.mxu0 0
      %750 = vmatmul.mubr.bf16.gmra.mrb[0].mxu0 %v495
      %v751 = vpop.f32.mrb[0].mxu0
      %v752 = vadd.f32 %v248, %v751
      %v753 = vpop.f32.mrb[0].mxu0
      %v754 = vpop.f32.mrb[0].mxu0
      %v755 = vadd.f32 %v248, %v754
      %v756 = vpop.f32.mrb[0].mxu0
      %757 = vmatprep.mubr.bf16.mxu0 0
      %758 = vmatmul.mubr.bf16.gmra.mrb[0].mxu0 %v498
      %v759 = vpop.f32.mrb[0].mxu0
      %v760 = vadd.f32 %v248, %v759
      %v761 = vpop.f32.mrb[0].mxu0
      %v762 = vpop.f32.mrb[0].mxu0
      %v763 = vadd.f32 %v248, %v762
      %v764 = vpop.f32.mrb[0].mxu0
      %765 = vmatprep.mubr.bf16.mxu0 0
      %766 = vmatmul.mubr.bf16.gmra.mrb[0].mxu0 %v501
      %v767 = vpop.f32.mrb[0].mxu0
      %v768 = vadd.f32 %v248, %v767
      %v769 = vpop.f32.mrb[0].mxu0
      %v770 = vpop.f32.mrb[0].mxu0
      %v771 = vadd.f32 %v248, %v770
      %v772 = vpop.f32.mrb[0].mxu0
      %773 = vmatprep.mubr.bf16.mxu0 0
      %774 = vmatmul.mubr.bf16.gmra.mrb[0].mxu0 %v504
      %v775 = vpop.f32.mrb[0].mxu0
      %v776 = vadd.f32 %v248, %v775
      %v777 = vpop.f32.mrb[0].mxu0
      %v778 = vpop.f32.mrb[0].mxu0
      %v779 = vadd.f32 %v248, %v778
      %v780 = vpop.f32.mrb[0].mxu0
      %781 = vmatprep.mubr.bf16.mxu0 0
      %782 = vmatmul.mubr.bf16.gmra.mrb[0].mxu0 %v507
      %v783 = vpop.f32.mrb[0].mxu0
      %v784 = vadd.f32 %v248, %v783
      %v785 = vpop.f32.mrb[0].mxu0
      %v786 = vpop.f32.mrb[0].mxu0
      %v787 = vadd.f32 %v248, %v786
      %v788 = vpop.f32.mrb[0].mxu0
      %789 = vmatprep.mubr.bf16.mxu0 0
      %790 = vmatmul.mubr.bf16.gmra.mrb[0].mxu0 %v510
      %v791 = vpop.f32.mrb[0].mxu0
      %v792 = vadd.f32 %v248, %v791
      %v793 = vpop.f32.mrb[0].mxu0
      %v794 = vpop.f32.mrb[0].mxu0
      %v795 = vadd.f32 %v248, %v794
      %v796 = vpop.f32.mrb[0].mxu0
      %797 = vmatprep.mubr.bf16.mxu0 0
      %798 = vmatmul.mubr.bf16.gmra.mrb[0].mxu0 %v513
      %v799 = vpop.f32.mrb[0].mxu0
      %v800 = vadd.f32 %v248, %v799
      %v801 = vpop.f32.mrb[0].mxu0
      %v802 = vpop.f32.mrb[0].mxu0
      %v803 = vadd.f32 %v248, %v802
      %v804 = vpop.f32.mrb[0].mxu0
      %805 = vmatprep.mubr.bf16.mxu0 0
      %806 = vmatmul.mubr.bf16.gmra.mrb[0].mxu0 %v516
      %v807 = vpop.f32.mrb[0].mxu0
      %v808 = vadd.f32 %v248, %v807
      %v809 = vpop.f32.mrb[0].mxu0
      %v810 = vpop.f32.mrb[0].mxu0
      %v811 = vadd.f32 %v248, %v810
      %v812 = vpop.f32.mrb[0].mxu0
      %813 = vdwg.mxu0
      %v814 = vmax.f32 %v560, 0.0
      %v815 = vmax.f32 %v563, 0.0
      %v816 = vmax.f32 %v568, 0.0
      %v817 = vmax.f32 %v571, 0.0
      %v818 = vmax.f32 %v576, 0.0
      %v819 = vmax.f32 %v579, 0.0
      %v820 = vmax.f32 %v584, 0.0
      %v821 = vmax.f32 %v587, 0.0
      %v822 = vmax.f32 %v592, 0.0
      %v823 = vmax.f32 %v595, 0.0
      %v824 = vmax.f32 %v600, 0.0
      %v825 = vmax.f32 %v603, 0.0
      %v826 = vmax.f32 %v608, 0.0
      %v827 = vmax.f32 %v611, 0.0
      %v828 = vmax.f32 %v616, 0.0
      %v829 = vmax.f32 %v619, 0.0
      %v830 = vmax.f32 %v624, 0.0
      %v831 = vmax.f32 %v627, 0.0
      %v832 = vmax.f32 %v632, 0.0
      %v833 = vmax.f32 %v635, 0.0
      %v834 = vmax.f32 %v640, 0.0
      %v835 = vmax.f32 %v643, 0.0
      %v836 = vmax.f32 %v648, 0.0
      %v837 = vmax.f32 %v651, 0.0
      %v838 = vmax.f32 %v656, 0.0
      %v839 = vmax.f32 %v659, 0.0
      %v840 = vmax.f32 %v664, 0.0
      %v841 = vmax.f32 %v667, 0.0
      %v842 = vmax.f32 %v672, 0.0
      %v843 = vmax.f32 %v675, 0.0
      %v844 = vmax.f32 %v680, 0.0
      %v845 = vmax.f32 %v683, 0.0
      %v846 = vmax.f32 %v688, 0.0
      %v847 = vmax.f32 %v691, 0.0
      %v848 = vmax.f32 %v696, 0.0
      %v849 = vmax.f32 %v699, 0.0
      %v850 = vmax.f32 %v704, 0.0
      %v851 = vmax.f32 %v707, 0.0
      %v852 = vmax.f32 %v712, 0.0
      %v853 = vmax.f32 %v715, 0.0
      %v854 = vmax.f32 %v720, 0.0
      %v855 = vmax.f32 %v723, 0.0
      %v856 = vmax.f32 %v728, 0.0
      %v857 = vmax.f32 %v731, 0.0
      %v858 = vmax.f32 %v736, 0.0
      %v859 = vmax.f32 %v739, 0.0
      %v860 = vmax.f32 %v744, 0.0
      %v861 = vmax.f32 %v747, 0.0
      %v862 = vmax.f32 %v752, 0.0
      %v863 = vmax.f32 %v755, 0.0
      %v864 = vmax.f32 %v760, 0.0
      %v865 = vmax.f32 %v763, 0.0
      %v866 = vmax.f32 %v768, 0.0
      %v867 = vmax.f32 %v771, 0.0
      %v868 = vmax.f32 %v776, 0.0
      %v869 = vmax.f32 %v779, 0.0
      %v870 = vmax.f32 %v784, 0.0
      %v871 = vmax.f32 %v787, 0.0
      %v872 = vmax.f32 %v792, 0.0
      %v873 = vmax.f32 %v795, 0.0
      %v874 = vmax.f32 %v800, 0.0
      %v875 = vmax.f32 %v803, 0.0
      %v876 = vmax.f32 %v808, 0.0
      %v877 = vmax.f32 %v811, 0.0
      %vm878 = vcmask 64512
      %879 = vst.msk [vmem:[%s172] sm:$0xff] %vm878, %v814
      %880 = vst.msk [vmem:[%s172 + $0x8] sm:$0xff] %vm878, %v815
      %881 = vst.msk [vmem:[%s172 + $0x10] sm:$0xff] %vm878, %v816
      %882 = vst.msk [vmem:[%s172 + $0x18] sm:$0xff] %vm878, %v817
      %883 = vst.msk [vmem:[%s172 + $0x20] sm:$0xff] %vm878, %v818
      %884 = vst.msk [vmem:[%s172 + $0x28] sm:$0xff] %vm878, %v819
      %885 = vst.msk [vmem:[%s172 + $0x30] sm:$0xff] %vm878, %v820
      %886 = vst.msk [vmem:[%s172 + $0x38] sm:$0xff] %vm878, %v821
      %887 = vst.msk [vmem:[%s172 + $0x40] sm:$0xff] %vm878, %v822
      %888 = vst.msk [vmem:[%s172 + $0x48] sm:$0xff] %vm878, %v823
      %889 = vst.msk [vmem:[%s172 + $0x50] sm:$0xff] %vm878, %v824
      %890 = vst.msk [vmem:[%s172 + $0x58] sm:$0xff] %vm878, %v825
      %891 = vst.msk [vmem:[%s172 + $0x60] sm:$0xff] %vm878, %v826
      %892 = vst.msk [vmem:[%s172 + $0x68] sm:$0xff] %vm878, %v827
      %893 = vst.msk [vmem:[%s172 + $0x70] sm:$0xff] %vm878, %v828
      %894 = vst.msk [vmem:[%s172 + $0x78] sm:$0xff] %vm878, %v829
      %895 = vst.msk [vmem:[%s172 + $0x80] sm:$0xff] %vm878, %v830
      %896 = vst.msk [vmem:[%s172 + $0x88] sm:$0xff] %vm878, %v831
      %897 = vst.msk [vmem:[%s172 + $0x90] sm:$0xff] %vm878, %v832
      %898 = vst.msk [vmem:[%s172 + $0x98] sm:$0xff] %vm878, %v833
      %899 = vst.msk [vmem:[%s172 + $0xa0] sm:$0xff] %vm878, %v834
      %900 = vst.msk [vmem:[%s172 + $0xa8] sm:$0xff] %vm878, %v835
      %901 = vst.msk [vmem:[%s172 + $0xb0] sm:$0xff] %vm878, %v836
      %902 = vst.msk [vmem:[%s172 + $0xb8] sm:$0xff] %vm878, %v837
      %903 = vst.msk [vmem:[%s172 + $0xc0] sm:$0xff] %vm878, %v838
      %904 = vst.msk [vmem:[%s172 + $0xc8] sm:$0xff] %vm878, %v839
      %905 = vst.msk [vmem:[%s172 + $0xd0] sm:$0xff] %vm878, %v840
      %906 = vst.msk [vmem:[%s172 + $0xd8] sm:$0xff] %vm878, %v841
      %907 = vst.msk [vmem:[%s172 + $0xe0] sm:$0xff] %vm878, %v842
      %908 = vst.msk [vmem:[%s172 + $0xe8] sm:$0xff] %vm878, %v843
      %909 = vst.msk [vmem:[%s172 + $0xf0] sm:$0xff] %vm878, %v844
      %910 = vst.msk [vmem:[%s172 + $0xf8] sm:$0xff] %vm878, %v845
      %911 = vst.msk [vmem:[%s172 + $0x100] sm:$0xff] %vm878, %v846
      %912 = vst.msk [vmem:[%s172 + $0x108] sm:$0xff] %vm878, %v847
      %913 = vst.msk [vmem:[%s172 + $0x110] sm:$0xff] %vm878, %v848
      %914 = vst.msk [vmem:[%s172 + $0x118] sm:$0xff] %vm878, %v849
      %915 = vst.msk [vmem:[%s172 + $0x120] sm:$0xff] %vm878, %v850
      %916 = vst.msk [vmem:[%s172 + $0x128] sm:$0xff] %vm878, %v851
      %917 = vst.msk [vmem:[%s172 + $0x130] sm:$0xff] %vm878, %v852
      %918 = vst.msk [vmem:[%s172 + $0x138] sm:$0xff] %vm878, %v853
      %919 = vst.msk [vmem:[%s172 + $0x140] sm:$0xff] %vm878, %v854
      %920 = vst.msk [vmem:[%s172 + $0x148] sm:$0xff] %vm878, %v855
      %921 = vst.msk [vmem:[%s172 + $0x150] sm:$0xff] %vm878, %v856
      %922 = vst.msk [vmem:[%s172 + $0x158] sm:$0xff] %vm878, %v857
      %923 = vst.msk [vmem:[%s172 + $0x160] sm:$0xff] %vm878, %v858
      %924 = vst.msk [vmem:[%s172 + $0x168] sm:$0xff] %vm878, %v859
      %925 = vst.msk [vmem:[%s172 + $0x170] sm:$0xff] %vm878, %v860
      %926 = vst.msk [vmem:[%s172 + $0x178] sm:$0xff] %vm878, %v861
      %927 = vst.msk [vmem:[%s172 + $0x180] sm:$0xff] %vm878, %v862
      %928 = vst.msk [vmem:[%s172 + $0x188] sm:$0xff] %vm878, %v863
      %929 = vst.msk [vmem:[%s172 + $0x190] sm:$0xff] %vm878, %v864
      %930 = vst.msk [vmem:[%s172 + $0x198] sm:$0xff] %vm878, %v865
      %931 = vst.msk [vmem:[%s172 + $0x1a0] sm:$0xff] %vm878, %v866
      %932 = vst.msk [vmem:[%s172 + $0x1a8] sm:$0xff] %vm878, %v867
      %933 = vst.msk [vmem:[%s172 + $0x1b0] sm:$0xff] %vm878, %v868
      %934 = vst.msk [vmem:[%s172 + $0x1b8] sm:$0xff] %vm878, %v869
      %935 = vst.msk [vmem:[%s172 + $0x1c0] sm:$0xff] %vm878, %v870
      %936 = vst.msk [vmem:[%s172 + $0x1c8] sm:$0xff] %vm878, %v871
      %937 = vst.msk [vmem:[%s172 + $0x1d0] sm:$0xff] %vm878, %v872
      %938 = vst.msk [vmem:[%s172 + $0x1d8] sm:$0xff] %vm878, %v873
      %939 = vst.msk [vmem:[%s172 + $0x1e0] sm:$0xff] %vm878, %v874
      %940 = vst.msk [vmem:[%s172 + $0x1e8] sm:$0xff] %vm878, %v875
      %941 = vst.msk [vmem:[%s172 + $0x1f0] sm:$0xff] %vm878, %v876
      %942 = vst.msk [vmem:[%s172 + $0x1f8] sm:$0xff] %vm878, %v877
      %s943 = smul.u32 64, %s14
      %p944 = scmp.lt.s32.totalorder %s943, 511
      %s945 = scalar_select %p944, %s943, 511
      %s946 = smul.addr %s945, 8
      %s947 = scalar_lea.vmem %s3, %s946
      // Predicated region
      $region33: #{i3dd_forward.9} parent=31 // pred_check
        %p948 = pneg %p100
      $region34: #{i3dd_forward.9} parent=31 // pred_check_branch
        %950 = sbr.rel (%p948) target = $region36
      $region35: #{i3dd_forward.9} parent=31 // pred_region
        %s951 = smul.u32 64, %s14
      $region36: #{i3dd_forward.9} parent=31 // pred_fallthru
        _
    $region32: #{i3dd_forward.9} parent=5 // pred_fallthru
      _
    %p952 = scmp.le.s32.totalorder 2, %s9
    // Predicated region
    $region37: #{i3dd_forward.9} parent=5 // pred_check
      %p953 = pneg %p952
    $region38: #{i3dd_forward.9} parent=5 // pred_check_branch
      %955 = sbr.rel (%p953) target = $region40
    $region39: #{i3dd_forward.9} parent=5 // pred_region
      %s956 = ssub.s32 %s9, 2
      // Predicated region
      $region41: #{i3dd_forward.9} parent=39 // pred_check
        %p957 = pneg %p106
      $region42: #{i3dd_forward.9} parent=39 // pred_check_branch
        %959 = sbr.rel (%p957) target = $region44
      $region43: #{i3dd_forward.9} parent=39 // pred_region
        %s960 = smul.u32 64, %s15
        %p961 = scmp.lt.s32.totalorder %s960, 511
        %s962 = scalar_select %p961, %s960, 511
        %s963 = smul.addr %s962, 8
        %s964 = scalar_lea.vmem %s3, %s963
      $region44: #{i3dd_forward.9} parent=39 // pred_fallthru
        _
    $region40: #{i3dd_forward.9} parent=5 // pred_fallthru
      _
  $region6: #{i3dd_forward.9} parent=0 // loop_footer
    %s13 = sadd.s32 1, %s9
  $region7: #{i3dd_forward.9} parent=0 // loop_footer_branch
    %8 = sbr.rel target = $region3
  $region8: #{i3dd_forward.9} parent=0 // loop_exit
    _

// kernel: i3dd_forward.12
$region0: #{i3dd_forward.12}
  #allocation0 [shape = 'u32[]', space=smem, size = 0x4, offset = 0x4, fixed_abs, tag = 'smem constant byte address 0x4 - core index']
  #allocation1 [shape = 'u32[144,128]{1,0:T(1,128)}', space=vmem, size = 0x12000, scoped, tag = 'internal scratch']
  %s0 = inlined_call_operand.vmem [shape: f32[2,8,2048], index: 0, kind: input, shape index: {}]
  %s1 = inlined_call_operand.vmem [shape: f32[2,2048], index: 1, kind: output, shape index: {}]
  %s2 = sld [smem:[#allocation0]]
  $region60: #{i3dd_forward.12} parent=0
    _
  %s4 = ssub.s32 1, %s2
  %s5 = scalar_select 0, %s4, %s2
  $region1: #{i3dd_forward.12} parent=0
    #allocation2 [shape = 'u8[131072]{0}', space=vmem, size = 0x20000, scoped, tag = 'input window, operand 0']
    loop: start=0, step=1, limit=4
    $region2: #{i3dd_forward.12} parent=1 // loop_pre_header
      _
    $region3: #{i3dd_forward.12} parent=1 // loop_header
      %s7 = sphi 0, %s11
      %p8 = scmp.ge.s32.totalorder %s7, 4
      %s17 = sphi 0, %s19
      %s20 = sphi 0, %s17
      %s21 = sphi 0, %s20
      %s37 = sphi 0, %s21
      %s43 = sphi 0, %s45
      %s46 = sphi 0, %s43
      %s47 = sphi 0, %s46
      %s63 = sphi 0, %s47
    $region4: #{i3dd_forward.12} parent=1 // loop_header_branch
      %10 = sbr.rel (%p8) target = $region8
    $region5: #{i3dd_forward.12} parent=1 // loop_body
      %s12 = ssub.s32 %s7, 1
      %s13 = ssub.s32 %s7, 2
      %s14 = sadd.s32 %s7, 1
      %s15 = ssub.s32 %s7, %s14
      %p16 = scmp.eq.s32.totalorder %s15, 0
      %s18 = sadd.s32 %s17, 1
      %s19 = scalar_select %p16, %s17, %s18
      %p22 = pneg %p16
      %p23 = scmp.eq.s32.totalorder %s7, 1
      %p24 = por %p22, %p23
      %p25 = scmp.ne.s32.totalorder %s17, %s20
      %p26 = scmp.eq.s32.totalorder %s7, 0
      %p27 = por %p25, %p26
      %p28 = scmp.ne.s32.totalorder %s17, %s20
      %p29 = scmp.eq.s32.totalorder %s12, 1
      %p30 = por %p28, %p29
      %p31 = scmp.ne.s32.totalorder %s20, %s21
      %p32 = scmp.eq.s32.totalorder %s12, 0
      %p33 = por %p31, %p32
      %p34 = scmp.ne.s32.totalorder %s20, %s21
      %p35 = scmp.eq.s32.totalorder %s13, 1
      %p36 = por %p34, %p35
      %p38 = scmp.ne.s32.totalorder %s21, %s37
      %p39 = scmp.eq.s32.totalorder %s13, 0
      %p40 = por %p38, %p39
      %s41 = ssub.s32 %s7, %s14
      %p42 = scmp.eq.s32.totalorder %s41, 0
      %s44 = sadd.s32 %s43, 1
      %s45 = scalar_select %p42, %s43, %s44
      %p48 = pneg %p42
      %p49 = scmp.eq.s32.totalorder %s7, 1
      %p50 = por %p48, %p49
      %p51 = scmp.ne.s32.totalorder %s43, %s46
      %p52 = scmp.eq.s32.totalorder %s7, 0
      %p53 = por %p51, %p52
      %p54 = scmp.ne.s32.totalorder %s43, %s46
      %p55 = scmp.eq.s32.totalorder %s12, 1
      %p56 = por %p54, %p55
      %p57 = scmp.ne.s32.totalorder %s46, %s47
      %p58 = scmp.eq.s32.totalorder %s12, 0
      %p59 = por %p57, %p58
      %p60 = scmp.ne.s32.totalorder %s46, %s47
      %p61 = scmp.eq.s32.totalorder %s13, 1
      %p62 = por %p60, %p61
      %p64 = scmp.ne.s32.totalorder %s47, %s63
      %p65 = scmp.eq.s32.totalorder %s13, 0
      %p66 = por %p64, %p65
      %p67 = scmp.le.s32.totalorder 1, %s7
      %p68 = scmp.lt.s32.totalorder %s7, 3
      %p69 = pnand %p67, %p68
      %p70 = pneg %p69
      // Predicated region
      $region9: #{i3dd_forward.12} parent=5 // pred_check
        _
      $region10: #{i3dd_forward.12} parent=5 // pred_check_branch
        %72 = sbr.rel (%p69) target = $region12
      $region11: #{i3dd_forward.12} parent=5 // pred_region
        %s73 = ssub.s32 %s7, 1
      $region12: #{i3dd_forward.12} parent=5 // pred_fallthru
        _
      %p74 = scmp.lt.s32.totalorder %s7, 2
      // Predicated region
      $region13: #{i3dd_forward.12} parent=5 // pred_check
        %p75 = pneg %p74
      $region14: #{i3dd_forward.12} parent=5 // pred_check_branch
        %77 = sbr.rel (%p75) target = $region16
      $region15: #{i3dd_forward.12} parent=5 // pred_region
        // Predicated region
        $region17: #{i3dd_forward.12} parent=15 // pred_check
          %p78 = pneg %p27
        $region18: #{i3dd_forward.12} parent=15 // pred_check_branch
          %80 = sbr.rel (%p78) target = $region20
        $region19: #{i3dd_forward.12} parent=15 // pred_region
          %s81 = sand.u32 %s17, 1
          %s82 = sand.u32 %s17, 1
          %s83 = smul.addr %s82, 128
          %s84 = scalar_lea.vmem [#allocation2], %s83
          %s85 = smul.u32 8, %s7
          %s86 = smul.addr %s85, 8
          %s87 = scalar_lea.vmem %s0, %s86
          // Predicated region
          $region21: #{i3dd_forward.12} parent=19 // pred_check
            _
          $region22: #{i3dd_forward.12} parent=19 // pred_check_branch
            %89 = sbr.rel (0) target = $region24
          $region23: #{i3dd_forward.12} parent=19 // pred_region
            // Predicated region
            $region25: #{i3dd_forward.12} parent=23 // pred_check
              _
            $region26: #{i3dd_forward.12} parent=23 // pred_check_branch
              %91 = sbr.rel (0) target = $region28
            $region27: #{i3dd_forward.12} parent=23 // pred_region
              loop: start=0, step=1, limit=1
              $region29: #{i3dd_forward.12} parent=27 // loop_pre_header
                _
              $region30: #{i3dd_forward.12} parent=27 // loop_header
                %s93 = sphi 0, %s97
                %p94 = scmp.ge.s32.totalorder %s93, 1
                %s98 = sphi %s87, %s87
                %s99 = sphi %s84, %s84
              $region31: #{i3dd_forward.12} parent=27 // loop_header_branch
                %96 = sbr.rel (%p94) target = $region35
              $region32: #{i3dd_forward.12} parent=27 // loop_body
                %v100 = vld [vmem:[%s98] sm:$0xff]
                %101 = vst [vmem:[%s99] sm:$0xff] %v100
                %v102 = vld [vmem:[%s98 + $0x8] sm:$0xff]
                %103 = vst [vmem:[%s99 + $0x8] sm:$0xff] %v102
                %v104 = vld [vmem:[%s98 + $0x10] sm:$0xff]
                %105 = vst [vmem:[%s99 + $0x10] sm:$0xff] %v104
                %v106 = vld [vmem:[%s98 + $0x18] sm:$0xff]
                %107 = vst [vmem:[%s99 + $0x18] sm:$0xff] %v106
                %v108 = vld [vmem:[%s98 + $0x20] sm:$0xff]
                %109 = vst [vmem:[%s99 + $0x20] sm:$0xff] %v108
                %v110 = vld [vmem:[%s98 + $0x28] sm:$0xff]
                %111 = vst [vmem:[%s99 + $0x28] sm:$0xff] %v110
                %v112 = vld [vmem:[%s98 + $0x30] sm:$0xff]
                %113 = vst [vmem:[%s99 + $0x30] sm:$0xff] %v112
                %v114 = vld [vmem:[%s98 + $0x38] sm:$0xff]
                %115 = vst [vmem:[%s99 + $0x38] sm:$0xff] %v114
                %v116 = vld [vmem:[%s98 + $0x80] sm:$0xff]
                %117 = vst [vmem:[%s99 + $0x40] sm:$0xff] %v116
                %v118 = vld [vmem:[%s98 + $0x88] sm:$0xff]
                %119 = vst [vmem:[%s99 + $0x48] sm:$0xff] %v118
                %v120 = vld [vmem:[%s98 + $0x90] sm:$0xff]
                %121 = vst [vmem:[%s99 + $0x50] sm:$0xff] %v120
                %v122 = vld [vmem:[%s98 + $0x98] sm:$0xff]
                %123 = vst [vmem:[%s99 + $0x58] sm:$0xff] %v122
                %v124 = vld [vmem:[%s98 + $0xa0] sm:$0xff]
                %125 = vst [vmem:[%s99 + $0x60] sm:$0xff] %v124
                %v126 = vld [vmem:[%s98 + $0xa8] sm:$0xff]
                %127 = vst [vmem:[%s99 + $0x68] sm:$0xff] %v126
                %v128 = vld [vmem:[%s98 + $0xb0] sm:$0xff]
                %129 = vst [vmem:[%s99 + $0x70] sm:$0xff] %v128
                %v130 = vld [vmem:[%s98 + $0xb8] sm:$0xff]
                %131 = vst [vmem:[%s99 + $0x78] sm:$0xff] %v130
              $region33: #{i3dd_forward.12} parent=27 // loop_footer
                %s97 = sadd.s32 1, %s93
              $region34: #{i3dd_forward.12} parent=27 // loop_footer_branch
                %92 = sbr.rel target = $region30
              $region35: #{i3dd_forward.12} parent=27 // loop_exit
                _
            $region28: #{i3dd_forward.12} parent=23 // pred_fallthru
              _
            // Predicated region
            $region36: #{i3dd_forward.12} parent=23 // pred_check
              _
            $region37: #{i3dd_forward.12} parent=23 // pred_check_branch
              %133 = sbr.rel target = $region39
            $region38: #{i3dd_forward.12} parent=23 // pred_region
              _
            $region39: #{i3dd_forward.12} parent=23 // pred_fallthru
              _
          $region24: #{i3dd_forward.12} parent=19 // pred_fallthru
            _
          %134 = vnop
        $region20: #{i3dd_forward.12} parent=15 // pred_fallthru
          _
      $region16: #{i3dd_forward.12} parent=5 // pred_fallthru
        _
      %p135 = scmp.le.s32.totalorder 1, %s7
      %p136 = scmp.lt.s32.totalorder %s7, 3
      %p137 = pnand %p135, %p136
      %p138 = pneg %p137
      // Predicated region
      $region40: #{i3dd_forward.12} parent=5 // pred_check
        _
      $region41: #{i3dd_forward.12} parent=5 // pred_check_branch
        %140 = sbr.rel (%p137) target = $region43
      $region42: #{i3dd_forward.12} parent=5 // pred_region
        %s141 = ssub.s32 %s7, 1
        %s142 = sand.u32 %s20, 1
        %s143 = sand.u32 %s20, 1
        %s144 = smul.addr %s143, 128
        %s145 = scalar_lea.vmem [#allocation2], %s144
        // Predicated region
        $region44: #{i3dd_forward.12} parent=42 // pred_check
          %p146 = pneg %p33
        $region45: #{i3dd_forward.12} parent=42 // pred_check_branch
          %148 = sbr.rel (%p146) target = $region47
        $region46: #{i3dd_forward.12} parent=42 // pred_region
          _
        $region47: #{i3dd_forward.12} parent=42 // pred_fallthru
          _
        %s149 = sand.u32 %s20, 1
        %s150 = sand.u32 %s20, 1
        %s151 = smul.addr %s150, 128
        %s152 = scalar_lea.vmem [#allocation2], %s151
        %p153 = pneg %p33
        %p154 = pneg %p30
        %p155 = pneg %p59
        %p156 = pneg %p56
        %s157 = smul.u32 8, %s12
        %p158 = scmp.lt.s32.totalorder %s157, 15
        %s159 = scalar_select %p158, %s157, 15
        %s160 = smul.addr %s159, 2
        %s161 = scalar_lea.vmem %s1, %s160
        %s162 = smul.u32 8, %s12
        %s163 = smul.u32 8, %s12
        %p164 = scmp.lt.s32.totalorder %s163, 15
        %s165 = scalar_select %p164, %s163, 15
        %s166 = smul.addr %s165, 2
        %s167 = scalar_lea.vmem %s1, %s166
        %s168 = smul.u32 8, %s12
        %v169 = vld [vmem:[%s145] sm:$0xff]
        %v170 = vld [vmem:[%s145 + $0x8] sm:$0xff]
        %v171 = vld [vmem:[%s145 + $0x10] sm:$0xff]
        %v172 = vld [vmem:[%s145 + $0x18] sm:$0xff]
        %v173 = vld [vmem:[%s145 + $0x20] sm:$0xff]
        %v174 = vld [vmem:[%s145 + $0x28] sm:$0xff]
        %v175 = vld [vmem:[%s145 + $0x30] sm:$0xff]
        %v176 = vld [vmem:[%s145 + $0x38] sm:$0xff]
        %v177 = vld [vmem:[%s145 + $0x40] sm:$0xff]
        %v178 = vld [vmem:[%s145 + $0x48] sm:$0xff]
        %v179 = vld [vmem:[%s145 + $0x50] sm:$0xff]
        %v180 = vld [vmem:[%s145 + $0x58] sm:$0xff]
        %v181 = vld [vmem:[%s145 + $0x60] sm:$0xff]
        %v182 = vld [vmem:[%s145 + $0x68] sm:$0xff]
        %v183 = vld [vmem:[%s145 + $0x70] sm:$0xff]
        %v184 = vld [vmem:[%s145 + $0x78] sm:$0xff]
        %v185 = vrot.slane %v169, 4
        %v186 = vmax.f32 %v169, %v185
        %v187 = vrot.slane %v186, 2
        %v188 = vmax.f32 %v186, %v187
        %v189 = vrot.slane %v188, 1
        %v190 = vmax.f32 %v188, %v189
        %v191 = vrot.slane %v170, 4
        %v192 = vmax.f32 %v170, %v191
        %v193 = vrot.slane %v192, 2
        %v194 = vmax.f32 %v192, %v193
        %v195 = vrot.slane %v194, 1
        %v196 = vmax.f32 %v194, %v195
        %v197 = vrot.slane %v171, 4
        %v198 = vmax.f32 %v171, %v197
        %v199 = vrot.slane %v198, 2
        %v200 = vmax.f32 %v198, %v199
        %v201 = vrot.slane %v200, 1
        %v202 = vmax.f32 %v200, %v201
        %v203 = vrot.slane %v172, 4
        %v204 = vmax.f32 %v172, %v203
        %v205 = vrot.slane %v204, 2
        %v206 = vmax.f32 %v204, %v205
        %v207 = vrot.slane %v206, 1
        %v208 = vmax.f32 %v206, %v207
        %v209 = vrot.slane %v173, 4
        %v210 = vmax.f32 %v173, %v209
        %v211 = vrot.slane %v210, 2
        %v212 = vmax.f32 %v210, %v211
        %v213 = vrot.slane %v212, 1
        %v214 = vmax.f32 %v212, %v213
        %v215 = vrot.slane %v174, 4
        %v216 = vmax.f32 %v174, %v215
        %v217 = vrot.slane %v216, 2
        %v218 = vmax.f32 %v216, %v217
        %v219 = vrot.slane %v218, 1
        %v220 = vmax.f32 %v218, %v219
        %v221 = vrot.slane %v175, 4
        %v222 = vmax.f32 %v175, %v221
        %v223 = vrot.slane %v222, 2
        %v224 = vmax.f32 %v222, %v223
        %v225 = vrot.slane %v224, 1
        %v226 = vmax.f32 %v224, %v225
        %v227 = vrot.slane %v176, 4
        %v228 = vmax.f32 %v176, %v227
        %v229 = vrot.slane %v228, 2
        %v230 = vmax.f32 %v228, %v229
        %v231 = vrot.slane %v230, 1
        %v232 = vmax.f32 %v230, %v231
        %v233 = vrot.slane %v177, 4
        %v234 = vmax.f32 %v177, %v233
        %v235 = vrot.slane %v234, 2
        %v236 = vmax.f32 %v234, %v235
        %v237 = vrot.slane %v236, 1
        %v238 = vmax.f32 %v236, %v237
        %v239 = vrot.slane %v178, 4
        %v240 = vmax.f32 %v178, %v239
        %v241 = vrot.slane %v240, 2
        %v242 = vmax.f32 %v240, %v241
        %v243 = vrot.slane %v242, 1
        %v244 = vmax.f32 %v242, %v243
        %v245 = vrot.slane %v179, 4
        %v246 = vmax.f32 %v179, %v245
        %v247 = vrot.slane %v246, 2
        %v248 = vmax.f32 %v246, %v247
        %v249 = vrot.slane %v248, 1
        %v250 = vmax.f32 %v248, %v249
        %v251 = vrot.slane %v180, 4
        %v252 = vmax.f32 %v180, %v251
        %v253 = vrot.slane %v252, 2
        %v254 = vmax.f32 %v252, %v253
        %v255 = vrot.slane %v254, 1
        %v256 = vmax.f32 %v254, %v255
        %v257 = vrot.slane %v181, 4
        %v258 = vmax.f32 %v181, %v257
        %v259 = vrot.slane %v258, 2
        %v260 = vmax.f32 %v258, %v259
        %v261 = vrot.slane %v260, 1
        %v262 = vmax.f32 %v260, %v261
        %v263 = vrot.slane %v182, 4
        %v264 = vmax.f32 %v182, %v263
        %v265 = vrot.slane %v264, 2
        %v266 = vmax.f32 %v264, %v265
        %v267 = vrot.slane %v266, 1
        %v268 = vmax.f32 %v266, %v267
        %v269 = vrot.slane %v183, 4
        %v270 = vmax.f32 %v183, %v269
        %v271 = vrot.slane %v270, 2
        %v272 = vmax.f32 %v270, %v271
        %v273 = vrot.slane %v272, 1
        %v274 = vmax.f32 %v272, %v273
        %v275 = vrot.slane %v184, 4
        %v276 = vmax.f32 %v184, %v275
        %v277 = vrot.slane %v276, 2
        %v278 = vmax.f32 %v276, %v277
        %v279 = vrot.slane %v278, 1
        %v280 = vmax.f32 %v278, %v279
        %v297 = vcombine.low %v190, %v196
        %v298 = vcombine.low %v202, %v208
        %v300 = vunpack.c.l.s4 1983009808
        %v301 = vunpack.c.0.s8 %v300
        %v302 = vlaneseq
        %v303 = vshrl.u32 %v302, 7
        %v304 = vsub.s32 %v301, %v303
        %v305 = vrot.slane %v297, %v304
        %v307 = vunpack.c.l.s4 1983009808
        %v308 = vunpack.c.0.s8 %v307
        %v309 = vlaneseq
        %v310 = vshrl.u32 %v309, 7
        %v311 = vsub.s32 %v308, %v310
        %v312 = vrot.slane %v298, %v311
        %v313 = vcombine.low %v305, %v312
        %v314 = vcombine.low %v214, %v220
        %v315 = vcombine.low %v226, %v232
        %v317 = vunpack.c.l.s4 1983009808
        %v318 = vunpack.c.0.s8 %v317
        %v319 = vlaneseq
        %v320 = vshrl.u32 %v319, 7
        %v321 = vsub.s32 %v318, %v320
        %v322 = vrot.slane %v314, %v321
        %v324 = vunpack.c.l.s4 1983009808
        %v325 = vunpack.c.0.s8 %v324
        %v326 = vlaneseq
        %v327 = vshrl.u32 %v326, 7
        %v328 = vsub.s32 %v325, %v327
        %v329 = vrot.slane %v315, %v328
        %v330 = vcombine.low %v322, %v329
        %v331 = vcombine.low %v238, %v244
        %v332 = vcombine.low %v250, %v256
        %v334 = vunpack.c.l.s4 1983009808
        %v335 = vunpack.c.0.s8 %v334
        %v336 = vlaneseq
        %v337 = vshrl.u32 %v336, 7
        %v338 = vsub.s32 %v335, %v337
        %v339 = vrot.slane %v331, %v338
        %v341 = vunpack.c.l.s4 1983009808
        %v342 = vunpack.c.0.s8 %v341
        %v343 = vlaneseq
        %v344 = vshrl.u32 %v343, 7
        %v345 = vsub.s32 %v342, %v344
        %v346 = vrot.slane %v332, %v345
        %v347 = vcombine.low %v339, %v346
        %v348 = vcombine.low %v262, %v268
        %v349 = vcombine.low %v274, %v280
        %v351 = vunpack.c.l.s4 1983009808
        %v352 = vunpack.c.0.s8 %v351
        %v353 = vlaneseq
        %v354 = vshrl.u32 %v353, 7
        %v355 = vsub.s32 %v352, %v354
        %v356 = vrot.slane %v348, %v355
        %v358 = vunpack.c.l.s4 1983009808
        %v359 = vunpack.c.0.s8 %v358
        %v360 = vlaneseq
        %v361 = vshrl.u32 %v360, 7
        %v362 = vsub.s32 %v359, %v361
        %v363 = vrot.slane %v349, %v362
        %v364 = vcombine.low %v356, %v363
        %vm365 = vcmask 1044484
        %v366 = vsel %vm365, %v313, %v313
        %vm367 = vcmask 1046534
        %v368 = vsel %vm367, %v313, %v366
        %v369 = vrot.slane %v347, 7
        %vm370 = vcmask 1041409
        %v371 = vsel %vm370, %v369, %v368
        %vm372 = vcmask 1043459
        %v373 = vsel %vm372, %v369, %v371
        %vm374 = vcmask 1045509
        %v375 = vsel %vm374, %v369, %v373
        %vm376 = vcmask 1047559
        %v377 = vsel %vm376, %v369, %v375
        %v378 = vsel %vm365, %v330, %v330
        %v379 = vsel %vm367, %v330, %v378
        %v380 = vrot.slane %v364, 7
        %v381 = vsel %vm370, %v380, %v379
        %v382 = vsel %vm372, %v380, %v381
        %v383 = vsel %vm374, %v380, %v382
        %v384 = vsel %vm376, %v380, %v383
        %387 = vst [vmem:[%s167] sm:$0xff] %v377
        %388 = vst [vmem:[%s167 + $0x8] sm:$0xff] %v384
        %s389 = smul.u32 8, %s12
        %p390 = scmp.lt.s32.totalorder %s389, 15
        %s391 = scalar_select %p390, %s389, 15
        %s392 = smul.addr %s391, 2
        %s393 = scalar_lea.vmem %s1, %s392
        // Predicated region
        $region48: #{i3dd_forward.12} parent=42 // pred_check
          %p394 = pneg %p56
        $region49: #{i3dd_forward.12} parent=42 // pred_check_branch
          %396 = sbr.rel (%p394) target = $region51
        $region50: #{i3dd_forward.12} parent=42 // pred_region
          %s397 = smul.u32 8, %s12
        $region51: #{i3dd_forward.12} parent=42 // pred_fallthru
          _
      $region43: #{i3dd_forward.12} parent=5 // pred_fallthru
        _
      %p398 = scmp.le.s32.totalorder 2, %s7
      // Predicated region
      $region52: #{i3dd_forward.12} parent=5 // pred_check
        %p399 = pneg %p398
      $region53: #{i3dd_forward.12} parent=5 // pred_check_branch
        %401 = sbr.rel (%p399) target = $region55
      $region54: #{i3dd_forward.12} parent=5 // pred_region
        %s402 = ssub.s32 %s7, 2
        // Predicated region
        $region56: #{i3dd_forward.12} parent=54 // pred_check
          %p403 = pneg %p62
        $region57: #{i3dd_forward.12} parent=54 // pred_check_branch
          %405 = sbr.rel (%p403) target = $region59
        $region58: #{i3dd_forward.12} parent=54 // pred_region
          %s406 = smul.u32 8, %s13
          %p407 = scmp.lt.s32.totalorder %s406, 15
          %s408 = scalar_select %p407, %s406, 15
          %s409 = smul.addr %s408, 2
          %s410 = scalar_lea.vmem %s1, %s409
        $region59: #{i3dd_forward.12} parent=54 // pred_fallthru
          _
      $region55: #{i3dd_forward.12} parent=5 // pred_fallthru
        _
    $region6: #{i3dd_forward.12} parent=1 // loop_footer
      %s11 = sadd.s32 1, %s7
    $region7: #{i3dd_forward.12} parent=1 // loop_footer_branch
      %6 = sbr.rel target = $region3
    $region8: #{i3dd_forward.12} parent=1 // loop_exit
      _

// kernel: i3dd_forward.10
$region0: #{i3dd_forward.10}
  #allocation0 [shape = 'u32[]', space=smem, size = 0x4, offset = 0x4, fixed_abs, tag = 'smem constant byte address 0x4 - core index']
  #allocation1 [shape = 'u32[144,128]{1,0:T(1,128)}', space=vmem, size = 0x12000, scoped, tag = 'internal scratch']
  %s0 = inlined_call_operand.vmem [shape: bf16[512,216], index: 0, kind: input, shape index: {}]
  %s1 = inlined_call_operand.vmem [shape: bf16[216,16], index: 1, kind: input, shape index: {}]
  %s2 = inlined_call_operand.vmem [shape: f32[1,16], index: 2, kind: input, shape index: {}]
  %s3 = inlined_call_operand.vmem [shape: f32[512,16], index: 3, kind: output, shape index: {}]
  %s4 = sld [smem:[#allocation0]]
  $region45: #{i3dd_forward.10} parent=0
    _
  %s6 = ssub.s32 1, %s4
  %s7 = scalar_select 0, %s6, %s4
  loop: start=0, step=1, limit=4
  $region2: #{i3dd_forward.10} parent=0 // loop_pre_header
    _
  $region3: #{i3dd_forward.10} parent=0 // loop_header
    %s9 = sphi 0, %s13
    %p10 = scmp.ge.s32.totalorder %s9, 4
    %s19 = sphi 0, %s21
    %s22 = sphi 0, %s19
    %s23 = sphi 0, %s22
    %s39 = sphi 0, %s23
    %s43 = sphi 0, %s43
    %s45 = sphi 0, %s43
    %s46 = sphi 0, %s45
    %s60 = sphi 0, %s46
    %s64 = sphi 0, %s64
    %s66 = sphi 0, %s64
    %s67 = sphi 0, %s66
    %s81 = sphi 0, %s67
    %s87 = sphi 0, %s89
    %s90 = sphi 0, %s87
    %s91 = sphi 0, %s90
    %s107 = sphi 0, %s91
  $region4: #{i3dd_forward.10} parent=0 // loop_header_branch
    %12 = sbr.rel (%p10) target = $region8
  $region5: #{i3dd_forward.10} parent=0 // loop_body
    %s14 = ssub.s32 %s9, 1
    %s15 = ssub.s32 %s9, 2
    %s16 = sadd.s32 %s9, 1
    %s17 = ssub.s32 %s9, %s16
    %p18 = scmp.eq.s32.totalorder %s17, 0
    %s20 = sadd.s32 %s19, 1
    %s21 = scalar_select %p18, %s19, %s20
    %p24 = pneg %p18
    %p25 = scmp.eq.s32.totalorder %s9, 1
    %p26 = por %p24, %p25
    %p27 = scmp.ne.s32.totalorder %s19, %s22
    %p28 = scmp.eq.s32.totalorder %s9, 0
    %p29 = por %p27, %p28
    %p30 = scmp.ne.s32.totalorder %s19, %s22
    %p31 = scmp.eq.s32.totalorder %s14, 1
    %p32 = por %p30, %p31
    %p33 = scmp.ne.s32.totalorder %s22, %s23
    %p34 = scmp.eq.s32.totalorder %s14, 0
    %p35 = por %p33, %p34
    %p36 = scmp.ne.s32.totalorder %s22, %s23
    %p37 = scmp.eq.s32.totalorder %s15, 1
    %p38 = por %p36, %p37
    %p40 = scmp.ne.s32.totalorder %s23, %s39
    %p41 = scmp.eq.s32.totalorder %s15, 0
    %p42 = por %p40, %p41
    %s44 = sadd.s32 %s43, 1
    %p47 = scmp.eq.s32.totalorder %s9, 1
    %p48 = scmp.ne.s32.totalorder %s43, %s45
    %p49 = scmp.eq.s32.totalorder %s9, 0
    %p50 = por %p48, %p49
    %p51 = scmp.ne.s32.totalorder %s43, %s45
    %p52 = scmp.eq.s32.totalorder %s14, 1
    %p53 = por %p51, %p52
    %p54 = scmp.ne.s32.totalorder %s45, %s46
    %p55 = scmp.eq.s32.totalorder %s14, 0
    %p56 = por %p54, %p55
    %p57 = scmp.ne.s32.totalorder %s45, %s46
    %p58 = scmp.eq.s32.totalorder %s15, 1
    %p59 = por %p57, %p58
    %p61 = scmp.ne.s32.totalorder %s46, %s60
    %p62 = scmp.eq.s32.totalorder %s15, 0
    %p63 = por %p61, %p62
    %s65 = sadd.s32 %s64, 1
    %p68 = scmp.eq.s32.totalorder %s9, 1
    %p69 = scmp.ne.s32.totalorder %s64, %s66
    %p70 = scmp.eq.s32.totalorder %s9, 0
    %p71 = por %p69, %p70
    %p72 = scmp.ne.s32.totalorder %s64, %s66
    %p73 = scmp.eq.s32.totalorder %s14, 1
    %p74 = por %p72, %p73
    %p75 = scmp.ne.s32.totalorder %s66, %s67
    %p76 = scmp.eq.s32.totalorder %s14, 0
    %p77 = por %p75, %p76
    %p78 = scmp.ne.s32.totalorder %s66, %s67
    %p79 = scmp.eq.s32.totalorder %s15, 1
    %p80 = por %p78, %p79
    %p82 = scmp.ne.s32.totalorder %s67, %s81
    %p83 = scmp.eq.s32.totalorder %s15, 0
    %p84 = por %p82, %p83
    %s85 = ssub.s32 %s9, %s16
    %p86 = scmp.eq.s32.totalorder %s85, 0
    %s88 = sadd.s32 %s87, 1
    %s89 = scalar_select %p86, %s87, %s88
    %p92 = pneg %p86
    %p93 = scmp.eq.s32.totalorder %s9, 1
    %p94 = por %p92, %p93
    %p95 = scmp.ne.s32.totalorder %s87, %s90
    %p96 = scmp.eq.s32.totalorder %s9, 0
    %p97 = por %p95, %p96
    %p98 = scmp.ne.s32.totalorder %s87, %s90
    %p99 = scmp.eq.s32.totalorder %s14, 1
    %p100 = por %p98, %p99
    %p101 = scmp.ne.s32.totalorder %s90, %s91
    %p102 = scmp.eq.s32.totalorder %s14, 0
    %p103 = por %p101, %p102
    %p104 = scmp.ne.s32.totalorder %s90, %s91
    %p105 = scmp.eq.s32.totalorder %s15, 1
    %p106 = por %p104, %p105
    %p108 = scmp.ne.s32.totalorder %s91, %s107
    %p109 = scmp.eq.s32.totalorder %s15, 0
    %p110 = por %p108, %p109
    %p111 = scmp.le.s32.totalorder 1, %s9
    %p112 = scmp.lt.s32.totalorder %s9, 3
    %p113 = pnand %p111, %p112
    %p114 = pneg %p113
    // Predicated region
    $region9: #{i3dd_forward.10} parent=5 // pred_check
      _
    $region10: #{i3dd_forward.10} parent=5 // pred_check_branch
      %116 = sbr.rel (%p113) target = $region12
    $region11: #{i3dd_forward.10} parent=5 // pred_region
      %s117 = ssub.s32 %s9, 1
      // Predicated region
      $region13: #{i3dd_forward.10} parent=11 // pred_check
        %p118 = pneg %p56
      $region14: #{i3dd_forward.10} parent=11 // pred_check_branch
        %120 = sbr.rel (%p118) target = $region16
      $region15: #{i3dd_forward.10} parent=11 // pred_region
        _
      $region16: #{i3dd_forward.10} parent=11 // pred_fallthru
        _
      // Predicated region
      $region17: #{i3dd_forward.10} parent=11 // pred_check
        %p121 = pneg %p77
      $region18: #{i3dd_forward.10} parent=11 // pred_check_branch
        %123 = sbr.rel (%p121) target = $region20
      $region19: #{i3dd_forward.10} parent=11 // pred_region
        _
      $region20: #{i3dd_forward.10} parent=11 // pred_fallthru
        _
    $region12: #{i3dd_forward.10} parent=5 // pred_fallthru
      _
    %p124 = scmp.lt.s32.totalorder %s9, 2
    // Predicated region
    $region21: #{i3dd_forward.10} parent=5 // pred_check
      %p125 = pneg %p124
    $region22: #{i3dd_forward.10} parent=5 // pred_check_branch
      %127 = sbr.rel (%p125) target = $region24
    $region23: #{i3dd_forward.10} parent=5 // pred_region
      // Predicated region
      $region25: #{i3dd_forward.10} parent=23 // pred_check
        %p128 = pneg %p29
      $region26: #{i3dd_forward.10} parent=23 // pred_check_branch
        %130 = sbr.rel (%p128) target = $region28
      $region27: #{i3dd_forward.10} parent=23 // pred_region
        %s131 = smul.u32 32, %s9
        %p132 = scmp.lt.s32.totalorder %s131, 63
        %s133 = scalar_select %p132, %s131, 63
        %s134 = smul.addr %s133, 2
        %s135 = smul.addr %s134, 4
        %s136 = scalar_lea.vmem %s0, %s135
        %s137 = smul.u32 32, %s9
      $region28: #{i3dd_forward.10} parent=23 // pred_fallthru
        _
    $region24: #{i3dd_forward.10} parent=5 // pred_fallthru
      _
    %p138 = scmp.le.s32.totalorder 1, %s9
    %p139 = scmp.lt.s32.totalorder %s9, 3
    %p140 = pnand %p138, %p139
    %p141 = pneg %p140
    // Predicated region
    $region29: #{i3dd_forward.10} parent=5 // pred_check
      _
    $region30: #{i3dd_forward.10} parent=5 // pred_check_branch
      %143 = sbr.rel (%p140) target = $region32
    $region31: #{i3dd_forward.10} parent=5 // pred_region
      %s144 = ssub.s32 %s9, 1
      %s145 = smul.u32 32, %s14
      %p146 = scmp.lt.s32.totalorder %s145, 63
      %s147 = scalar_select %p146, %s145, 63
      %s148 = smul.addr %s147, 2
      %s149 = smul.addr %s148, 4
      %s150 = scalar_lea.vmem %s0, %s149
      %p151 = pneg %p35
      %p152 = pneg %p32
      %p153 = pneg %p56
      %p154 = pneg %p53
      %p155 = pneg %p77
      %p156 = pneg %p74
      %p157 = pneg %p103
      %p158 = pneg %p100
      %s159 = smul.u32 32, %s14
      %p160 = scmp.lt.s32.totalorder %s159, 63
      %s161 = scalar_select %p160, %s159, 63
      %s162 = smul.addr %s161, 8
      %s163 = scalar_lea.vmem %s3, %s162
      %s164 = smul.u32 32, %s14
      %p165 = scmp.lt.s32.totalorder %s164, 63
      %s166 = scalar_select %p165, %s164, 63
      %s167 = smul.addr %s166, 2
      %s168 = smul.addr %s167, 4
      %s169 = scalar_lea.vmem %s0, %s168
      %s170 = smul.u32 32, %s14
      %s171 = smul.u32 32, %s14
      %p172 = scmp.lt.s32.totalorder %s171, 63
      %s173 = scalar_select %p172, %s171, 63
      %s174 = smul.addr %s173, 8
      %s175 = scalar_lea.vmem %s3, %s174
      %s176 = smul.u32 32, %s14
      %v178 = vld [vmem:[%s169] sm:$0xff]
      %v179 = vld [vmem:[%s169 + $0x8] sm:$0xff]
      %v180 = vld [vmem:[%s169 + $0x10] sm:$0xff]
      %v181 = vld [vmem:[%s169 + $0x18] sm:$0xff]
      %v182 = vld [vmem:[%s169 + $0x20] sm:$0xff]
      %v183 = vld [vmem:[%s169 + $0x28] sm:$0xff]
      %v184 = vld [vmem:[%s169 + $0x30] sm:$0xff]
      %v185 = vld [vmem:[%s169 + $0x38] sm:$0xff]
      %v186 = vld [vmem:[%s169 + $0x40] sm:$0xff]
      %v187 = vld [vmem:[%s169 + $0x48] sm:$0xff]
      %v188 = vld [vmem:[%s169 + $0x50] sm:$0xff]
      %v189 = vld [vmem:[%s169 + $0x58] sm:$0xff]
      %v190 = vld [vmem:[%s169 + $0x60] sm:$0xff]
      %v191 = vld [vmem:[%s169 + $0x68] sm:$0xff]
      %v192 = vld [vmem:[%s169 + $0x70] sm:$0xff]
      %v193 = vld [vmem:[%s169 + $0x78] sm:$0xff]
      %v194 = vld [vmem:[%s169 + $0x80] sm:$0xff]
      %v195 = vld [vmem:[%s169 + $0x88] sm:$0xff]
      %v196 = vld [vmem:[%s169 + $0x90] sm:$0xff]
      %v197 = vld [vmem:[%s169 + $0x98] sm:$0xff]
      %v198 = vld [vmem:[%s169 + $0xa0] sm:$0xff]
      %v199 = vld [vmem:[%s169 + $0xa8] sm:$0xff]
      %v200 = vld [vmem:[%s169 + $0xb0] sm:$0xff]
      %v201 = vld [vmem:[%s169 + $0xb8] sm:$0xff]
      %v202 = vld [vmem:[%s169 + $0xc0] sm:$0xff]
      %v203 = vld [vmem:[%s169 + $0xc8] sm:$0xff]
      %v204 = vld [vmem:[%s169 + $0xd0] sm:$0xff]
      %v205 = vld [vmem:[%s169 + $0xd8] sm:$0xff]
      %v206 = vld [vmem:[%s169 + $0xe0] sm:$0xff]
      %v207 = vld [vmem:[%s169 + $0xe8] sm:$0xff]
      %v208 = vld [vmem:[%s169 + $0xf0] sm:$0xff]
      %v209 = vld [vmem:[%s169 + $0xf8] sm:$0xff]
      %v210 = vld [vmem:[%s1] sm:$0xf]
      %v211 = vld [vmem:[%s1 + $0x4] sm:$0xf]
      %v212 = vld [vmem:[%s1 + $0x8] sm:$0xf]
      %v213 = vld [vmem:[%s1 + $0xc] sm:$0xf]
      %v214 = vld [vmem:[%s1 + $0x10] sm:$0xf]
      %v215 = vld [vmem:[%s1 + $0x14] sm:$0xf]
      %v216 = vld [vmem:[%s1 + $0x18] sm:$0xf]
      %v217 = vld [vmem:[%s1 + $0x1c] sm:$0xf]
      %v218 = vld [vmem:[%s1 + $0x20] sm:$0xf]
      %v219 = vld [vmem:[%s1 + $0x24] sm:$0xf]
      %v220 = vld [vmem:[%s1 + $0x28] sm:$0xf]
      %v221 = vld [vmem:[%s1 + $0x2c] sm:$0xf]
      %v222 = vld [vmem:[%s1 + $0x30] sm:$0xf]
      %v223 = vld [vmem:[%s1 + $0x34] sm:$0xf]
      %v224 = vld [vmem:[%s1 + $0x38] sm:$0xf]
      %v225 = vld [vmem:[%s1 + $0x3c] sm:$0xf]
      %v226 = vld [vmem:[%s1 + $0x40] sm:$0xf]
      %v227 = vld [vmem:[%s1 + $0x44] sm:$0xf]
      %v228 = vld [vmem:[%s1 + $0x48] sm:$0xf]
      %v229 = vld [vmem:[%s1 + $0x4c] sm:$0xf]
      %v230 = vld [vmem:[%s1 + $0x50] sm:$0xf]
      %v231 = vld [vmem:[%s1 + $0x54] sm:$0xf]
      %v232 = vld [vmem:[%s1 + $0x58] sm:$0xf]
      %v233 = vld [vmem:[%s1 + $0x5c] sm:$0xf]
      %v234 = vld [vmem:[%s1 + $0x60] sm:$0xf]
      %v235 = vld [vmem:[%s1 + $0x64] sm:$0xf]
      %v236 = vld [vmem:[%s1 + $0x68] sm:$0xf]
      %v237 = vld [vmem:[%s2] sm:$0x1]
      %v239 = vlaneseq
      %v240 = vshrl.u32 %v239, 7
      %v241 = vsub.s32 0, %v240
      %v242 = vrot.slane %v237, %v241
      %v276 = vunpack.c.l.b16 %v178
      %v277 = vunpack.c.h.b16 %v178
      %v278 = vunpack.c.l.b16 %v179
      %v279 = vunpack.c.h.b16 %v179
      %v280 = vunpack.c.l.b16 %v180
      %v281 = vunpack.c.h.b16 %v180
      %v282 = vunpack.c.l.b16 %v181
      %v283 = vunpack.c.h.b16 %v181
      %v284 = vunpack.c.l.b16 %v182
      %v285 = vunpack.c.h.b16 %v182
      %v286 = vunpack.c.l.b16 %v183
      %v287 = vunpack.c.h.b16 %v183
      %v288 = vunpack.c.l.b16 %v184
      %v289 = vunpack.c.h.b16 %v184
      %v290 = vunpack.c.l.b16 %v185
      %v291 = vunpack.c.h.b16 %v185
      %v292 = vunpack.c.l.b16 %v186
      %v293 = vunpack.c.h.b16 %v186
      %v294 = vunpack.c.l.b16 %v187
      %v295 = vunpack.c.h.b16 %v187
      %v296 = vunpack.c.l.b16 %v188
      %v297 = vunpack.c.h.b16 %v188
      %v298 = vunpack.c.l.b16 %v189
      %v299 = vunpack.c.h.b16 %v189
      %v300 = vunpack.c.l.b16 %v190
      %v301 = vunpack.c.h.b16 %v190
      %v302 = vunpack.c.l.b16 %v191
      %v303 = vunpack.c.h.b16 %v191
      %v304 = vunpack.c.l.b16 %v192
      %v305 = vunpack.c.h.b16 %v192
      %v306 = vunpack.c.l.b16 %v193
      %v307 = vunpack.c.h.b16 %v193
      %v308 = vunpack.c.l.b16 %v194
      %v309 = vunpack.c.h.b16 %v194
      %v310 = vunpack.c.l.b16 %v195
      %v311 = vunpack.c.h.b16 %v195
      %v312 = vunpack.c.l.b16 %v196
      %v313 = vunpack.c.h.b16 %v196
      %v314 = vunpack.c.l.b16 %v197
      %v315 = vunpack.c.h.b16 %v197
      %v316 = vunpack.c.l.b16 %v198
      %v317 = vunpack.c.h.b16 %v198
      %v318 = vunpack.c.l.b16 %v199
      %v319 = vunpack.c.h.b16 %v199
      %v320 = vunpack.c.l.b16 %v200
      %v321 = vunpack.c.h.b16 %v200
      %v322 = vunpack.c.l.b16 %v201
      %v323 = vunpack.c.h.b16 %v201
      %v324 = vunpack.c.l.b16 %v202
      %v325 = vunpack.c.h.b16 %v202
      %v326 = vunpack.c.l.b16 %v203
      %v327 = vunpack.c.h.b16 %v203
      %v328 = vunpack.c.l.b16 %v204
      %v329 = vunpack.c.h.b16 %v204
      %v330 = vunpack.c.l.b16 %v205
      %v331 = vunpack.c.h.b16 %v205
      %v332 = vunpack.c.l.b16 %v206
      %v333 = vunpack.c.h.b16 %v206
      %v334 = vunpack.c.l.b16 %v207
      %v335 = vunpack.c.h.b16 %v207
      %v336 = vunpack.c.l.b16 %v208
      %v337 = vunpack.c.h.b16 %v208
      %v338 = vunpack.c.l.b16 %v209
      %v339 = vunpack.c.h.b16 %v209
      %v340 = vpack.c.b16 %v278, %v276
      %v341 = vpack.c.b16 %v279, %v277
      %v342 = vpack.c.b16 %v282, %v280
      %v343 = vpack.c.b16 %v283, %v281
      %v344 = vpack.c.b16 %v286, %v284
      %v345 = vpack.c.b16 %v287, %v285
      %v346 = vpack.c.b16 %v290, %v288
      %v347 = vpack.c.b16 %v291, %v289
      %v348 = vpack.c.b16 %v294, %v292
      %v349 = vpack.c.b16 %v295, %v293
      %v350 = vpack.c.b16 %v298, %v296
      %v351 = vpack.c.b16 %v299, %v297
      %v352 = vpack.c.b16 %v302, %v300
      %v353 = vpack.c.b16 %v303, %v301
      %v354 = vpack.c.b16 %v306, %v304
      %v355 = vpack.c.b16 %v307, %v305
      %v356 = vpack.c.b16 %v310, %v308
      %v357 = vpack.c.b16 %v311, %v309
      %v358 = vpack.c.b16 %v314, %v312
      %v359 = vpack.c.b16 %v315, %v313
      %v360 = vpack.c.b16 %v318, %v316
      %v361 = vpack.c.b16 %v319, %v317
      %v362 = vpack.c.b16 %v322, %v320
      %v363 = vpack.c.b16 %v323, %v321
      %v364 = vpack.c.b16 %v326, %v324
      %v365 = vpack.c.b16 %v327, %v325
      %v366 = vpack.c.b16 %v330, %v328
      %v367 = vpack.c.b16 %v331, %v329
      %v368 = vpack.c.b16 %v334, %v332
      %v369 = vpack.c.b16 %v335, %v333
      %v370 = vpack.c.b16 %v338, %v336
      %v371 = vpack.c.b16 %v339, %v337
      %v415 = vunpack.c.l.b16 %v210
      %v416 = vunpack.c.l.b16 %v211
      %v417 = vunpack.c.l.b16 %v212
      %v418 = vunpack.c.l.b16 %v213
      %v419 = vunpack.c.l.b16 %v214
      %v420 = vunpack.c.l.b16 %v215
      %v421 = vunpack.c.l.b16 %v216
      %v422 = vunpack.c.l.b16 %v217
      %v423 = vunpack.c.l.b16 %v218
      %v424 = vunpack.c.l.b16 %v219
      %v425 = vunpack.c.l.b16 %v220
      %v426 = vunpack.c.l.b16 %v221
      %v427 = vunpack.c.l.b16 %v222
      %v428 = vunpack.c.l.b16 %v223
      %v429 = vunpack.c.l.b16 %v224
      %v430 = vunpack.c.l.b16 %v225
      %v431 = vunpack.c.l.b16 %v226
      %v432 = vunpack.c.l.b16 %v227
      %v433 = vunpack.c.l.b16 %v228
      %v434 = vunpack.c.l.b16 %v229
      %v435 = vunpack.c.l.b16 %v230
      %v436 = vunpack.c.l.b16 %v231
      %v437 = vunpack.c.l.b16 %v232
      %v438 = vunpack.c.l.b16 %v233
      %v439 = vunpack.c.l.b16 %v234
      %v440 = vunpack.c.l.b16 %v235
      %v441 = vunpack.c.l.b16 %v236
      %v442 = vpack.c.b16 %v416, %v415
      %v443 = vpack.c.b16 %v418, %v417
      %v444 = vpack.c.b16 %v420, %v419
      %v445 = vpack.c.b16 %v422, %v421
      %v446 = vpack.c.b16 %v424, %v423
      %v447 = vpack.c.b16 %v426, %v425
      %v448 = vpack.c.b16 %v428, %v427
      %v449 = vpack.c.b16 %v430, %v429
      %v450 = vpack.c.b16 %v432, %v431
      %v451 = vpack.c.b16 %v434, %v433
      %v452 = vpack.c.b16 %v436, %v435
      %v453 = vpack.c.b16 %v438, %v437
      %v454 = vpack.c.b16 %v440, %v439
      %v455 = vpack.c.b16 %v441, %v441
      %vm469 = vcmask 719872
      %v471 = vsel %vm469, %v341, 0
      %v474 = vsel %vm469, %v343, 0
      %v477 = vsel %vm469, %v345, 0
      %v480 = vsel %vm469, %v347, 0
      %v483 = vsel %vm469, %v349, 0
      %v486 = vsel %vm469, %v351, 0
      %v489 = vsel %vm469, %v353, 0
      %v492 = vsel %vm469, %v355, 0
      %v495 = vsel %vm469, %v357, 0
      %v498 = vsel %vm469, %v359, 0
      %v501 = vsel %vm469, %v361, 0
      %v504 = vsel %vm469, %v363, 0
      %v507 = vsel %vm469, %v365, 0
      %v510 = vsel %vm469, %v367, 0
      %v513 = vsel %vm469, %v369, 0
      %v516 = vsel %vm469, %v371, 0
      %vm518 = vcmask 1043456
      %v520 = vsel %vm518, %v455, 0
      %522 = vmatprep.subr.bf16.mxu0 0
      %523 = vmatpush1.bf16.msra.mxu0 %v442
      %524 = vmatprep.subr.bf16.mxu0 0
      %525 = vmatpush1.bf16.msra.mxu0 %v443
      %526 = vmatprep.subr.bf16.mxu0 0
      %527 = vmatpush1.bf16.msra.mxu0 %v444
      %528 = vmatprep.subr.bf16.mxu0 0
      %529 = vmatpush1.bf16.msra.mxu0 %v445
      %530 = vmatprep.subr.bf16.mxu0 0
      %531 = vmatpush1.bf16.msra.mxu0 %v446
      %532 = vmatprep.subr.bf16.mxu0 0
      %533 = vmatpush1.bf16.msra.mxu0 %v447
      %534 = vmatprep.subr.bf16.mxu0 0
      %535 = vmatpush1.bf16.msra.mxu0 %v448
      %536 = vmatprep.subr.bf16.mxu0 0
      %537 = vmatpush1.bf16.msra.mxu0 %v449
      %538 = vmatprep.subr.bf16.mxu0 0
      %539 = vmatpush1.bf16.msra.mxu0 %v450
      %540 = vmatprep.subr.bf16.mxu0 0
      %541 = vmatpush1.bf16.msra.mxu0 %v451
      %542 = vmatprep.subr.bf16.mxu0 0
      %543 = vmatpush1.bf16.msra.mxu0 %v452
      %544 = vmatprep.subr.bf16.mxu0 0
      %545 = vmatpush1.bf16.msra.mxu0 %v453
      %546 = vmatprep.subr.bf16.mxu0 0
      %547 = vmatpush1.bf16.msra.mxu0 %v454
      %548 = vmatprep.subr.bf16.mxu0 0
      %549 = vmatpush1.bf16.msra.mxu0 %v520
      %550 = vmatprep.subr.bf16.mxu0 0
      %551 = vmatpush1.bf16.msra.mxu0 0
      %552 = vmatprep.subr.bf16.mxu0 0
      %553 = vmatpush1.bf16.msra.mxu0 0
      %554 = vmatprep.mubr.bf16.mxu0 %v471
      %555 = vmatmul.mubr.bf16.gmra.mrb[0].mxu0 %v340
      %v556 = vpop.f32.mrb[0].mxu0
      %v557 = vadd.f32 %v242, %v556
      %v558 = vpop.f32.mrb[0].mxu0
      %v559 = vpop.f32.mrb[0].mxu0
      %v560 = vadd.f32 %v242, %v559
      %v561 = vpop.f32.mrb[0].mxu0
      %562 = vmatprep.mubr.bf16.mxu0 %v474
      %563 = vmatmul.mubr.bf16.gmra.mrb[0].mxu0 %v342
      %v564 = vpop.f32.mrb[0].mxu0
      %v565 = vadd.f32 %v242, %v564
      %v566 = vpop.f32.mrb[0].mxu0
      %v567 = vpop.f32.mrb[0].mxu0
      %v568 = vadd.f32 %v242, %v567
      %v569 = vpop.f32.mrb[0].mxu0
      %570 = vmatprep.mubr.bf16.mxu0 %v477
      %571 = vmatmul.mubr.bf16.gmra.mrb[0].mxu0 %v344
      %v572 = vpop.f32.mrb[0].mxu0
      %v573 = vadd.f32 %v242, %v572
      %v574 = vpop.f32.mrb[0].mxu0
      %v575 = vpop.f32.mrb[0].mxu0
      %v576 = vadd.f32 %v242, %v575
      %v577 = vpop.f32.mrb[0].mxu0
      %578 = vmatprep.mubr.bf16.mxu0 %v480
      %579 = vmatmul.mubr.bf16.gmra.mrb[0].mxu0 %v346
      %v580 = vpop.f32.mrb[0].mxu0
      %v581 = vadd.f32 %v242, %v580
      %v582 = vpop.f32.mrb[0].mxu0
      %v583 = vpop.f32.mrb[0].mxu0
      %v584 = vadd.f32 %v242, %v583
      %v585 = vpop.f32.mrb[0].mxu0
      %586 = vmatprep.mubr.bf16.mxu0 %v483
      %587 = vmatmul.mubr.bf16.gmra.mrb[0].mxu0 %v348
      %v588 = vpop.f32.mrb[0].mxu0
      %v589 = vadd.f32 %v242, %v588
      %v590 = vpop.f32.mrb[0].mxu0
      %v591 = vpop.f32.mrb[0].mxu0
      %v592 = vadd.f32 %v242, %v591
      %v593 = vpop.f32.mrb[0].mxu0
      %594 = vmatprep.mubr.bf16.mxu0 %v486
      %595 = vmatmul.mubr.bf16.gmra.mrb[0].mxu0 %v350
      %v596 = vpop.f32.mrb[0].mxu0
      %v597 = vadd.f32 %v242, %v596
      %v598 = vpop.f32.mrb[0].mxu0
      %v599 = vpop.f32.mrb[0].mxu0
      %v600 = vadd.f32 %v242, %v599
      %v601 = vpop.f32.mrb[0].mxu0
      %602 = vmatprep.mubr.bf16.mxu0 %v489
      %603 = vmatmul.mubr.bf16.gmra.mrb[0].mxu0 %v352
      %v604 = vpop.f32.mrb[0].mxu0
      %v605 = vadd.f32 %v242, %v604
      %v606 = vpop.f32.mrb[0].mxu0
      %v607 = vpop.f32.mrb[0].mxu0
      %v608 = vadd.f32 %v242, %v607
      %v609 = vpop.f32.mrb[0].mxu0
      %610 = vmatprep.mubr.bf16.mxu0 %v492
      %611 = vmatmul.mubr.bf16.gmra.mrb[0].mxu0 %v354
      %v612 = vpop.f32.mrb[0].mxu0
      %v613 = vadd.f32 %v242, %v612
      %v614 = vpop.f32.mrb[0].mxu0
      %v615 = vpop.f32.mrb[0].mxu0
      %v616 = vadd.f32 %v242, %v615
      %v617 = vpop.f32.mrb[0].mxu0
      %618 = vmatprep.mubr.bf16.mxu0 %v495
      %619 = vmatmul.mubr.bf16.gmra.mrb[0].mxu0 %v356
      %v620 = vpop.f32.mrb[0].mxu0
      %v621 = vadd.f32 %v242, %v620
      %v622 = vpop.f32.mrb[0].mxu0
      %v623 = vpop.f32.mrb[0].mxu0
      %v624 = vadd.f32 %v242, %v623
      %v625 = vpop.f32.mrb[0].mxu0
      %626 = vmatprep.mubr.bf16.mxu0 %v498
      %627 = vmatmul.mubr.bf16.gmra.mrb[0].mxu0 %v358
      %v628 = vpop.f32.mrb[0].mxu0
      %v629 = vadd.f32 %v242, %v628
      %v630 = vpop.f32.mrb[0].mxu0
      %v631 = vpop.f32.mrb[0].mxu0
      %v632 = vadd.f32 %v242, %v631
      %v633 = vpop.f32.mrb[0].mxu0
      %634 = vmatprep.mubr.bf16.mxu0 %v501
      %635 = vmatmul.mubr.bf16.gmra.mrb[0].mxu0 %v360
      %v636 = vpop.f32.mrb[0].mxu0
      %v637 = vadd.f32 %v242, %v636
      %v638 = vpop.f32.mrb[0].mxu0
      %v639 = vpop.f32.mrb[0].mxu0
      %v640 = vadd.f32 %v242, %v639
      %v641 = vpop.f32.mrb[0].mxu0
      %642 = vmatprep.mubr.bf16.mxu0 %v504
      %643 = vmatmul.mubr.bf16.gmra.mrb[0].mxu0 %v362
      %v644 = vpop.f32.mrb[0].mxu0
      %v645 = vadd.f32 %v242, %v644
      %v646 = vpop.f32.mrb[0].mxu0
      %v647 = vpop.f32.mrb[0].mxu0
      %v648 = vadd.f32 %v242, %v647
      %v649 = vpop.f32.mrb[0].mxu0
      %650 = vmatprep.mubr.bf16.mxu0 %v507
      %651 = vmatmul.mubr.bf16.gmra.mrb[0].mxu0 %v364
      %v652 = vpop.f32.mrb[0].mxu0
      %v653 = vadd.f32 %v242, %v652
      %v654 = vpop.f32.mrb[0].mxu0
      %v655 = vpop.f32.mrb[0].mxu0
      %v656 = vadd.f32 %v242, %v655
      %v657 = vpop.f32.mrb[0].mxu0
      %658 = vmatprep.mubr.bf16.mxu0 %v510
      %659 = vmatmul.mubr.bf16.gmra.mrb[0].mxu0 %v366
      %v660 = vpop.f32.mrb[0].mxu0
      %v661 = vadd.f32 %v242, %v660
      %v662 = vpop.f32.mrb[0].mxu0
      %v663 = vpop.f32.mrb[0].mxu0
      %v664 = vadd.f32 %v242, %v663
      %v665 = vpop.f32.mrb[0].mxu0
      %666 = vmatprep.mubr.bf16.mxu0 %v513
      %667 = vmatmul.mubr.bf16.gmra.mrb[0].mxu0 %v368
      %v668 = vpop.f32.mrb[0].mxu0
      %v669 = vadd.f32 %v242, %v668
      %v670 = vpop.f32.mrb[0].mxu0
      %v671 = vpop.f32.mrb[0].mxu0
      %v672 = vadd.f32 %v242, %v671
      %v673 = vpop.f32.mrb[0].mxu0
      %674 = vmatprep.mubr.bf16.mxu0 %v516
      %675 = vmatmul.mubr.bf16.gmra.mrb[0].mxu0 %v370
      %v676 = vpop.f32.mrb[0].mxu0
      %v677 = vadd.f32 %v242, %v676
      %v678 = vpop.f32.mrb[0].mxu0
      %v679 = vpop.f32.mrb[0].mxu0
      %v680 = vadd.f32 %v242, %v679
      %v681 = vpop.f32.mrb[0].mxu0
      %682 = vdwg.mxu0
      %v683 = vmax.f32 %v557, 0.0
      %v684 = vmax.f32 %v560, 0.0
      %v685 = vmax.f32 %v565, 0.0
      %v686 = vmax.f32 %v568, 0.0
      %v687 = vmax.f32 %v573, 0.0
      %v688 = vmax.f32 %v576, 0.0
      %v689 = vmax.f32 %v581, 0.0
      %v690 = vmax.f32 %v584, 0.0
      %v691 = vmax.f32 %v589, 0.0
      %v692 = vmax.f32 %v592, 0.0
      %v693 = vmax.f32 %v597, 0.0
      %v694 = vmax.f32 %v600, 0.0
      %v695 = vmax.f32 %v605, 0.0
      %v696 = vmax.f32 %v608, 0.0
      %v697 = vmax.f32 %v613, 0.0
      %v698 = vmax.f32 %v616, 0.0
      %v699 = vmax.f32 %v621, 0.0
      %v700 = vmax.f32 %v624, 0.0
      %v701 = vmax.f32 %v629, 0.0
      %v702 = vmax.f32 %v632, 0.0
      %v703 = vmax.f32 %v637, 0.0
      %v704 = vmax.f32 %v640, 0.0
      %v705 = vmax.f32 %v645, 0.0
      %v706 = vmax.f32 %v648, 0.0
      %v707 = vmax.f32 %v653, 0.0
      %v708 = vmax.f32 %v656, 0.0
      %v709 = vmax.f32 %v661, 0.0
      %v710 = vmax.f32 %v664, 0.0
      %v711 = vmax.f32 %v669, 0.0
      %v712 = vmax.f32 %v672, 0.0
      %v713 = vmax.f32 %v677, 0.0
      %v714 = vmax.f32 %v680, 0.0
      %vm715 = vcmask 130048
      %716 = vst.msk [vmem:[%s175] sm:$0xff] %vm715, %v683
      %717 = vst.msk [vmem:[%s175 + $0x8] sm:$0xff] %vm715, %v684
      %718 = vst.msk [vmem:[%s175 + $0x10] sm:$0xff] %vm715, %v685
      %719 = vst.msk [vmem:[%s175 + $0x18] sm:$0xff] %vm715, %v686
      %720 = vst.msk [vmem:[%s175 + $0x20] sm:$0xff] %vm715, %v687
      %721 = vst.msk [vmem:[%s175 + $0x28] sm:$0xff] %vm715, %v688
      %722 = vst.msk [vmem:[%s175 + $0x30] sm:$0xff] %vm715, %v689
      %723 = vst.msk [vmem:[%s175 + $0x38] sm:$0xff] %vm715, %v690
      %724 = vst.msk [vmem:[%s175 + $0x40] sm:$0xff] %vm715, %v691
      %725 = vst.msk [vmem:[%s175 + $0x48] sm:$0xff] %vm715, %v692
      %726 = vst.msk [vmem:[%s175 + $0x50] sm:$0xff] %vm715, %v693
      %727 = vst.msk [vmem:[%s175 + $0x58] sm:$0xff] %vm715, %v694
      %728 = vst.msk [vmem:[%s175 + $0x60] sm:$0xff] %vm715, %v695
      %729 = vst.msk [vmem:[%s175 + $0x68] sm:$0xff] %vm715, %v696
      %730 = vst.msk [vmem:[%s175 + $0x70] sm:$0xff] %vm715, %v697
      %731 = vst.msk [vmem:[%s175 + $0x78] sm:$0xff] %vm715, %v698
      %732 = vst.msk [vmem:[%s175 + $0x80] sm:$0xff] %vm715, %v699
      %733 = vst.msk [vmem:[%s175 + $0x88] sm:$0xff] %vm715, %v700
      %734 = vst.msk [vmem:[%s175 + $0x90] sm:$0xff] %vm715, %v701
      %735 = vst.msk [vmem:[%s175 + $0x98] sm:$0xff] %vm715, %v702
      %736 = vst.msk [vmem:[%s175 + $0xa0] sm:$0xff] %vm715, %v703
      %737 = vst.msk [vmem:[%s175 + $0xa8] sm:$0xff] %vm715, %v704
      %738 = vst.msk [vmem:[%s175 + $0xb0] sm:$0xff] %vm715, %v705
      %739 = vst.msk [vmem:[%s175 + $0xb8] sm:$0xff] %vm715, %v706
      %740 = vst.msk [vmem:[%s175 + $0xc0] sm:$0xff] %vm715, %v707
      %741 = vst.msk [vmem:[%s175 + $0xc8] sm:$0xff] %vm715, %v708
      %742 = vst.msk [vmem:[%s175 + $0xd0] sm:$0xff] %vm715, %v709
      %743 = vst.msk [vmem:[%s175 + $0xd8] sm:$0xff] %vm715, %v710
      %744 = vst.msk [vmem:[%s175 + $0xe0] sm:$0xff] %vm715, %v711
      %745 = vst.msk [vmem:[%s175 + $0xe8] sm:$0xff] %vm715, %v712
      %746 = vst.msk [vmem:[%s175 + $0xf0] sm:$0xff] %vm715, %v713
      %747 = vst.msk [vmem:[%s175 + $0xf8] sm:$0xff] %vm715, %v714
      %s748 = smul.u32 32, %s14
      %p749 = scmp.lt.s32.totalorder %s748, 63
      %s750 = scalar_select %p749, %s748, 63
      %s751 = smul.addr %s750, 8
      %s752 = scalar_lea.vmem %s3, %s751
      // Predicated region
      $region33: #{i3dd_forward.10} parent=31 // pred_check
        %p753 = pneg %p100
      $region34: #{i3dd_forward.10} parent=31 // pred_check_branch
        %755 = sbr.rel (%p753) target = $region36
      $region35: #{i3dd_forward.10} parent=31 // pred_region
        %s756 = smul.u32 32, %s14
      $region36: #{i3dd_forward.10} parent=31 // pred_fallthru
        _
    $region32: #{i3dd_forward.10} parent=5 // pred_fallthru
      _
    %p757 = scmp.le.s32.totalorder 2, %s9
    // Predicated region
    $region37: #{i3dd_forward.10} parent=5 // pred_check
      %p758 = pneg %p757
    $region38: #{i3dd_forward.10} parent=5 // pred_check_branch
      %760 = sbr.rel (%p758) target = $region40
    $region39: #{i3dd_forward.10} parent=5 // pred_region
      %s761 = ssub.s32 %s9, 2
      // Predicated region
      $region41: #{i3dd_forward.10} parent=39 // pred_check
        %p762 = pneg %p106
      $region42: #{i3dd_forward.10} parent=39 // pred_check_branch
        %764 = sbr.rel (%p762) target = $region44
      $region43: #{i3dd_forward.10} parent=39 // pred_region
        %s765 = smul.u32 32, %s15
        %p766 = scmp.lt.s32.totalorder %s765, 63
        %s767 = scalar_select %p766, %s765, 63
        %s768 = smul.addr %s767, 8
        %s769 = scalar_lea.vmem %s3, %s768
      $region44: #{i3dd_forward.10} parent=39 // pred_fallthru
        _
    $region40: #{i3dd_forward.10} parent=5 // pred_fallthru
      _
  $region6: #{i3dd_forward.10} parent=0 // loop_footer
    %s13 = sadd.s32 1, %s9
  $region7: #{i3dd_forward.10} parent=0 // loop_footer_branch
    %8 = sbr.rel target = $region3
  $region8: #{i3dd_forward.10} parent=0 // loop_exit
    _

// kernel: i3dd_forward.13
$region0: #{i3dd_forward.13}
  #allocation0 [shape = 'u32[]', space=smem, size = 0x4, offset = 0x4, fixed_abs, tag = 'smem constant byte address 0x4 - core index']
  #allocation1 [shape = 'u32[144,128]{1,0:T(1,128)}', space=vmem, size = 0x12000, scoped, tag = 'internal scratch']
  %s0 = inlined_call_operand.vmem [shape: f32[2,4,1024], index: 0, kind: input, shape index: {}]
  %s1 = inlined_call_operand.vmem [shape: f32[2,1024], index: 1, kind: output, shape index: {}]
  %s2 = sld [smem:[#allocation0]]
  $region14: #{i3dd_forward.13} parent=0
    _
  %s4 = ssub.s32 1, %s2
  %s5 = scalar_select 0, %s4, %s2
  // Predicated region
  $region2: #{i3dd_forward.13} parent=0 // pred_check
    _
  $region3: #{i3dd_forward.13} parent=0 // pred_check_branch
    %7 = sbr.rel (0) target = $region5
  $region4: #{i3dd_forward.13} parent=0 // pred_region
    _
  $region5: #{i3dd_forward.13} parent=0 // pred_fallthru
    _
  %v8 = vld [vmem:[%s0] sm:$0xff]
  %v9 = vld [vmem:[%s0 + $0x8] sm:$0xff]
  %v10 = vld [vmem:[%s0 + $0x10] sm:$0xff]
  %v11 = vld [vmem:[%s0 + $0x18] sm:$0xff]
  %v12 = vld [vmem:[%s0 + $0x20] sm:$0xff]
  %v13 = vld [vmem:[%s0 + $0x28] sm:$0xff]
  %v14 = vld [vmem:[%s0 + $0x30] sm:$0xff]
  %v15 = vld [vmem:[%s0 + $0x38] sm:$0xff]
  %v24 = vcombine.high %v8, %v8
  %v25 = vcombine.high %v9, %v9
  %v26 = vcombine.high %v10, %v10
  %v27 = vcombine.high %v11, %v11
  %v28 = vcombine.high %v12, %v12
  %v29 = vcombine.high %v13, %v13
  %v30 = vcombine.high %v14, %v14
  %v31 = vcombine.high %v15, %v15
  %vm40 = vcmask 1043456
  %v41 = vsel %vm40, %v8, -inf
  %v42 = vrot.slane %v41, 4
  %v43 = vmax.f32 %v41, %v42
  %v44 = vrot.slane %v43, 2
  %v45 = vmax.f32 %v43, %v44
  %v46 = vrot.slane %v45, 1
  %v47 = vmax.f32 %v45, %v46
  %v48 = vsel %vm40, %v24, -inf
  %v49 = vrot.slane %v48, 4
  %v50 = vmax.f32 %v48, %v49
  %v51 = vrot.slane %v50, 2
  %v52 = vmax.f32 %v50, %v51
  %v53 = vrot.slane %v52, 1
  %v54 = vmax.f32 %v52, %v53
  %v55 = vsel %vm40, %v9, -inf
  %v56 = vrot.slane %v55, 4
  %v57 = vmax.f32 %v55, %v56
  %v58 = vrot.slane %v57, 2
  %v59 = vmax.f32 %v57, %v58
  %v60 = vrot.slane %v59, 1
  %v61 = vmax.f32 %v59, %v60
  %v62 = vsel %vm40, %v25, -inf
  %v63 = vrot.slane %v62, 4
  %v64 = vmax.f32 %v62, %v63
  %v65 = vrot.slane %v64, 2
  %v66 = vmax.f32 %v64, %v65
  %v67 = vrot.slane %v66, 1
  %v68 = vmax.f32 %v66, %v67
  %v69 = vsel %vm40, %v10, -inf
  %v70 = vrot.slane %v69, 4
  %v71 = vmax.f32 %v69, %v70
  %v72 = vrot.slane %v71, 2
  %v73 = vmax.f32 %v71, %v72
  %v74 = vrot.slane %v73, 1
  %v75 = vmax.f32 %v73, %v74
  %v76 = vsel %vm40, %v26, -inf
  %v77 = vrot.slane %v76, 4
  %v78 = vmax.f32 %v76, %v77
  %v79 = vrot.slane %v78, 2
  %v80 = vmax.f32 %v78, %v79
  %v81 = vrot.slane %v80, 1
  %v82 = vmax.f32 %v80, %v81
  %v83 = vsel %vm40, %v11, -inf
  %v84 = vrot.slane %v83, 4
  %v85 = vmax.f32 %v83, %v84
  %v86 = vrot.slane %v85, 2
  %v87 = vmax.f32 %v85, %v86
  %v88 = vrot.slane %v87, 1
  %v89 = vmax.f32 %v87, %v88
  %v90 = vsel %vm40, %v27, -inf
  %v91 = vrot.slane %v90, 4
  %v92 = vmax.f32 %v90, %v91
  %v93 = vrot.slane %v92, 2
  %v94 = vmax.f32 %v92, %v93
  %v95 = vrot.slane %v94, 1
  %v96 = vmax.f32 %v94, %v95
  %v97 = vsel %vm40, %v12, -inf
  %v98 = vrot.slane %v97, 4
  %v99 = vmax.f32 %v97, %v98
  %v100 = vrot.slane %v99, 2
  %v101 = vmax.f32 %v99, %v100
  %v102 = vrot.slane %v101, 1
  %v103 = vmax.f32 %v101, %v102
  %v104 = vsel %vm40, %v28, -inf
  %v105 = vrot.slane %v104, 4
  %v106 = vmax.f32 %v104, %v105
  %v107 = vrot.slane %v106, 2
  %v108 = vmax.f32 %v106, %v107
  %v109 = vrot.slane %v108, 1
  %v110 = vmax.f32 %v108, %v109
  %v111 = vsel %vm40, %v13, -inf
  %v112 = vrot.slane %v111, 4
  %v113 = vmax.f32 %v111, %v112
  %v114 = vrot.slane %v113, 2
  %v115 = vmax.f32 %v113, %v114
  %v116 = vrot.slane %v115, 1
  %v117 = vmax.f32 %v115, %v116
  %v118 = vsel %vm40, %v29, -inf
  %v119 = vrot.slane %v118, 4
  %v120 = vmax.f32 %v118, %v119
  %v121 = vrot.slane %v120, 2
  %v122 = vmax.f32 %v120, %v121
  %v123 = vrot.slane %v122, 1
  %v124 = vmax.f32 %v122, %v123
  %v125 = vsel %vm40, %v14, -inf
  %v126 = vrot.slane %v125, 4
  %v127 = vmax.f32 %v125, %v126
  %v128 = vrot.slane %v127, 2
  %v129 = vmax.f32 %v127, %v128
  %v130 = vrot.slane %v129, 1
  %v131 = vmax.f32 %v129, %v130
  %v132 = vsel %vm40, %v30, -inf
  %v133 = vrot.slane %v132, 4
  %v134 = vmax.f32 %v132, %v133
  %v135 = vrot.slane %v134, 2
  %v136 = vmax.f32 %v134, %v135
  %v137 = vrot.slane %v136, 1
  %v138 = vmax.f32 %v136, %v137
  %v139 = vsel %vm40, %v15, -inf
  %v140 = vrot.slane %v139, 4
  %v141 = vmax.f32 %v139, %v140
  %v142 = vrot.slane %v141, 2
  %v143 = vmax.f32 %v141, %v142
  %v144 = vrot.slane %v143, 1
  %v145 = vmax.f32 %v143, %v144
  %v146 = vsel %vm40, %v31, -inf
  %v147 = vrot.slane %v146, 4
  %v148 = vmax.f32 %v146, %v147
  %v149 = vrot.slane %v148, 2
  %v150 = vmax.f32 %v148, %v149
  %v151 = vrot.slane %v150, 1
  %v152 = vmax.f32 %v150, %v151
  %v169 = vcombine.low %v47, %v54
  %v170 = vcombine.low %v61, %v68
  %v172 = vunpack.c.l.s4 1983009808
  %v173 = vunpack.c.0.s8 %v172
  %v174 = vlaneseq
  %v175 = vshrl.u32 %v174, 7
  %v176 = vsub.s32 %v173, %v175
  %v177 = vrot.slane %v169, %v176
  %v179 = vunpack.c.l.s4 1983009808
  %v180 = vunpack.c.0.s8 %v179
  %v181 = vlaneseq
  %v182 = vshrl.u32 %v181, 7
  %v183 = vsub.s32 %v180, %v182
  %v184 = vrot.slane %v170, %v183
  %v185 = vcombine.low %v177, %v184
  %v186 = vcombine.low %v75, %v82
  %v187 = vcombine.low %v89, %v96
  %v189 = vunpack.c.l.s4 1983009808
  %v190 = vunpack.c.0.s8 %v189
  %v191 = vlaneseq
  %v192 = vshrl.u32 %v191, 7
  %v193 = vsub.s32 %v190, %v192
  %v194 = vrot.slane %v186, %v193
  %v196 = vunpack.c.l.s4 1983009808
  %v197 = vunpack.c.0.s8 %v196
  %v198 = vlaneseq
  %v199 = vshrl.u32 %v198, 7
  %v200 = vsub.s32 %v197, %v199
  %v201 = vrot.slane %v187, %v200
  %v202 = vcombine.low %v194, %v201
  %v203 = vcombine.low %v103, %v110
  %v204 = vcombine.low %v117, %v124
  %v206 = vunpack.c.l.s4 1983009808
  %v207 = vunpack.c.0.s8 %v206
  %v208 = vlaneseq
  %v209 = vshrl.u32 %v208, 7
  %v210 = vsub.s32 %v207, %v209
  %v211 = vrot.slane %v203, %v210
  %v213 = vunpack.c.l.s4 1983009808
  %v214 = vunpack.c.0.s8 %v213
  %v215 = vlaneseq
  %v216 = vshrl.u32 %v215, 7
  %v217 = vsub.s32 %v214, %v216
  %v218 = vrot.slane %v204, %v217
  %v219 = vcombine.low %v211, %v218
  %v220 = vcombine.low %v131, %v138
  %v221 = vcombine.low %v145, %v152
  %v223 = vunpack.c.l.s4 1983009808
  %v224 = vunpack.c.0.s8 %v223
  %v225 = vlaneseq
  %v226 = vshrl.u32 %v225, 7
  %v227 = vsub.s32 %v224, %v226
  %v228 = vrot.slane %v220, %v227
  %v230 = vunpack.c.l.s4 1983009808
  %v231 = vunpack.c.0.s8 %v230
  %v232 = vlaneseq
  %v233 = vshrl.u32 %v232, 7
  %v234 = vsub.s32 %v231, %v233
  %v235 = vrot.slane %v221, %v234
  %v236 = vcombine.low %v228, %v235
  %vm237 = vcmask 1044484
  %v238 = vsel %vm237, %v185, %v185
  %vm239 = vcmask 1046534
  %v240 = vsel %vm239, %v185, %v238
  %v241 = vrot.slane %v219, 7
  %vm242 = vcmask 1041409
  %v243 = vsel %vm242, %v241, %v240
  %vm244 = vcmask 1043459
  %v245 = vsel %vm244, %v241, %v243
  %vm246 = vcmask 1045509
  %v247 = vsel %vm246, %v241, %v245
  %vm248 = vcmask 1047559
  %v249 = vsel %vm248, %v241, %v247
  %v250 = vsel %vm237, %v202, %v202
  %v251 = vsel %vm239, %v202, %v250
  %v252 = vrot.slane %v236, 7
  %v253 = vsel %vm242, %v252, %v251
  %v254 = vsel %vm244, %v252, %v253
  %v255 = vsel %vm246, %v252, %v254
  %v256 = vsel %vm248, %v252, %v255
  %259 = vst [vmem:[%s1] sm:$0xff] %v249
  %260 = vst [vmem:[%s1 + $0x8] sm:$0xff] %v256
  // Predicated region
  $region6: #{i3dd_forward.13} parent=0 // pred_check
    _
  $region7: #{i3dd_forward.13} parent=0 // pred_check_branch
    %262 = sbr.rel (0) target = $region9
  $region8: #{i3dd_forward.13} parent=0 // pred_region
    _
  $region9: #{i3dd_forward.13} parent=0 // pred_fallthru
    _
  // Predicated region
  $region10: #{i3dd_forward.13} parent=0 // pred_check
    _
  $region11: #{i3dd_forward.13} parent=0 // pred_check_branch
    %264 = sbr.rel (0) target = $region13
  $region12: #{i3dd_forward.13} parent=0 // pred_region
    _
  $region13: #{i3dd_forward.13} parent=0 // pred_fallthru
    _

// kernel: i3dd_forward.11
$region0: #{i3dd_forward.11}
  #allocation0 [shape = 'u32[]', space=smem, size = 0x4, offset = 0x4, fixed_abs, tag = 'smem constant byte address 0x4 - core index']
  #allocation1 [shape = 'u32[144,128]{1,0:T(1,128)}', space=vmem, size = 0x12000, scoped, tag = 'internal scratch']
  %s0 = inlined_call_operand.vmem [shape: bf16[64,432], index: 0, kind: input, shape index: {}]
  %s1 = inlined_call_operand.vmem [shape: bf16[432,32], index: 1, kind: input, shape index: {}]
  %s2 = inlined_call_operand.vmem [shape: f32[1,32], index: 2, kind: input, shape index: {}]
  %s3 = inlined_call_operand.vmem [shape: f32[64,32], index: 3, kind: output, shape index: {}]
  %s4 = sld [smem:[#allocation0]]
  $region22: #{i3dd_forward.11} parent=0
    _
  %s6 = ssub.s32 1, %s4
  %s7 = scalar_select 0, %s6, %s4
  // Predicated region
  $region2: #{i3dd_forward.11} parent=0 // pred_check
    _
  $region3: #{i3dd_forward.11} parent=0 // pred_check_branch
    %9 = sbr.rel (0) target = $region5
  $region4: #{i3dd_forward.11} parent=0 // pred_region
    _
  $region5: #{i3dd_forward.11} parent=0 // pred_fallthru
    _
  // Predicated region
  $region6: #{i3dd_forward.11} parent=0 // pred_check
    _
  $region7: #{i3dd_forward.11} parent=0 // pred_check_branch
    %11 = sbr.rel (0) target = $region9
  $region8: #{i3dd_forward.11} parent=0 // pred_region
    _
  $region9: #{i3dd_forward.11} parent=0 // pred_fallthru
    _
  // Predicated region
  $region10: #{i3dd_forward.11} parent=0 // pred_check
    _
  $region11: #{i3dd_forward.11} parent=0 // pred_check_branch
    %13 = sbr.rel (0) target = $region13
  $region12: #{i3dd_forward.11} parent=0 // pred_region
    _
  $region13: #{i3dd_forward.11} parent=0 // pred_fallthru
    _
  %v15 = vld [vmem:[%s0] sm:$0xff]
  %v16 = vld [vmem:[%s0 + $0x8] sm:$0xff]
  %v17 = vld [vmem:[%s0 + $0x10] sm:$0xff]
  %v18 = vld [vmem:[%s0 + $0x18] sm:$0xff]
  %v19 = vld [vmem:[%s0 + $0x20] sm:$0xff]
  %v20 = vld [vmem:[%s0 + $0x28] sm:$0xff]
  %v21 = vld [vmem:[%s0 + $0x30] sm:$0xff]
  %v22 = vld [vmem:[%s0 + $0x38] sm:$0xff]
  %v23 = vld [vmem:[%s0 + $0x40] sm:$0xff]
  %v24 = vld [vmem:[%s0 + $0x48] sm:$0xff]
  %v25 = vld [vmem:[%s0 + $0x50] sm:$0xff]
  %v26 = vld [vmem:[%s0 + $0x58] sm:$0xff]
  %v27 = vld [vmem:[%s0 + $0x60] sm:$0xff]
  %v28 = vld [vmem:[%s0 + $0x68] sm:$0xff]
  %v29 = vld [vmem:[%s0 + $0x70] sm:$0xff]
  %v30 = vld [vmem:[%s0 + $0x78] sm:$0xff]
  %v31 = vld [vmem:[%s1] sm:$0xf]
  %v32 = vld [vmem:[%s1 + $0x4] sm:$0xf]
  %v33 = vld [vmem:[%s1 + $0x8] sm:$0xf]
  %v34 = vld [vmem:[%s1 + $0xc] sm:$0xf]
  %v35 = vld [vmem:[%s1 + $0x10] sm:$0xf]
  %v36 = vld [vmem:[%s1 + $0x14] sm:$0xf]
  %v37 = vld [vmem:[%s1 + $0x18] sm:$0xf]
  %v38 = vld [vmem:[%s1 + $0x1c] sm:$0xf]
  %v39 = vld [vmem:[%s1 + $0x20] sm:$0xf]
  %v40 = vld [vmem:[%s1 + $0x24] sm:$0xf]
  %v41 = vld [vmem:[%s1 + $0x28] sm:$0xf]
  %v42 = vld [vmem:[%s1 + $0x2c] sm:$0xf]
  %v43 = vld [vmem:[%s1 + $0x30] sm:$0xf]
  %v44 = vld [vmem:[%s1 + $0x34] sm:$0xf]
  %v45 = vld [vmem:[%s1 + $0x38] sm:$0xf]
  %v46 = vld [vmem:[%s1 + $0x3c] sm:$0xf]
  %v47 = vld [vmem:[%s1 + $0x40] sm:$0xf]
  %v48 = vld [vmem:[%s1 + $0x44] sm:$0xf]
  %v49 = vld [vmem:[%s1 + $0x48] sm:$0xf]
  %v50 = vld [vmem:[%s1 + $0x4c] sm:$0xf]
  %v51 = vld [vmem:[%s1 + $0x50] sm:$0xf]
  %v52 = vld [vmem:[%s1 + $0x54] sm:$0xf]
  %v53 = vld [vmem:[%s1 + $0x58] sm:$0xf]
  %v54 = vld [vmem:[%s1 + $0x5c] sm:$0xf]
  %v55 = vld [vmem:[%s1 + $0x60] sm:$0xf]
  %v56 = vld [vmem:[%s1 + $0x64] sm:$0xf]
  %v57 = vld [vmem:[%s1 + $0x68] sm:$0xf]
  %v58 = vld [vmem:[%s1 + $0x6c] sm:$0xf]
  %v59 = vld [vmem:[%s1 + $0x70] sm:$0xf]
  %v60 = vld [vmem:[%s1 + $0x74] sm:$0xf]
  %v61 = vld [vmem:[%s1 + $0x78] sm:$0xf]
  %v62 = vld [vmem:[%s1 + $0x7c] sm:$0xf]
  %v63 = vld [vmem:[%s1 + $0x80] sm:$0xf]
  %v64 = vld [vmem:[%s1 + $0x84] sm:$0xf]
  %v65 = vld [vmem:[%s1 + $0x88] sm:$0xf]
  %v66 = vld [vmem:[%s1 + $0x8c] sm:$0xf]
  %v67 = vld [vmem:[%s1 + $0x90] sm:$0xf]
  %v68 = vld [vmem:[%s1 + $0x94] sm:$0xf]
  %v69 = vld [vmem:[%s1 + $0x98] sm:$0xf]
  %v70 = vld [vmem:[%s1 + $0x9c] sm:$0xf]
  %v71 = vld [vmem:[%s1 + $0xa0] sm:$0xf]
  %v72 = vld [vmem:[%s1 + $0xa4] sm:$0xf]
  %v73 = vld [vmem:[%s1 + $0xa8] sm:$0xf]
  %v74 = vld [vmem:[%s1 + $0xac] sm:$0xf]
  %v75 = vld [vmem:[%s1 + $0xb0] sm:$0xf]
  %v76 = vld [vmem:[%s1 + $0xb4] sm:$0xf]
  %v77 = vld [vmem:[%s1 + $0xb8] sm:$0xf]
  %v78 = vld [vmem:[%s1 + $0xbc] sm:$0xf]
  %v79 = vld [vmem:[%s1 + $0xc0] sm:$0xf]
  %v80 = vld [vmem:[%s1 + $0xc4] sm:$0xf]
  %v81 = vld [vmem:[%s1 + $0xc8] sm:$0xf]
  %v82 = vld [vmem:[%s1 + $0xcc] sm:$0xf]
  %v83 = vld [vmem:[%s1 + $0xd0] sm:$0xf]
  %v84 = vld [vmem:[%s1 + $0xd4] sm:$0xf]
  %v85 = vld [vmem:[%s2] sm:$0x1]
  %v87 = vlaneseq
  %v88 = vshrl.u32 %v87, 7
  %v89 = vsub.s32 0, %v88
  %v90 = vrot.slane %v85, %v89
  %v108 = vunpack.c.l.b16 %v15
  %v109 = vunpack.c.h.b16 %v15
  %v110 = vunpack.c.l.b16 %v16
  %v111 = vunpack.c.h.b16 %v16
  %v112 = vunpack.c.l.b16 %v17
  %v113 = vunpack.c.h.b16 %v17
  %v114 = vunpack.c.l.b16 %v18
  %v115 = vunpack.c.h.b16 %v18
  %v116 = vunpack.c.l.b16 %v19
  %v117 = vunpack.c.h.b16 %v19
  %v118 = vunpack.c.l.b16 %v20
  %v119 = vunpack.c.h.b16 %v20
  %v120 = vunpack.c.l.b16 %v21
  %v121 = vunpack.c.h.b16 %v21
  %v122 = vunpack.c.l.b16 %v22
  %v123 = vunpack.c.h.b16 %v22
  %v124 = vunpack.c.l.b16 %v23
  %v125 = vunpack.c.h.b16 %v23
  %v126 = vunpack.c.l.b16 %v24
  %v127 = vunpack.c.h.b16 %v24
  %v128 = vunpack.c.l.b16 %v25
  %v129 = vunpack.c.h.b16 %v25
  %v130 = vunpack.c.l.b16 %v26
  %v131 = vunpack.c.h.b16 %v26
  %v132 = vunpack.c.l.b16 %v27
  %v133 = vunpack.c.h.b16 %v27
  %v134 = vunpack.c.l.b16 %v28
  %v135 = vunpack.c.h.b16 %v28
  %v136 = vunpack.c.l.b16 %v29
  %v137 = vunpack.c.h.b16 %v29
  %v138 = vunpack.c.l.b16 %v30
  %v139 = vunpack.c.h.b16 %v30
  %v140 = vpack.c.b16 %v112, %v108
  %v141 = vpack.c.b16 %v113, %v109
  %v142 = vpack.c.b16 %v114, %v110
  %v143 = vpack.c.b16 %v115, %v111
  %v144 = vpack.c.b16 %v120, %v116
  %v145 = vpack.c.b16 %v121, %v117
  %v146 = vpack.c.b16 %v122, %v118
  %v147 = vpack.c.b16 %v123, %v119
  %v148 = vpack.c.b16 %v128, %v124
  %v149 = vpack.c.b16 %v129, %v125
  %v150 = vpack.c.b16 %v130, %v126
  %v151 = vpack.c.b16 %v131, %v127
  %v152 = vpack.c.b16 %v136, %v132
  %v153 = vpack.c.b16 %v137, %v133
  %v154 = vpack.c.b16 %v138, %v134
  %v155 = vpack.c.b16 %v139, %v135
  %v222 = vunpack.c.l.b16 %v31
  %v223 = vunpack.c.l.b16 %v32
  %v224 = vunpack.c.l.b16 %v33
  %v225 = vunpack.c.l.b16 %v34
  %v226 = vunpack.c.l.b16 %v35
  %v227 = vunpack.c.l.b16 %v36
  %v228 = vunpack.c.l.b16 %v37
  %v229 = vunpack.c.l.b16 %v38
  %v230 = vunpack.c.l.b16 %v39
  %v231 = vunpack.c.l.b16 %v40
  %v232 = vunpack.c.l.b16 %v41
  %v233 = vunpack.c.l.b16 %v42
  %v234 = vunpack.c.l.b16 %v43
  %v235 = vunpack.c.l.b16 %v44
  %v236 = vunpack.c.l.b16 %v45
  %v237 = vunpack.c.l.b16 %v46
  %v238 = vunpack.c.l.b16 %v47
  %v239 = vunpack.c.l.b16 %v48
  %v240 = vunpack.c.l.b16 %v49
  %v241 = vunpack.c.l.b16 %v50
  %v242 = vunpack.c.l.b16 %v51
  %v243 = vunpack.c.l.b16 %v52
  %v244 = vunpack.c.l.b16 %v53
  %v245 = vunpack.c.l.b16 %v54
  %v246 = vunpack.c.l.b16 %v55
  %v247 = vunpack.c.l.b16 %v56
  %v248 = vunpack.c.l.b16 %v57
  %v249 = vunpack.c.l.b16 %v58
  %v250 = vunpack.c.l.b16 %v59
  %v251 = vunpack.c.l.b16 %v60
  %v252 = vunpack.c.l.b16 %v61
  %v253 = vunpack.c.l.b16 %v62
  %v254 = vunpack.c.l.b16 %v63
  %v255 = vunpack.c.l.b16 %v64
  %v256 = vunpack.c.l.b16 %v65
  %v257 = vunpack.c.l.b16 %v66
  %v258 = vunpack.c.l.b16 %v67
  %v259 = vunpack.c.l.b16 %v68
  %v260 = vunpack.c.l.b16 %v69
  %v261 = vunpack.c.l.b16 %v70
  %v262 = vunpack.c.l.b16 %v71
  %v263 = vunpack.c.l.b16 %v72
  %v264 = vunpack.c.l.b16 %v73
  %v265 = vunpack.c.l.b16 %v74
  %v266 = vunpack.c.l.b16 %v75
  %v267 = vunpack.c.l.b16 %v76
  %v268 = vunpack.c.l.b16 %v77
  %v269 = vunpack.c.l.b16 %v78
  %v270 = vunpack.c.l.b16 %v79
  %v271 = vunpack.c.l.b16 %v80
  %v272 = vunpack.c.l.b16 %v81
  %v273 = vunpack.c.l.b16 %v82
  %v274 = vunpack.c.l.b16 %v83
  %v275 = vunpack.c.l.b16 %v84
  %v276 = vpack.c.b16 %v223, %v222
  %v277 = vpack.c.b16 %v225, %v224
  %v278 = vpack.c.b16 %v227, %v226
  %v279 = vpack.c.b16 %v229, %v228
  %v280 = vpack.c.b16 %v231, %v230
  %v281 = vpack.c.b16 %v233, %v232
  %v282 = vpack.c.b16 %v235, %v234
  %v283 = vpack.c.b16 %v237, %v236
  %v284 = vpack.c.b16 %v239, %v238
  %v285 = vpack.c.b16 %v241, %v240
  %v286 = vpack.c.b16 %v243, %v242
  %v287 = vpack.c.b16 %v245, %v244
  %v288 = vpack.c.b16 %v247, %v246
  %v289 = vpack.c.b16 %v249, %v248
  %v290 = vpack.c.b16 %v251, %v250
  %v291 = vpack.c.b16 %v253, %v252
  %v292 = vpack.c.b16 %v255, %v254
  %v293 = vpack.c.b16 %v257, %v256
  %v294 = vpack.c.b16 %v259, %v258
  %v295 = vpack.c.b16 %v261, %v260
  %v296 = vpack.c.b16 %v263, %v262
  %v297 = vpack.c.b16 %v265, %v264
  %v298 = vpack.c.b16 %v267, %v266
  %v299 = vpack.c.b16 %v269, %v268
  %v300 = vpack.c.b16 %v271, %v270
  %v301 = vpack.c.b16 %v273, %v272
  %v302 = vpack.c.b16 %v275, %v274
  %vm330 = vcmask 392192
  %v332 = vsel %vm330, %v143, 0
  %v335 = vsel %vm330, %v147, 0
  %v338 = vsel %vm330, %v151, 0
  %v341 = vsel %vm330, %v155, 0
  %343 = vmatprep.subr.bf16.mxu0 0
  %344 = vmatpush1.bf16.msra.mxu0 %v276
  %345 = vmatprep.subr.bf16.mxu0 0
  %346 = vmatpush1.bf16.msra.mxu0 %v277
  %347 = vmatprep.subr.bf16.mxu0 0
  %348 = vmatpush1.bf16.msra.mxu0 %v278
  %349 = vmatprep.subr.bf16.mxu0 0
  %350 = vmatpush1.bf16.msra.mxu0 %v279
  %351 = vmatprep.subr.bf16.mxu0 0
  %352 = vmatpush1.bf16.msra.mxu0 %v280
  %353 = vmatprep.subr.bf16.mxu0 0
  %354 = vmatpush1.bf16.msra.mxu0 %v281
  %355 = vmatprep.subr.bf16.mxu0 0
  %356 = vmatpush1.bf16.msra.mxu0 %v282
  %357 = vmatprep.subr.bf16.mxu0 0
  %358 = vmatpush1.bf16.msra.mxu0 %v283
  %359 = vmatprep.subr.bf16.mxu0 0
  %360 = vmatpush1.bf16.msra.mxu0 %v284
  %361 = vmatprep.subr.bf16.mxu0 0
  %362 = vmatpush1.bf16.msra.mxu0 %v285
  %363 = vmatprep.subr.bf16.mxu0 0
  %364 = vmatpush1.bf16.msra.mxu0 %v286
  %365 = vmatprep.subr.bf16.mxu0 0
  %366 = vmatpush1.bf16.msra.mxu0 %v287
  %367 = vmatprep.subr.bf16.mxu0 0
  %368 = vmatpush1.bf16.msra.mxu0 %v288
  %369 = vmatprep.subr.bf16.mxu0 0
  %370 = vmatpush1.bf16.msra.mxu0 %v289
  %371 = vmatprep.subr.bf16.mxu0 0
  %372 = vmatpush1.bf16.msra.mxu0 %v290
  %373 = vmatprep.subr.bf16.mxu0 0
  %374 = vmatpush1.bf16.msra.mxu0 %v291
  %375 = vmatprep.mubr.bf16.mxu0 %v141
  %376 = vmatmul.mubr.bf16.gmra.mrb[0].mxu0 %v140
  %v377 = vpop.f32.mrb[0].mxu0
  %v378 = vadd.f32 %v90, %v377
  %v379 = vpop.f32.mrb[0].mxu0
  %v380 = vpop.f32.mrb[0].mxu0
  %v381 = vadd.f32 %v90, %v380
  %v382 = vpop.f32.mrb[0].mxu0
  %383 = vmatprep.mubr.bf16.mxu0 %v145
  %384 = vmatmul.mubr.bf16.gmra.mrb[0].mxu0 %v144
  %v385 = vpop.f32.mrb[0].mxu0
  %v386 = vadd.f32 %v90, %v385
  %v387 = vpop.f32.mrb[0].mxu0
  %v388 = vpop.f32.mrb[0].mxu0
  %v389 = vadd.f32 %v90, %v388
  %v390 = vpop.f32.mrb[0].mxu0
  %391 = vmatprep.mubr.bf16.mxu0 %v149
  %392 = vmatmul.mubr.bf16.gmra.mrb[0].mxu0 %v148
  %v393 = vpop.f32.mrb[0].mxu0
  %v394 = vadd.f32 %v90, %v393
  %v395 = vpop.f32.mrb[0].mxu0
  %v396 = vpop.f32.mrb[0].mxu0
  %v397 = vadd.f32 %v90, %v396
  %v398 = vpop.f32.mrb[0].mxu0
  %399 = vmatprep.mubr.bf16.mxu0 %v153
  %400 = vmatmul.mubr.bf16.gmra.mrb[0].mxu0 %v152
  %v401 = vpop.f32.mrb[0].mxu0
  %v402 = vadd.f32 %v90, %v401
  %v403 = vpop.f32.mrb[0].mxu0
  %v404 = vpop.f32.mrb[0].mxu0
  %v405 = vadd.f32 %v90, %v404
  %v406 = vpop.f32.mrb[0].mxu0
  %407 = vdwg.mxu0
  %408 = vmatprep.subr.bf16.mxu0 0
  %409 = vmatpush1.bf16.msra.mxu0 %v292
  %410 = vmatprep.subr.bf16.mxu0 0
  %411 = vmatpush1.bf16.msra.mxu0 %v293
  %412 = vmatprep.subr.bf16.mxu0 0
  %413 = vmatpush1.bf16.msra.mxu0 %v294
  %414 = vmatprep.subr.bf16.mxu0 0
  %415 = vmatpush1.bf16.msra.mxu0 %v295
  %416 = vmatprep.subr.bf16.mxu0 0
  %417 = vmatpush1.bf16.msra.mxu0 %v296
  %418 = vmatprep.subr.bf16.mxu0 0
  %419 = vmatpush1.bf16.msra.mxu0 %v297
  %420 = vmatprep.subr.bf16.mxu0 0
  %421 = vmatpush1.bf16.msra.mxu0 %v298
  %422 = vmatprep.subr.bf16.mxu0 0
  %423 = vmatpush1.bf16.msra.mxu0 %v299
  %424 = vmatprep.subr.bf16.mxu0 0
  %425 = vmatpush1.bf16.msra.mxu0 %v300
  %426 = vmatprep.subr.bf16.mxu0 0
  %427 = vmatpush1.bf16.msra.mxu0 %v301
  %428 = vmatprep.subr.bf16.mxu0 0
  %429 = vmatpush1.bf16.msra.mxu0 %v302
  %430 = vmatprep.subr.bf16.mxu0 0
  %431 = vmatpush1.bf16.msra.mxu0 0
  %432 = vmatprep.subr.bf16.mxu0 0
  %433 = vmatpush1.bf16.msra.mxu0 0
  %434 = vmatprep.subr.bf16.mxu0 0
  %435 = vmatpush1.bf16.msra.mxu0 0
  %436 = vmatprep.subr.bf16.mxu0 0
  %437 = vmatpush1.bf16.msra.mxu0 0
  %438 = vmatprep.subr.bf16.mxu0 0
  %439 = vmatpush1.bf16.msra.mxu0 0
  %440 = vmatprep.mubr.bf16.mxu0 %v332
  %441 = vmatmul.mubr.bf16.gmra.mrb[0].mxu0 %v142
  %v442 = vpop.f32.mrb[0].mxu0
  %v443 = vadd.f32 %v378, %v442
  %v444 = vpop.f32.mrb[0].mxu0
  %v445 = vpop.f32.mrb[0].mxu0
  %v446 = vadd.f32 %v381, %v445
  %v447 = vpop.f32.mrb[0].mxu0
  %448 = vmatprep.mubr.bf16.mxu0 %v335
  %449 = vmatmul.mubr.bf16.gmra.mrb[0].mxu0 %v146
  %v450 = vpop.f32.mrb[0].mxu0
  %v451 = vadd.f32 %v386, %v450
  %v452 = vpop.f32.mrb[0].mxu0
  %v453 = vpop.f32.mrb[0].mxu0
  %v454 = vadd.f32 %v389, %v453
  %v455 = vpop.f32.mrb[0].mxu0
  %456 = vmatprep.mubr.bf16.mxu0 %v338
  %457 = vmatmul.mubr.bf16.gmra.mrb[0].mxu0 %v150
  %v458 = vpop.f32.mrb[0].mxu0
  %v459 = vadd.f32 %v394, %v458
  %v460 = vpop.f32.mrb[0].mxu0
  %v461 = vpop.f32.mrb[0].mxu0
  %v462 = vadd.f32 %v397, %v461
  %v463 = vpop.f32.mrb[0].mxu0
  %464 = vmatprep.mubr.bf16.mxu0 %v341
  %465 = vmatmul.mubr.bf16.gmra.mrb[0].mxu0 %v154
  %v466 = vpop.f32.mrb[0].mxu0
  %v467 = vadd.f32 %v402, %v466
  %v468 = vpop.f32.mrb[0].mxu0
  %v469 = vpop.f32.mrb[0].mxu0
  %v470 = vadd.f32 %v405, %v469
  %v471 = vpop.f32.mrb[0].mxu0
  %472 = vdwg.mxu0
  %v473 = vmax.f32 %v443, 0.0
  %v474 = vmax.f32 %v446, 0.0
  %v475 = vmax.f32 %v451, 0.0
  %v476 = vmax.f32 %v454, 0.0
  %v477 = vmax.f32 %v459, 0.0
  %v478 = vmax.f32 %v462, 0.0
  %v479 = vmax.f32 %v467, 0.0
  %v480 = vmax.f32 %v470, 0.0
  %vm481 = vcmask 261120
  %482 = vst.msk [vmem:[%s3] sm:$0xff] %vm481, %v473
  %483 = vst.msk [vmem:[%s3 + $0x8] sm:$0xff] %vm481, %v474
  %484 = vst.msk [vmem:[%s3 + $0x10] sm:$0xff] %vm481, %v475
  %485 = vst.msk [vmem:[%s3 + $0x18] sm:$0xff] %vm481, %v476
  %486 = vst.msk [vmem:[%s3 + $0x20] sm:$0xff] %vm481, %v477
  %487 = vst.msk [vmem:[%s3 + $0x28] sm:$0xff] %vm481, %v478
  %488 = vst.msk [vmem:[%s3 + $0x30] sm:$0xff] %vm481, %v479
  %489 = vst.msk [vmem:[%s3 + $0x38] sm:$0xff] %vm481, %v480
  // Predicated region
  $region14: #{i3dd_forward.11} parent=0 // pred_check
    _
  $region15: #{i3dd_forward.11} parent=0 // pred_check_branch
    %491 = sbr.rel (0) target = $region17
  $region16: #{i3dd_forward.11} parent=0 // pred_region
    _
  $region17: #{i3dd_forward.11} parent=0 // pred_fallthru
    _
  // Predicated region
  $region18: #{i3dd_forward.11} parent=0 // pred_check
    _
  $region19: #{i3dd_forward.11} parent=0 // pred_check_branch
    %493 = sbr.rel (0) target = $region21
  $region20: #{i3dd_forward.11} parent=0 // pred_region
    _
  $region21: #{i3dd_forward.11} parent=0 // pred_fallthru
    _

// kernel: i3dd_forward.14
$region0: #{i3dd_forward.14}
  #allocation0 [shape = 'u32[]', space=smem, size = 0x4, offset = 0x4, fixed_abs, tag = 'smem constant byte address 0x4 - core index']
  #allocation1 [shape = 'u32[144,128]{1,0:T(1,128)}', space=vmem, size = 0x12000, scoped, tag = 'internal scratch']
  %s0 = inlined_call_operand.vmem [shape: f32[2,2,512], index: 0, kind: input, shape index: {}]
  %s1 = inlined_call_operand.vmem [shape: f32[2,512], index: 1, kind: output, shape index: {}]
  %s2 = sld [smem:[#allocation0]]
  $region14: #{i3dd_forward.14} parent=0
    _
  %s4 = ssub.s32 1, %s2
  %s5 = scalar_select 0, %s4, %s2
  // Predicated region
  $region2: #{i3dd_forward.14} parent=0 // pred_check
    _
  $region3: #{i3dd_forward.14} parent=0 // pred_check_branch
    %7 = sbr.rel (0) target = $region5
  $region4: #{i3dd_forward.14} parent=0 // pred_region
    _
  $region5: #{i3dd_forward.14} parent=0 // pred_fallthru
    _
  %v8 = vld [vmem:[%s0] sm:$0xff]
  %v9 = vld [vmem:[%s0 + $0x8] sm:$0xff]
  %v12 = vcombine.high %v8, %v8
  %v14 = vunpack.c.l.s4 1983009808
  %v15 = vunpack.c.0.s8 %v14
  %v16 = vlaneseq
  %v17 = vshrl.u32 %v16, 7
  %v18 = vsub.s32 %v15, %v17
  %v19 = vrot.slane %v8, %v18
  %v21 = vunpack.c.l.s4 1983009808
  %v22 = vunpack.c.0.s8 %v21
  %v23 = vlaneseq
  %v24 = vshrl.u32 %v23, 7
  %v25 = vsub.s32 %v22, %v24
  %v26 = vrot.slane %v12, %v25
  %v27 = vcombine.high %v19, %v19
  %v28 = vcombine.high %v26, %v26
  %v29 = vcombine.high %v9, %v9
  %v31 = vunpack.c.l.s4 1983009808
  %v32 = vunpack.c.0.s8 %v31
  %v33 = vlaneseq
  %v34 = vshrl.u32 %v33, 7
  %v35 = vsub.s32 %v32, %v34
  %v36 = vrot.slane %v9, %v35
  %v38 = vunpack.c.l.s4 1983009808
  %v39 = vunpack.c.0.s8 %v38
  %v40 = vlaneseq
  %v41 = vshrl.u32 %v40, 7
  %v42 = vsub.s32 %v39, %v41
  %v43 = vrot.slane %v29, %v42
  %v44 = vcombine.high %v36, %v36
  %v45 = vcombine.high %v43, %v43
  %vm54 = vcmask 1041408
  %v55 = vsel %vm54, %v19, -inf
  %v56 = vrot.slane %v55, 4
  %v57 = vmax.f32 %v55, %v56
  %v58 = vrot.slane %v57, 2
  %v59 = vmax.f32 %v57, %v58
  %v60 = vrot.slane %v59, 1
  %v61 = vmax.f32 %v59, %v60
  %v62 = vsel %vm54, %v27, -inf
  %v63 = vrot.slane %v62, 4
  %v64 = vmax.f32 %v62, %v63
  %v65 = vrot.slane %v64, 2
  %v66 = vmax.f32 %v64, %v65
  %v67 = vrot.slane %v66, 1
  %v68 = vmax.f32 %v66, %v67
  %v69 = vsel %vm54, %v26, -inf
  %v70 = vrot.slane %v69, 4
  %v71 = vmax.f32 %v69, %v70
  %v72 = vrot.slane %v71, 2
  %v73 = vmax.f32 %v71, %v72
  %v74 = vrot.slane %v73, 1
  %v75 = vmax.f32 %v73, %v74
  %v76 = vsel %vm54, %v28, -inf
  %v77 = vrot.slane %v76, 4
  %v78 = vmax.f32 %v76, %v77
  %v79 = vrot.slane %v78, 2
  %v80 = vmax.f32 %v78, %v79
  %v81 = vrot.slane %v80, 1
  %v82 = vmax.f32 %v80, %v81
  %v83 = vsel %vm54, %v36, -inf
  %v84 = vrot.slane %v83, 4
  %v85 = vmax.f32 %v83, %v84
  %v86 = vrot.slane %v85, 2
  %v87 = vmax.f32 %v85, %v86
  %v88 = vrot.slane %v87, 1
  %v89 = vmax.f32 %v87, %v88
  %v90 = vsel %vm54, %v44, -inf
  %v91 = vrot.slane %v90, 4
  %v92 = vmax.f32 %v90, %v91
  %v93 = vrot.slane %v92, 2
  %v94 = vmax.f32 %v92, %v93
  %v95 = vrot.slane %v94, 1
  %v96 = vmax.f32 %v94, %v95
  %v97 = vsel %vm54, %v43, -inf
  %v98 = vrot.slane %v97, 4
  %v99 = vmax.f32 %v97, %v98
  %v100 = vrot.slane %v99, 2
  %v101 = vmax.f32 %v99, %v100
  %v102 = vrot.slane %v101, 1
  %v103 = vmax.f32 %v101, %v102
  %v104 = vsel %vm54, %v45, -inf
  %v105 = vrot.slane %v104, 4
  %v106 = vmax.f32 %v104, %v105
  %v107 = vrot.slane %v106, 2
  %v108 = vmax.f32 %v106, %v107
  %v109 = vrot.slane %v108, 1
  %v110 = vmax.f32 %v108, %v109
  %v119 = vcombine.low %v61, %v68
  %v120 = vcombine.low %v75, %v82
  %v122 = vunpack.c.l.s4 1983009808
  %v123 = vunpack.c.0.s8 %v122
  %v124 = vlaneseq
  %v125 = vshrl.u32 %v124, 7
  %v126 = vsub.s32 %v123, %v125
  %v127 = vrot.slane %v119, %v126
  %v129 = vunpack.c.l.s4 1983009808
  %v130 = vunpack.c.0.s8 %v129
  %v131 = vlaneseq
  %v132 = vshrl.u32 %v131, 7
  %v133 = vsub.s32 %v130, %v132
  %v134 = vrot.slane %v120, %v133
  %v135 = vcombine.low %v127, %v134
  %v136 = vcombine.low %v89, %v96
  %v137 = vcombine.low %v103, %v110
  %v139 = vunpack.c.l.s4 1983009808
  %v140 = vunpack.c.0.s8 %v139
  %v141 = vlaneseq
  %v142 = vshrl.u32 %v141, 7
  %v143 = vsub.s32 %v140, %v142
  %v144 = vrot.slane %v136, %v143
  %v146 = vunpack.c.l.s4 1983009808
  %v147 = vunpack.c.0.s8 %v146
  %v148 = vlaneseq
  %v149 = vshrl.u32 %v148, 7
  %v150 = vsub.s32 %v147, %v149
  %v151 = vrot.slane %v137, %v150
  %v152 = vcombine.low %v144, %v151
  %vm153 = vcmask 1044484
  %v154 = vsel %vm153, %v135, %v135
  %vm155 = vcmask 1046534
  %v156 = vsel %vm155, %v135, %v154
  %v157 = vrot.slane %v152, 7
  %vm158 = vcmask 1041409
  %v159 = vsel %vm158, %v157, %v156
  %vm160 = vcmask 1043459
  %v161 = vsel %vm160, %v157, %v159
  %vm162 = vcmask 1045509
  %v163 = vsel %vm162, %v157, %v161
  %vm164 = vcmask 1047559
  %v165 = vsel %vm164, %v157, %v163
  %167 = vst [vmem:[%s1] sm:$0xff] %v165
  // Predicated region
  $region6: #{i3dd_forward.14} parent=0 // pred_check
    _
  $region7: #{i3dd_forward.14} parent=0 // pred_check_branch
    %169 = sbr.rel (0) target = $region9
  $region8: #{i3dd_forward.14} parent=0 // pred_region
    _
  $region9: #{i3dd_forward.14} parent=0 // pred_fallthru
    _
  // Predicated region
  $region10: #{i3dd_forward.14} parent=0 // pred_check
    _
  $region11: #{i3dd_forward.14} parent=0 // pred_check_branch
    %171 = sbr.rel (0) target = $region13
  $region12: #{i3dd_forward.14} parent=0 // pred_region
    _
  $region13: #{i3dd_forward.14} parent=0 // pred_fallthru
    _

// kernel: i3dd_forward.15
$region0: #{i3dd_forward.15}
  #allocation0 [shape = 'u32[]', space=smem, size = 0x4, offset = 0x4, fixed_abs, tag = 'smem constant byte address 0x4 - core index']
  #allocation1 [shape = 'u32[144,128]{1,0:T(1,128)}', space=vmem, size = 0x12000, scoped, tag = 'internal scratch']
  %s0 = inlined_call_operand.vmem [shape: bf16[128,432], index: 0, kind: input, shape index: {}]
  %s1 = inlined_call_operand.vmem [shape: bf16[432,16], index: 1, kind: input, shape index: {}]
  %s2 = inlined_call_operand.vmem [shape: f32[1,16], index: 2, kind: input, shape index: {}]
  %s3 = inlined_call_operand.vmem [shape: f32[128,16], index: 3, kind: output, shape index: {}]
  %s4 = sld [smem:[#allocation0]]
  $region22: #{i3dd_forward.15} parent=0
    _
  %s6 = ssub.s32 1, %s4
  %s7 = scalar_select 0, %s6, %s4
  // Predicated region
  $region2: #{i3dd_forward.15} parent=0 // pred_check
    _
  $region3: #{i3dd_forward.15} parent=0 // pred_check_branch
    %9 = sbr.rel (0) target = $region5
  $region4: #{i3dd_forward.15} parent=0 // pred_region
    _
  $region5: #{i3dd_forward.15} parent=0 // pred_fallthru
    _
  // Predicated region
  $region6: #{i3dd_forward.15} parent=0 // pred_check
    _
  $region7: #{i3dd_forward.15} parent=0 // pred_check_branch
    %11 = sbr.rel (0) target = $region9
  $region8: #{i3dd_forward.15} parent=0 // pred_region
    _
  $region9: #{i3dd_forward.15} parent=0 // pred_fallthru
    _
  // Predicated region
  $region10: #{i3dd_forward.15} parent=0 // pred_check
    _
  $region11: #{i3dd_forward.15} parent=0 // pred_check_branch
    %13 = sbr.rel (0) target = $region13
  $region12: #{i3dd_forward.15} parent=0 // pred_region
    _
  $region13: #{i3dd_forward.15} parent=0 // pred_fallthru
    _
  %v15 = vld [vmem:[%s0] sm:$0xff]
  %v16 = vld [vmem:[%s0 + $0x8] sm:$0xff]
  %v17 = vld [vmem:[%s0 + $0x10] sm:$0xff]
  %v18 = vld [vmem:[%s0 + $0x18] sm:$0xff]
  %v19 = vld [vmem:[%s0 + $0x20] sm:$0xff]
  %v20 = vld [vmem:[%s0 + $0x28] sm:$0xff]
  %v21 = vld [vmem:[%s0 + $0x30] sm:$0xff]
  %v22 = vld [vmem:[%s0 + $0x38] sm:$0xff]
  %v23 = vld [vmem:[%s0 + $0x40] sm:$0xff]
  %v24 = vld [vmem:[%s0 + $0x48] sm:$0xff]
  %v25 = vld [vmem:[%s0 + $0x50] sm:$0xff]
  %v26 = vld [vmem:[%s0 + $0x58] sm:$0xff]
  %v27 = vld [vmem:[%s0 + $0x60] sm:$0xff]
  %v28 = vld [vmem:[%s0 + $0x68] sm:$0xff]
  %v29 = vld [vmem:[%s0 + $0x70] sm:$0xff]
  %v30 = vld [vmem:[%s0 + $0x78] sm:$0xff]
  %v31 = vld [vmem:[%s0 + $0x80] sm:$0xff]
  %v32 = vld [vmem:[%s0 + $0x88] sm:$0xff]
  %v33 = vld [vmem:[%s0 + $0x90] sm:$0xff]
  %v34 = vld [vmem:[%s0 + $0x98] sm:$0xff]
  %v35 = vld [vmem:[%s0 + $0xa0] sm:$0xff]
  %v36 = vld [vmem:[%s0 + $0xa8] sm:$0xff]
  %v37 = vld [vmem:[%s0 + $0xb0] sm:$0xff]
  %v38 = vld [vmem:[%s0 + $0xb8] sm:$0xff]
  %v39 = vld [vmem:[%s0 + $0xc0] sm:$0xff]
  %v40 = vld [vmem:[%s0 + $0xc8] sm:$0xff]
  %v41 = vld [vmem:[%s0 + $0xd0] sm:$0xff]
  %v42 = vld [vmem:[%s0 + $0xd8] sm:$0xff]
  %v43 = vld [vmem:[%s0 + $0xe0] sm:$0xff]
  %v44 = vld [vmem:[%s0 + $0xe8] sm:$0xff]
  %v45 = vld [vmem:[%s0 + $0xf0] sm:$0xff]
  %v46 = vld [vmem:[%s0 + $0xf8] sm:$0xff]
  %v47 = vld [vmem:[%s1] sm:$0xf]
  %v48 = vld [vmem:[%s1 + $0x4] sm:$0xf]
  %v49 = vld [vmem:[%s1 + $0x8] sm:$0xf]
  %v50 = vld [vmem:[%s1 + $0xc] sm:$0xf]
  %v51 = vld [vmem:[%s1 + $0x10] sm:$0xf]
  %v52 = vld [vmem:[%s1 + $0x14] sm:$0xf]
  %v53 = vld [vmem:[%s1 + $0x18] sm:$0xf]
  %v54 = vld [vmem:[%s1 + $0x1c] sm:$0xf]
  %v55 = vld [vmem:[%s1 + $0x20] sm:$0xf]
  %v56 = vld [vmem:[%s1 + $0x24] sm:$0xf]
  %v57 = vld [vmem:[%s1 + $0x28] sm:$0xf]
  %v58 = vld [vmem:[%s1 + $0x2c] sm:$0xf]
  %v59 = vld [vmem:[%s1 + $0x30] sm:$0xf]
  %v60 = vld [vmem:[%s1 + $0x34] sm:$0xf]
  %v61 = vld [vmem:[%s1 + $0x38] sm:$0xf]
  %v62 = vld [vmem:[%s1 + $0x3c] sm:$0xf]
  %v63 = vld [vmem:[%s1 + $0x40] sm:$0xf]
  %v64 = vld [vmem:[%s1 + $0x44] sm:$0xf]
  %v65 = vld [vmem:[%s1 + $0x48] sm:$0xf]
  %v66 = vld [vmem:[%s1 + $0x4c] sm:$0xf]
  %v67 = vld [vmem:[%s1 + $0x50] sm:$0xf]
  %v68 = vld [vmem:[%s1 + $0x54] sm:$0xf]
  %v69 = vld [vmem:[%s1 + $0x58] sm:$0xf]
  %v70 = vld [vmem:[%s1 + $0x5c] sm:$0xf]
  %v71 = vld [vmem:[%s1 + $0x60] sm:$0xf]
  %v72 = vld [vmem:[%s1 + $0x64] sm:$0xf]
  %v73 = vld [vmem:[%s1 + $0x68] sm:$0xf]
  %v74 = vld [vmem:[%s1 + $0x6c] sm:$0xf]
  %v75 = vld [vmem:[%s1 + $0x70] sm:$0xf]
  %v76 = vld [vmem:[%s1 + $0x74] sm:$0xf]
  %v77 = vld [vmem:[%s1 + $0x78] sm:$0xf]
  %v78 = vld [vmem:[%s1 + $0x7c] sm:$0xf]
  %v79 = vld [vmem:[%s1 + $0x80] sm:$0xf]
  %v80 = vld [vmem:[%s1 + $0x84] sm:$0xf]
  %v81 = vld [vmem:[%s1 + $0x88] sm:$0xf]
  %v82 = vld [vmem:[%s1 + $0x8c] sm:$0xf]
  %v83 = vld [vmem:[%s1 + $0x90] sm:$0xf]
  %v84 = vld [vmem:[%s1 + $0x94] sm:$0xf]
  %v85 = vld [vmem:[%s1 + $0x98] sm:$0xf]
  %v86 = vld [vmem:[%s1 + $0x9c] sm:$0xf]
  %v87 = vld [vmem:[%s1 + $0xa0] sm:$0xf]
  %v88 = vld [vmem:[%s1 + $0xa4] sm:$0xf]
  %v89 = vld [vmem:[%s1 + $0xa8] sm:$0xf]
  %v90 = vld [vmem:[%s1 + $0xac] sm:$0xf]
  %v91 = vld [vmem:[%s1 + $0xb0] sm:$0xf]
  %v92 = vld [vmem:[%s1 + $0xb4] sm:$0xf]
  %v93 = vld [vmem:[%s1 + $0xb8] sm:$0xf]
  %v94 = vld [vmem:[%s1 + $0xbc] sm:$0xf]
  %v95 = vld [vmem:[%s1 + $0xc0] sm:$0xf]
  %v96 = vld [vmem:[%s1 + $0xc4] sm:$0xf]
  %v97 = vld [vmem:[%s1 + $0xc8] sm:$0xf]
  %v98 = vld [vmem:[%s1 + $0xcc] sm:$0xf]
  %v99 = vld [vmem:[%s1 + $0xd0] sm:$0xf]
  %v100 = vld [vmem:[%s1 + $0xd4] sm:$0xf]
  %v101 = vld [vmem:[%s2] sm:$0x1]
  %v103 = vlaneseq
  %v104 = vshrl.u32 %v103, 7
  %v105 = vsub.s32 0, %v104
  %v106 = vrot.slane %v101, %v105
  %v140 = vunpack.c.l.b16 %v15
  %v141 = vunpack.c.h.b16 %v15
  %v142 = vunpack.c.l.b16 %v16
  %v143 = vunpack.c.h.b16 %v16
  %v144 = vunpack.c.l.b16 %v17
  %v145 = vunpack.c.h.b16 %v17
  %v146 = vunpack.c.l.b16 %v18
  %v147 = vunpack.c.h.b16 %v18
  %v148 = vunpack.c.l.b16 %v19
  %v149 = vunpack.c.h.b16 %v19
  %v150 = vunpack.c.l.b16 %v20
  %v151 = vunpack.c.h.b16 %v20
  %v152 = vunpack.c.l.b16 %v21
  %v153 = vunpack.c.h.b16 %v21
  %v154 = vunpack.c.l.b16 %v22
  %v155 = vunpack.c.h.b16 %v22
  %v156 = vunpack.c.l.b16 %v23
  %v157 = vunpack.c.h.b16 %v23
  %v158 = vunpack.c.l.b16 %v24
  %v159 = vunpack.c.h.b16 %v24
  %v160 = vunpack.c.l.b16 %v25
  %v161 = vunpack.c.h.b16 %v25
  %v162 = vunpack.c.l.b16 %v26
  %v163 = vunpack.c.h.b16 %v26
  %v164 = vunpack.c.l.b16 %v27
  %v165 = vunpack.c.h.b16 %v27
  %v166 = vunpack.c.l.b16 %v28
  %v167 = vunpack.c.h.b16 %v28
  %v168 = vunpack.c.l.b16 %v29
  %v169 = vunpack.c.h.b16 %v29
  %v170 = vunpack.c.l.b16 %v30
  %v171 = vunpack.c.h.b16 %v30
  %v172 = vunpack.c.l.b16 %v31
  %v173 = vunpack.c.h.b16 %v31
  %v174 = vunpack.c.l.b16 %v32
  %v175 = vunpack.c.h.b16 %v32
  %v176 = vunpack.c.l.b16 %v33
  %v177 = vunpack.c.h.b16 %v33
  %v178 = vunpack.c.l.b16 %v34
  %v179 = vunpack.c.h.b16 %v34
  %v180 = vunpack.c.l.b16 %v35
  %v181 = vunpack.c.h.b16 %v35
  %v182 = vunpack.c.l.b16 %v36
  %v183 = vunpack.c.h.b16 %v36
  %v184 = vunpack.c.l.b16 %v37
  %v185 = vunpack.c.h.b16 %v37
  %v186 = vunpack.c.l.b16 %v38
  %v187 = vunpack.c.h.b16 %v38
  %v188 = vunpack.c.l.b16 %v39
  %v189 = vunpack.c.h.b16 %v39
  %v190 = vunpack.c.l.b16 %v40
  %v191 = vunpack.c.h.b16 %v40
  %v192 = vunpack.c.l.b16 %v41
  %v193 = vunpack.c.h.b16 %v41
  %v194 = vunpack.c.l.b16 %v42
  %v195 = vunpack.c.h.b16 %v42
  %v196 = vunpack.c.l.b16 %v43
  %v197 = vunpack.c.h.b16 %v43
  %v198 = vunpack.c.l.b16 %v44
  %v199 = vunpack.c.h.b16 %v44
  %v200 = vunpack.c.l.b16 %v45
  %v201 = vunpack.c.h.b16 %v45
  %v202 = vunpack.c.l.b16 %v46
  %v203 = vunpack.c.h.b16 %v46
  %v204 = vpack.c.b16 %v144, %v140
  %v205 = vpack.c.b16 %v145, %v141
  %v206 = vpack.c.b16 %v146, %v142
  %v207 = vpack.c.b16 %v147, %v143
  %v208 = vpack.c.b16 %v152, %v148
  %v209 = vpack.c.b16 %v153, %v149
  %v210 = vpack.c.b16 %v154, %v150
  %v211 = vpack.c.b16 %v155, %v151
  %v212 = vpack.c.b16 %v160, %v156
  %v213 = vpack.c.b16 %v161, %v157
  %v214 = vpack.c.b16 %v162, %v158
  %v215 = vpack.c.b16 %v163, %v159
  %v216 = vpack.c.b16 %v168, %v164
  %v217 = vpack.c.b16 %v169, %v165
  %v218 = vpack.c.b16 %v170, %v166
  %v219 = vpack.c.b16 %v171, %v167
  %v220 = vpack.c.b16 %v176, %v172
  %v221 = vpack.c.b16 %v177, %v173
  %v222 = vpack.c.b16 %v178, %v174
  %v223 = vpack.c.b16 %v179, %v175
  %v224 = vpack.c.b16 %v184, %v180
  %v225 = vpack.c.b16 %v185, %v181
  %v226 = vpack.c.b16 %v186, %v182
  %v227 = vpack.c.b16 %v187, %v183
  %v228 = vpack.c.b16 %v192, %v188
  %v229 = vpack.c.b16 %v193, %v189
  %v230 = vpack.c.b16 %v194, %v190
  %v231 = vpack.c.b16 %v195, %v191
  %v232 = vpack.c.b16 %v200, %v196
  %v233 = vpack.c.b16 %v201, %v197
  %v234 = vpack.c.b16 %v202, %v198
  %v235 = vpack.c.b16 %v203, %v199
  %v314 = vunpack.c.l.b16 %v47
  %v315 = vunpack.c.l.b16 %v48
  %v316 = vunpack.c.l.b16 %v49
  %v317 = vunpack.c.l.b16 %v50
  %v318 = vunpack.c.l.b16 %v51
  %v319 = vunpack.c.l.b16 %v52
  %v320 = vunpack.c.l.b16 %v53
  %v321 = vunpack.c.l.b16 %v54
  %v322 = vunpack.c.l.b16 %v55
  %v323 = vunpack.c.l.b16 %v56
  %v324 = vunpack.c.l.b16 %v57
  %v325 = vunpack.c.l.b16 %v58
  %v326 = vunpack.c.l.b16 %v59
  %v327 = vunpack.c.l.b16 %v60
  %v328 = vunpack.c.l.b16 %v61
  %v329 = vunpack.c.l.b16 %v62
  %v330 = vunpack.c.l.b16 %v63
  %v331 = vunpack.c.l.b16 %v64
  %v332 = vunpack.c.l.b16 %v65
  %v333 = vunpack.c.l.b16 %v66
  %v334 = vunpack.c.l.b16 %v67
  %v335 = vunpack.c.l.b16 %v68
  %v336 = vunpack.c.l.b16 %v69
  %v337 = vunpack.c.l.b16 %v70
  %v338 = vunpack.c.l.b16 %v71
  %v339 = vunpack.c.l.b16 %v72
  %v340 = vunpack.c.l.b16 %v73
  %v341 = vunpack.c.l.b16 %v74
  %v342 = vunpack.c.l.b16 %v75
  %v343 = vunpack.c.l.b16 %v76
  %v344 = vunpack.c.l.b16 %v77
  %v345 = vunpack.c.l.b16 %v78
  %v346 = vunpack.c.l.b16 %v79
  %v347 = vunpack.c.l.b16 %v80
  %v348 = vunpack.c.l.b16 %v81
  %v349 = vunpack.c.l.b16 %v82
  %v350 = vunpack.c.l.b16 %v83
  %v351 = vunpack.c.l.b16 %v84
  %v352 = vunpack.c.l.b16 %v85
  %v353 = vunpack.c.l.b16 %v86
  %v354 = vunpack.c.l.b16 %v87
  %v355 = vunpack.c.l.b16 %v88
  %v356 = vunpack.c.l.b16 %v89
  %v357 = vunpack.c.l.b16 %v90
  %v358 = vunpack.c.l.b16 %v91
  %v359 = vunpack.c.l.b16 %v92
  %v360 = vunpack.c.l.b16 %v93
  %v361 = vunpack.c.l.b16 %v94
  %v362 = vunpack.c.l.b16 %v95
  %v363 = vunpack.c.l.b16 %v96
  %v364 = vunpack.c.l.b16 %v97
  %v365 = vunpack.c.l.b16 %v98
  %v366 = vunpack.c.l.b16 %v99
  %v367 = vunpack.c.l.b16 %v100
  %v368 = vpack.c.b16 %v315, %v314
  %v369 = vpack.c.b16 %v317, %v316
  %v370 = vpack.c.b16 %v319, %v318
  %v371 = vpack.c.b16 %v321, %v320
  %v372 = vpack.c.b16 %v323, %v322
  %v373 = vpack.c.b16 %v325, %v324
  %v374 = vpack.c.b16 %v327, %v326
  %v375 = vpack.c.b16 %v329, %v328
  %v376 = vpack.c.b16 %v331, %v330
  %v377 = vpack.c.b16 %v333, %v332
  %v378 = vpack.c.b16 %v335, %v334
  %v379 = vpack.c.b16 %v337, %v336
  %v380 = vpack.c.b16 %v339, %v338
  %v381 = vpack.c.b16 %v341, %v340
  %v382 = vpack.c.b16 %v343, %v342
  %v383 = vpack.c.b16 %v345, %v344
  %v384 = vpack.c.b16 %v347, %v346
  %v385 = vpack.c.b16 %v349, %v348
  %v386 = vpack.c.b16 %v351, %v350
  %v387 = vpack.c.b16 %v353, %v352
  %v388 = vpack.c.b16 %v355, %v354
  %v389 = vpack.c.b16 %v357, %v356
  %v390 = vpack.c.b16 %v359, %v358
  %v391 = vpack.c.b16 %v361, %v360
  %v392 = vpack.c.b16 %v363, %v362
  %v393 = vpack.c.b16 %v365, %v364
  %v394 = vpack.c.b16 %v367, %v366
  %vm422 = vcmask 392192
  %v424 = vsel %vm422, %v207, 0
  %v427 = vsel %vm422, %v211, 0
  %v430 = vsel %vm422, %v215, 0
  %v433 = vsel %vm422, %v219, 0
  %v436 = vsel %vm422, %v223, 0
  %v439 = vsel %vm422, %v227, 0
  %v442 = vsel %vm422, %v231, 0
  %v445 = vsel %vm422, %v235, 0
  %447 = vmatprep.subr.bf16.mxu0 0
  %448 = vmatpush1.bf16.msra.mxu0 %v368
  %449 = vmatprep.subr.bf16.mxu0 0
  %450 = vmatpush1.bf16.msra.mxu0 %v369
  %451 = vmatprep.subr.bf16.mxu0 0
  %452 = vmatpush1.bf16.msra.mxu0 %v370
  %453 = vmatprep.subr.bf16.mxu0 0
  %454 = vmatpush1.bf16.msra.mxu0 %v371
  %455 = vmatprep.subr.bf16.mxu0 0
  %456 = vmatpush1.bf16.msra.mxu0 %v372
  %457 = vmatprep.subr.bf16.mxu0 0
  %458 = vmatpush1.bf16.msra.mxu0 %v373
  %459 = vmatprep.subr.bf16.mxu0 0
  %460 = vmatpush1.bf16.msra.mxu0 %v374
  %461 = vmatprep.subr.bf16.mxu0 0
  %462 = vmatpush1.bf16.msra.mxu0 %v375
  %463 = vmatprep.subr.bf16.mxu0 0
  %464 = vmatpush1.bf16.msra.mxu0 %v376
  %465 = vmatprep.subr.bf16.mxu0 0
  %466 = vmatpush1.bf16.msra.mxu0 %v377
  %467 = vmatprep.subr.bf16.mxu0 0
  %468 = vmatpush1.bf16.msra.mxu0 %v378
  %469 = vmatprep.subr.bf16.mxu0 0
  %470 = vmatpush1.bf16.msra.mxu0 %v379
  %471 = vmatprep.subr.bf16.mxu0 0
  %472 = vmatpush1.bf16.msra.mxu0 %v380
  %473 = vmatprep.subr.bf16.mxu0 0
  %474 = vmatpush1.bf16.msra.mxu0 %v381
  %475 = vmatprep.subr.bf16.mxu0 0
  %476 = vmatpush1.bf16.msra.mxu0 %v382
  %477 = vmatprep.subr.bf16.mxu0 0
  %478 = vmatpush1.bf16.msra.mxu0 %v383
  %479 = vmatprep.mubr.bf16.mxu0 %v205
  %480 = vmatmul.mubr.bf16.gmra.mrb[0].mxu0 %v204
  %v481 = vpop.f32.mrb[0].mxu0
  %v482 = vadd.f32 %v106, %v481
  %v483 = vpop.f32.mrb[0].mxu0
  %v484 = vpop.f32.mrb[0].mxu0
  %v485 = vadd.f32 %v106, %v484
  %v486 = vpop.f32.mrb[0].mxu0
  %487 = vmatprep.mubr.bf16.mxu0 %v209
  %488 = vmatmul.mubr.bf16.gmra.mrb[0].mxu0 %v208
  %v489 = vpop.f32.mrb[0].mxu0
  %v490 = vadd.f32 %v106, %v489
  %v491 = vpop.f32.mrb[0].mxu0
  %v492 = vpop.f32.mrb[0].mxu0
  %v493 = vadd.f32 %v106, %v492
  %v494 = vpop.f32.mrb[0].mxu0
  %495 = vmatprep.mubr.bf16.mxu0 %v213
  %496 = vmatmul.mubr.bf16.gmra.mrb[0].mxu0 %v212
  %v497 = vpop.f32.mrb[0].mxu0
  %v498 = vadd.f32 %v106, %v497
  %v499 = vpop.f32.mrb[0].mxu0
  %v500 = vpop.f32.mrb[0].mxu0
  %v501 = vadd.f32 %v106, %v500
  %v502 = vpop.f32.mrb[0].mxu0
  %503 = vmatprep.mubr.bf16.mxu0 %v217
  %504 = vmatmul.mubr.bf16.gmra.mrb[0].mxu0 %v216
  %v505 = vpop.f32.mrb[0].mxu0
  %v506 = vadd.f32 %v106, %v505
  %v507 = vpop.f32.mrb[0].mxu0
  %v508 = vpop.f32.mrb[0].mxu0
  %v509 = vadd.f32 %v106, %v508
  %v510 = vpop.f32.mrb[0].mxu0
  %511 = vmatprep.mubr.bf16.mxu0 %v221
  %512 = vmatmul.mubr.bf16.gmra.mrb[0].mxu0 %v220
  %v513 = vpop.f32.mrb[0].mxu0
  %v514 = vadd.f32 %v106, %v513
  %v515 = vpop.f32.mrb[0].mxu0
  %v516 = vpop.f32.mrb[0].mxu0
  %v517 = vadd.f32 %v106, %v516
  %v518 = vpop.f32.mrb[0].mxu0
  %519 = vmatprep.mubr.bf16.mxu0 %v225
  %520 = vmatmul.mubr.bf16.gmra.mrb[0].mxu0 %v224
  %v521 = vpop.f32.mrb[0].mxu0
  %v522 = vadd.f32 %v106, %v521
  %v523 = vpop.f32.mrb[0].mxu0
  %v524 = vpop.f32.mrb[0].mxu0
  %v525 = vadd.f32 %v106, %v524
  %v526 = vpop.f32.mrb[0].mxu0
  %527 = vmatprep.mubr.bf16.mxu0 %v229
  %528 = vmatmul.mubr.bf16.gmra.mrb[0].mxu0 %v228
  %v529 = vpop.f32.mrb[0].mxu0
  %v530 = vadd.f32 %v106, %v529
  %v531 = vpop.f32.mrb[0].mxu0
  %v532 = vpop.f32.mrb[0].mxu0
  %v533 = vadd.f32 %v106, %v532
  %v534 = vpop.f32.mrb[0].mxu0
  %535 = vmatprep.mubr.bf16.mxu0 %v233
  %536 = vmatmul.mubr.bf16.gmra.mrb[0].mxu0 %v232
  %v537 = vpop.f32.mrb[0].mxu0
  %v538 = vadd.f32 %v106, %v537
  %v539 = vpop.f32.mrb[0].mxu0
  %v540 = vpop.f32.mrb[0].mxu0
  %v541 = vadd.f32 %v106, %v540
  %v542 = vpop.f32.mrb[0].mxu0
  %543 = vdwg.mxu0
  %544 = vmatprep.subr.bf16.mxu0 0
  %545 = vmatpush1.bf16.msra.mxu0 %v384
  %546 = vmatprep.subr.bf16.mxu0 0
  %547 = vmatpush1.bf16.msra.mxu0 %v385
  %548 = vmatprep.subr.bf16.mxu0 0
  %549 = vmatpush1.bf16.msra.mxu0 %v386
  %550 = vmatprep.subr.bf16.mxu0 0
  %551 = vmatpush1.bf16.msra.mxu0 %v387
  %552 = vmatprep.subr.bf16.mxu0 0
  %553 = vmatpush1.bf16.msra.mxu0 %v388
  %554 = vmatprep.subr.bf16.mxu0 0
  %555 = vmatpush1.bf16.msra.mxu0 %v389
  %556 = vmatprep.subr.bf16.mxu0 0
  %557 = vmatpush1.bf16.msra.mxu0 %v390
  %558 = vmatprep.subr.bf16.mxu0 0
  %559 = vmatpush1.bf16.msra.mxu0 %v391
  %560 = vmatprep.subr.bf16.mxu0 0
  %561 = vmatpush1.bf16.msra.mxu0 %v392
  %562 = vmatprep.subr.bf16.mxu0 0
  %563 = vmatpush1.bf16.msra.mxu0 %v393
  %564 = vmatprep.subr.bf16.mxu0 0
  %565 = vmatpush1.bf16.msra.mxu0 %v394
  %566 = vmatprep.subr.bf16.mxu0 0
  %567 = vmatpush1.bf16.msra.mxu0 0
  %568 = vmatprep.subr.bf16.mxu0 0
  %569 = vmatpush1.bf16.msra.mxu0 0
  %570 = vmatprep.subr.bf16.mxu0 0
  %571 = vmatpush1.bf16.msra.mxu0 0
  %572 = vmatprep.subr.bf16.mxu0 0
  %573 = vmatpush1.bf16.msra.mxu0 0
  %574 = vmatprep.subr.bf16.mxu0 0
  %575 = vmatpush1.bf16.msra.mxu0 0
  %576 = vmatprep.mubr.bf16.mxu0 %v424
  %577 = vmatmul.mubr.bf16.gmra.mrb[0].mxu0 %v206
  %v578 = vpop.f32.mrb[0].mxu0
  %v579 = vadd.f32 %v482, %v578
  %v580 = vpop.f32.mrb[0].mxu0
  %v581 = vpop.f32.mrb[0].mxu0
  %v582 = vadd.f32 %v485, %v581
  %v583 = vpop.f32.mrb[0].mxu0
  %584 = vmatprep.mubr.bf16.mxu0 %v427
  %585 = vmatmul.mubr.bf16.gmra.mrb[0].mxu0 %v210
  %v586 = vpop.f32.mrb[0].mxu0
  %v587 = vadd.f32 %v490, %v586
  %v588 = vpop.f32.mrb[0].mxu0
  %v589 = vpop.f32.mrb[0].mxu0
  %v590 = vadd.f32 %v493, %v589
  %v591 = vpop.f32.mrb[0].mxu0
  %592 = vmatprep.mubr.bf16.mxu0 %v430
  %593 = vmatmul.mubr.bf16.gmra.mrb[0].mxu0 %v214
  %v594 = vpop.f32.mrb[0].mxu0
  %v595 = vadd.f32 %v498, %v594
  %v596 = vpop.f32.mrb[0].mxu0
  %v597 = vpop.f32.mrb[0].mxu0
  %v598 = vadd.f32 %v501, %v597
  %v599 = vpop.f32.mrb[0].mxu0
  %600 = vmatprep.mubr.bf16.mxu0 %v433
  %601 = vmatmul.mubr.bf16.gmra.mrb[0].mxu0 %v218
  %v602 = vpop.f32.mrb[0].mxu0
  %v603 = vadd.f32 %v506, %v602
  %v604 = vpop.f32.mrb[0].mxu0
  %v605 = vpop.f32.mrb[0].mxu0
  %v606 = vadd.f32 %v509, %v605
  %v607 = vpop.f32.mrb[0].mxu0
  %608 = vmatprep.mubr.bf16.mxu0 %v436
  %609 = vmatmul.mubr.bf16.gmra.mrb[0].mxu0 %v222
  %v610 = vpop.f32.mrb[0].mxu0
  %v611 = vadd.f32 %v514, %v610
  %v612 = vpop.f32.mrb[0].mxu0
  %v613 = vpop.f32.mrb[0].mxu0
  %v614 = vadd.f32 %v517, %v613
  %v615 = vpop.f32.mrb[0].mxu0
  %616 = vmatprep.mubr.bf16.mxu0 %v439
  %617 = vmatmul.mubr.bf16.gmra.mrb[0].mxu0 %v226
  %v618 = vpop.f32.mrb[0].mxu0
  %v619 = vadd.f32 %v522, %v618
  %v620 = vpop.f32.mrb[0].mxu0
  %v621 = vpop.f32.mrb[0].mxu0
  %v622 = vadd.f32 %v525, %v621
  %v623 = vpop.f32.mrb[0].mxu0
  %624 = vmatprep.mubr.bf16.mxu0 %v442
  %625 = vmatmul.mubr.bf16.gmra.mrb[0].mxu0 %v230
  %v626 = vpop.f32.mrb[0].mxu0
  %v627 = vadd.f32 %v530, %v626
  %v628 = vpop.f32.mrb[0].mxu0
  %v629 = vpop.f32.mrb[0].mxu0
  %v630 = vadd.f32 %v533, %v629
  %v631 = vpop.f32.mrb[0].mxu0
  %632 = vmatprep.mubr.bf16.mxu0 %v445
  %633 = vmatmul.mubr.bf16.gmra.mrb[0].mxu0 %v234
  %v634 = vpop.f32.mrb[0].mxu0
  %v635 = vadd.f32 %v538, %v634
  %v636 = vpop.f32.mrb[0].mxu0
  %v637 = vpop.f32.mrb[0].mxu0
  %v638 = vadd.f32 %v541, %v637
  %v639 = vpop.f32.mrb[0].mxu0
  %640 = vdwg.mxu0
  %v641 = vmax.f32 %v579, 0.0
  %v642 = vmax.f32 %v582, 0.0
  %v643 = vmax.f32 %v587, 0.0
  %v644 = vmax.f32 %v590, 0.0
  %v645 = vmax.f32 %v595, 0.0
  %v646 = vmax.f32 %v598, 0.0
  %v647 = vmax.f32 %v603, 0.0
  %v648 = vmax.f32 %v606, 0.0
  %v649 = vmax.f32 %v611, 0.0
  %v650 = vmax.f32 %v614, 0.0
  %v651 = vmax.f32 %v619, 0.0
  %v652 = vmax.f32 %v622, 0.0
  %v653 = vmax.f32 %v627, 0.0
  %v654 = vmax.f32 %v630, 0.0
  %v655 = vmax.f32 %v635, 0.0
  %v656 = vmax.f32 %v638, 0.0
  %vm657 = vcmask 130048
  %658 = vst.msk [vmem:[%s3] sm:$0xff] %vm657, %v641
  %659 = vst.msk [vmem:[%s3 + $0x8] sm:$0xff] %vm657, %v642
  %660 = vst.msk [vmem:[%s3 + $0x10] sm:$0xff] %vm657, %v643
  %661 = vst.msk [vmem:[%s3 + $0x18] sm:$0xff] %vm657, %v644
  %662 = vst.msk [vmem:[%s3 + $0x20] sm:$0xff] %vm657, %v645
  %663 = vst.msk [vmem:[%s3 + $0x28] sm:$0xff] %vm657, %v646
  %664 = vst.msk [vmem:[%s3 + $0x30] sm:$0xff] %vm657, %v647
  %665 = vst.msk [vmem:[%s3 + $0x38] sm:$0xff] %vm657, %v648
  %666 = vst.msk [vmem:[%s3 + $0x40] sm:$0xff] %vm657, %v649
  %667 = vst.msk [vmem:[%s3 + $0x48] sm:$0xff] %vm657, %v650
  %668 = vst.msk [vmem:[%s3 + $0x50] sm:$0xff] %vm657, %v651
  %669 = vst.msk [vmem:[%s3 + $0x58] sm:$0xff] %vm657, %v652
  %670 = vst.msk [vmem:[%s3 + $0x60] sm:$0xff] %vm657, %v653
  %671 = vst.msk [vmem:[%s3 + $0x68] sm:$0xff] %vm657, %v654
  %672 = vst.msk [vmem:[%s3 + $0x70] sm:$0xff] %vm657, %v655
  %673 = vst.msk [vmem:[%s3 + $0x78] sm:$0xff] %vm657, %v656
  // Predicated region
  $region14: #{i3dd_forward.15} parent=0 // pred_check
    _
  $region15: #{i3dd_forward.15} parent=0 // pred_check_branch
    %675 = sbr.rel (0) target = $region17
  $region16: #{i3dd_forward.15} parent=0 // pred_region
    _
  $region17: #{i3dd_forward.15} parent=0 // pred_fallthru
    _
  // Predicated region
  $region18: #{i3dd_forward.15} parent=0 // pred_check
    _
  $region19: #{i3dd_forward.15} parent=0 // pred_check_branch
    %677 = sbr.rel (0) target = $region21
  $region20: #{i3dd_forward.15} parent=0 // pred_region
    _
  $region21: #{i3dd_forward.15} parent=0 // pred_fallthru
    _

// kernel: i3dd_forward.16
$region0: #{i3dd_forward.16}
  #allocation0 [shape = 'u32[]', space=smem, size = 0x4, offset = 0x4, fixed_abs, tag = 'smem constant byte address 0x4 - core index']
  #allocation1 [shape = 'u32[144,128]{1,0:T(1,128)}', space=vmem, size = 0x12000, scoped, tag = 'internal scratch']
  %s0 = inlined_call_operand.vmem [shape: bf16[512,216], index: 0, kind: input, shape index: {}]
  %s1 = inlined_call_operand.vmem [shape: bf16[216,8], index: 1, kind: input, shape index: {}]
  %s2 = inlined_call_operand.vmem [shape: f32[1,8], index: 2, kind: input, shape index: {}]
  %s3 = inlined_call_operand.vmem [shape: f32[512,8], index: 3, kind: output, shape index: {}]
  %s4 = sld [smem:[#allocation0]]
  $region45: #{i3dd_forward.16} parent=0
    _
  %s6 = ssub.s32 1, %s4
  %s7 = scalar_select 0, %s6, %s4
  loop: start=0, step=1, limit=4
  $region2: #{i3dd_forward.16} parent=0 // loop_pre_header
    _
  $region3: #{i3dd_forward.16} parent=0 // loop_header
    %s9 = sphi 0, %s13
    %p10 = scmp.ge.s32.totalorder %s9, 4
    %s19 = sphi 0, %s21
    %s22 = sphi 0, %s19
    %s23 = sphi 0, %s22
    %s39 = sphi 0, %s23
    %s43 = sphi 0, %s43
    %s45 = sphi 0, %s43
    %s46 = sphi 0, %s45
    %s60 = sphi 0, %s46
    %s64 = sphi 0, %s64
    %s66 = sphi 0, %s64
    %s67 = sphi 0, %s66
    %s81 = sphi 0, %s67
    %s87 = sphi 0, %s89
    %s90 = sphi 0, %s87
    %s91 = sphi 0, %s90
    %s107 = sphi 0, %s91
  $region4: #{i3dd_forward.16} parent=0 // loop_header_branch
    %12 = sbr.rel (%p10) target = $region8
  $region5: #{i3dd_forward.16} parent=0 // loop_body
    %s14 = ssub.s32 %s9, 1
    %s15 = ssub.s32 %s9, 2
    %s16 = sadd.s32 %s9, 1
    %s17 = ssub.s32 %s9, %s16
    %p18 = scmp.eq.s32.totalorder %s17, 0
    %s20 = sadd.s32 %s19, 1
    %s21 = scalar_select %p18, %s19, %s20
    %p24 = pneg %p18
    %p25 = scmp.eq.s32.totalorder %s9, 1
    %p26 = por %p24, %p25
    %p27 = scmp.ne.s32.totalorder %s19, %s22
    %p28 = scmp.eq.s32.totalorder %s9, 0
    %p29 = por %p27, %p28
    %p30 = scmp.ne.s32.totalorder %s19, %s22
    %p31 = scmp.eq.s32.totalorder %s14, 1
    %p32 = por %p30, %p31
    %p33 = scmp.ne.s32.totalorder %s22, %s23
    %p34 = scmp.eq.s32.totalorder %s14, 0
    %p35 = por %p33, %p34
    %p36 = scmp.ne.s32.totalorder %s22, %s23
    %p37 = scmp.eq.s32.totalorder %s15, 1
    %p38 = por %p36, %p37
    %p40 = scmp.ne.s32.totalorder %s23, %s39
    %p41 = scmp.eq.s32.totalorder %s15, 0
    %p42 = por %p40, %p41
    %s44 = sadd.s32 %s43, 1
    %p47 = scmp.eq.s32.totalorder %s9, 1
    %p48 = scmp.ne.s32.totalorder %s43, %s45
    %p49 = scmp.eq.s32.totalorder %s9, 0
    %p50 = por %p48, %p49
    %p51 = scmp.ne.s32.totalorder %s43, %s45
    %p52 = scmp.eq.s32.totalorder %s14, 1
    %p53 = por %p51, %p52
    %p54 = scmp.ne.s32.totalorder %s45, %s46
    %p55 = scmp.eq.s32.totalorder %s14, 0
    %p56 = por %p54, %p55
    %p57 = scmp.ne.s32.totalorder %s45, %s46
    %p58 = scmp.eq.s32.totalorder %s15, 1
    %p59 = por %p57, %p58
    %p61 = scmp.ne.s32.totalorder %s46, %s60
    %p62 = scmp.eq.s32.totalorder %s15, 0
    %p63 = por %p61, %p62
    %s65 = sadd.s32 %s64, 1
    %p68 = scmp.eq.s32.totalorder %s9, 1
    %p69 = scmp.ne.s32.totalorder %s64, %s66
    %p70 = scmp.eq.s32.totalorder %s9, 0
    %p71 = por %p69, %p70
    %p72 = scmp.ne.s32.totalorder %s64, %s66
    %p73 = scmp.eq.s32.totalorder %s14, 1
    %p74 = por %p72, %p73
    %p75 = scmp.ne.s32.totalorder %s66, %s67
    %p76 = scmp.eq.s32.totalorder %s14, 0
    %p77 = por %p75, %p76
    %p78 = scmp.ne.s32.totalorder %s66, %s67
    %p79 = scmp.eq.s32.totalorder %s15, 1
    %p80 = por %p78, %p79
    %p82 = scmp.ne.s32.totalorder %s67, %s81
    %p83 = scmp.eq.s32.totalorder %s15, 0
    %p84 = por %p82, %p83
    %s85 = ssub.s32 %s9, %s16
    %p86 = scmp.eq.s32.totalorder %s85, 0
    %s88 = sadd.s32 %s87, 1
    %s89 = scalar_select %p86, %s87, %s88
    %p92 = pneg %p86
    %p93 = scmp.eq.s32.totalorder %s9, 1
    %p94 = por %p92, %p93
    %p95 = scmp.ne.s32.totalorder %s87, %s90
    %p96 = scmp.eq.s32.totalorder %s9, 0
    %p97 = por %p95, %p96
    %p98 = scmp.ne.s32.totalorder %s87, %s90
    %p99 = scmp.eq.s32.totalorder %s14, 1
    %p100 = por %p98, %p99
    %p101 = scmp.ne.s32.totalorder %s90, %s91
    %p102 = scmp.eq.s32.totalorder %s14, 0
    %p103 = por %p101, %p102
    %p104 = scmp.ne.s32.totalorder %s90, %s91
    %p105 = scmp.eq.s32.totalorder %s15, 1
    %p106 = por %p104, %p105
    %p108 = scmp.ne.s32.totalorder %s91, %s107
    %p109 = scmp.eq.s32.totalorder %s15, 0
    %p110 = por %p108, %p109
    %p111 = scmp.le.s32.totalorder 1, %s9
    %p112 = scmp.lt.s32.totalorder %s9, 3
    %p113 = pnand %p111, %p112
    %p114 = pneg %p113
    // Predicated region
    $region9: #{i3dd_forward.16} parent=5 // pred_check
      _
    $region10: #{i3dd_forward.16} parent=5 // pred_check_branch
      %116 = sbr.rel (%p113) target = $region12
    $region11: #{i3dd_forward.16} parent=5 // pred_region
      %s117 = ssub.s32 %s9, 1
      // Predicated region
      $region13: #{i3dd_forward.16} parent=11 // pred_check
        %p118 = pneg %p56
      $region14: #{i3dd_forward.16} parent=11 // pred_check_branch
        %120 = sbr.rel (%p118) target = $region16
      $region15: #{i3dd_forward.16} parent=11 // pred_region
        _
      $region16: #{i3dd_forward.16} parent=11 // pred_fallthru
        _
      // Predicated region
      $region17: #{i3dd_forward.16} parent=11 // pred_check
        %p121 = pneg %p77
      $region18: #{i3dd_forward.16} parent=11 // pred_check_branch
        %123 = sbr.rel (%p121) target = $region20
      $region19: #{i3dd_forward.16} parent=11 // pred_region
        _
      $region20: #{i3dd_forward.16} parent=11 // pred_fallthru
        _
    $region12: #{i3dd_forward.16} parent=5 // pred_fallthru
      _
    %p124 = scmp.lt.s32.totalorder %s9, 2
    // Predicated region
    $region21: #{i3dd_forward.16} parent=5 // pred_check
      %p125 = pneg %p124
    $region22: #{i3dd_forward.16} parent=5 // pred_check_branch
      %127 = sbr.rel (%p125) target = $region24
    $region23: #{i3dd_forward.16} parent=5 // pred_region
      // Predicated region
      $region25: #{i3dd_forward.16} parent=23 // pred_check
        %p128 = pneg %p29
      $region26: #{i3dd_forward.16} parent=23 // pred_check_branch
        %130 = sbr.rel (%p128) target = $region28
      $region27: #{i3dd_forward.16} parent=23 // pred_region
        %s131 = smul.u32 32, %s9
        %p132 = scmp.lt.s32.totalorder %s131, 63
        %s133 = scalar_select %p132, %s131, 63
        %s134 = smul.addr %s133, 2
        %s135 = smul.addr %s134, 4
        %s136 = scalar_lea.vmem %s0, %s135
        %s137 = smul.u32 32, %s9
      $region28: #{i3dd_forward.16} parent=23 // pred_fallthru
        _
    $region24: #{i3dd_forward.16} parent=5 // pred_fallthru
      _
    %p138 = scmp.le.s32.totalorder 1, %s9
    %p139 = scmp.lt.s32.totalorder %s9, 3
    %p140 = pnand %p138, %p139
    %p141 = pneg %p140
    // Predicated region
    $region29: #{i3dd_forward.16} parent=5 // pred_check
      _
    $region30: #{i3dd_forward.16} parent=5 // pred_check_branch
      %143 = sbr.rel (%p140) target = $region32
    $region31: #{i3dd_forward.16} parent=5 // pred_region
      %s144 = ssub.s32 %s9, 1
      %s145 = smul.u32 32, %s14
      %p146 = scmp.lt.s32.totalorder %s145, 63
      %s147 = scalar_select %p146, %s145, 63
      %s148 = smul.addr %s147, 2
      %s149 = smul.addr %s148, 4
      %s150 = scalar_lea.vmem %s0, %s149
      %p151 = pneg %p35
      %p152 = pneg %p32
      %p153 = pneg %p56
      %p154 = pneg %p53
      %p155 = pneg %p77
      %p156 = pneg %p74
      %p157 = pneg %p103
      %p158 = pneg %p100
      %s159 = smul.u32 32, %s14
      %p160 = scmp.lt.s32.totalorder %s159, 63
      %s161 = scalar_select %p160, %s159, 63
      %s162 = smul.addr %s161, 8
      %s163 = scalar_lea.vmem %s3, %s162
      %s164 = smul.u32 32, %s14
      %p165 = scmp.lt.s32.totalorder %s164, 63
      %s166 = scalar_select %p165, %s164, 63
      %s167 = smul.addr %s166, 2
      %s168 = smul.addr %s167, 4
      %s169 = scalar_lea.vmem %s0, %s168
      %s170 = smul.u32 32, %s14
      %s171 = smul.u32 32, %s14
      %p172 = scmp.lt.s32.totalorder %s171, 63
      %s173 = scalar_select %p172, %s171, 63
      %s174 = smul.addr %s173, 8
      %s175 = scalar_lea.vmem %s3, %s174
      %s176 = smul.u32 32, %s14
      %v178 = vld [vmem:[%s169] sm:$0xff]
      %v179 = vld [vmem:[%s169 + $0x8] sm:$0xff]
      %v180 = vld [vmem:[%s169 + $0x10] sm:$0xff]
      %v181 = vld [vmem:[%s169 + $0x18] sm:$0xff]
      %v182 = vld [vmem:[%s169 + $0x20] sm:$0xff]
      %v183 = vld [vmem:[%s169 + $0x28] sm:$0xff]
      %v184 = vld [vmem:[%s169 + $0x30] sm:$0xff]
      %v185 = vld [vmem:[%s169 + $0x38] sm:$0xff]
      %v186 = vld [vmem:[%s169 + $0x40] sm:$0xff]
      %v187 = vld [vmem:[%s169 + $0x48] sm:$0xff]
      %v188 = vld [vmem:[%s169 + $0x50] sm:$0xff]
      %v189 = vld [vmem:[%s169 + $0x58] sm:$0xff]
      %v190 = vld [vmem:[%s169 + $0x60] sm:$0xff]
      %v191 = vld [vmem:[%s169 + $0x68] sm:$0xff]
      %v192 = vld [vmem:[%s169 + $0x70] sm:$0xff]
      %v193 = vld [vmem:[%s169 + $0x78] sm:$0xff]
      %v194 = vld [vmem:[%s169 + $0x80] sm:$0xff]
      %v195 = vld [vmem:[%s169 + $0x88] sm:$0xff]
      %v196 = vld [vmem:[%s169 + $0x90] sm:$0xff]
      %v197 = vld [vmem:[%s169 + $0x98] sm:$0xff]
      %v198 = vld [vmem:[%s169 + $0xa0] sm:$0xff]
      %v199 = vld [vmem:[%s169 + $0xa8] sm:$0xff]
      %v200 = vld [vmem:[%s169 + $0xb0] sm:$0xff]
      %v201 = vld [vmem:[%s169 + $0xb8] sm:$0xff]
      %v202 = vld [vmem:[%s169 + $0xc0] sm:$0xff]
      %v203 = vld [vmem:[%s169 + $0xc8] sm:$0xff]
      %v204 = vld [vmem:[%s169 + $0xd0] sm:$0xff]
      %v205 = vld [vmem:[%s169 + $0xd8] sm:$0xff]
      %v206 = vld [vmem:[%s169 + $0xe0] sm:$0xff]
      %v207 = vld [vmem:[%s169 + $0xe8] sm:$0xff]
      %v208 = vld [vmem:[%s169 + $0xf0] sm:$0xff]
      %v209 = vld [vmem:[%s169 + $0xf8] sm:$0xff]
      %v210 = vld [vmem:[%s1] sm:$0xf]
      %v211 = vld [vmem:[%s1 + $0x4] sm:$0xf]
      %v212 = vld [vmem:[%s1 + $0x8] sm:$0xf]
      %v213 = vld [vmem:[%s1 + $0xc] sm:$0xf]
      %v214 = vld [vmem:[%s1 + $0x10] sm:$0xf]
      %v215 = vld [vmem:[%s1 + $0x14] sm:$0xf]
      %v216 = vld [vmem:[%s1 + $0x18] sm:$0xf]
      %v217 = vld [vmem:[%s1 + $0x1c] sm:$0xf]
      %v218 = vld [vmem:[%s1 + $0x20] sm:$0xf]
      %v219 = vld [vmem:[%s1 + $0x24] sm:$0xf]
      %v220 = vld [vmem:[%s1 + $0x28] sm:$0xf]
      %v221 = vld [vmem:[%s1 + $0x2c] sm:$0xf]
      %v222 = vld [vmem:[%s1 + $0x30] sm:$0xf]
      %v223 = vld [vmem:[%s1 + $0x34] sm:$0xf]
      %v224 = vld [vmem:[%s1 + $0x38] sm:$0xf]
      %v225 = vld [vmem:[%s1 + $0x3c] sm:$0xf]
      %v226 = vld [vmem:[%s1 + $0x40] sm:$0xf]
      %v227 = vld [vmem:[%s1 + $0x44] sm:$0xf]
      %v228 = vld [vmem:[%s1 + $0x48] sm:$0xf]
      %v229 = vld [vmem:[%s1 + $0x4c] sm:$0xf]
      %v230 = vld [vmem:[%s1 + $0x50] sm:$0xf]
      %v231 = vld [vmem:[%s1 + $0x54] sm:$0xf]
      %v232 = vld [vmem:[%s1 + $0x58] sm:$0xf]
      %v233 = vld [vmem:[%s1 + $0x5c] sm:$0xf]
      %v234 = vld [vmem:[%s1 + $0x60] sm:$0xf]
      %v235 = vld [vmem:[%s1 + $0x64] sm:$0xf]
      %v236 = vld [vmem:[%s1 + $0x68] sm:$0xf]
      %v237 = vld [vmem:[%s2] sm:$0x1]
      %v239 = vlaneseq
      %v240 = vshrl.u32 %v239, 7
      %v241 = vsub.s32 0, %v240
      %v242 = vrot.slane %v237, %v241
      %v276 = vunpack.c.l.b16 %v178
      %v277 = vunpack.c.h.b16 %v178
      %v278 = vunpack.c.l.b16 %v179
      %v279 = vunpack.c.h.b16 %v179
      %v280 = vunpack.c.l.b16 %v180
      %v281 = vunpack.c.h.b16 %v180
      %v282 = vunpack.c.l.b16 %v181
      %v283 = vunpack.c.h.b16 %v181
      %v284 = vunpack.c.l.b16 %v182
      %v285 = vunpack.c.h.b16 %v182
      %v286 = vunpack.c.l.b16 %v183
      %v287 = vunpack.c.h.b16 %v183
      %v288 = vunpack.c.l.b16 %v184
      %v289 = vunpack.c.h.b16 %v184
      %v290 = vunpack.c.l.b16 %v185
      %v291 = vunpack.c.h.b16 %v185
      %v292 = vunpack.c.l.b16 %v186
      %v293 = vunpack.c.h.b16 %v186
      %v294 = vunpack.c.l.b16 %v187
      %v295 = vunpack.c.h.b16 %v187
      %v296 = vunpack.c.l.b16 %v188
      %v297 = vunpack.c.h.b16 %v188
      %v298 = vunpack.c.l.b16 %v189
      %v299 = vunpack.c.h.b16 %v189
      %v300 = vunpack.c.l.b16 %v190
      %v301 = vunpack.c.h.b16 %v190
      %v302 = vunpack.c.l.b16 %v191
      %v303 = vunpack.c.h.b16 %v191
      %v304 = vunpack.c.l.b16 %v192
      %v305 = vunpack.c.h.b16 %v192
      %v306 = vunpack.c.l.b16 %v193
      %v307 = vunpack.c.h.b16 %v193
      %v308 = vunpack.c.l.b16 %v194
      %v309 = vunpack.c.h.b16 %v194
      %v310 = vunpack.c.l.b16 %v195
      %v311 = vunpack.c.h.b16 %v195
      %v312 = vunpack.c.l.b16 %v196
      %v313 = vunpack.c.h.b16 %v196
      %v314 = vunpack.c.l.b16 %v197
      %v315 = vunpack.c.h.b16 %v197
      %v316 = vunpack.c.l.b16 %v198
      %v317 = vunpack.c.h.b16 %v198
      %v318 = vunpack.c.l.b16 %v199
      %v319 = vunpack.c.h.b16 %v199
      %v320 = vunpack.c.l.b16 %v200
      %v321 = vunpack.c.h.b16 %v200
      %v322 = vunpack.c.l.b16 %v201
      %v323 = vunpack.c.h.b16 %v201
      %v324 = vunpack.c.l.b16 %v202
      %v325 = vunpack.c.h.b16 %v202
      %v326 = vunpack.c.l.b16 %v203
      %v327 = vunpack.c.h.b16 %v203
      %v328 = vunpack.c.l.b16 %v204
      %v329 = vunpack.c.h.b16 %v204
      %v330 = vunpack.c.l.b16 %v205
      %v331 = vunpack.c.h.b16 %v205
      %v332 = vunpack.c.l.b16 %v206
      %v333 = vunpack.c.h.b16 %v206
      %v334 = vunpack.c.l.b16 %v207
      %v335 = vunpack.c.h.b16 %v207
      %v336 = vunpack.c.l.b16 %v208
      %v337 = vunpack.c.h.b16 %v208
      %v338 = vunpack.c.l.b16 %v209
      %v339 = vunpack.c.h.b16 %v209
      %v340 = vpack.c.b16 %v278, %v276
      %v341 = vpack.c.b16 %v279, %v277
      %v342 = vpack.c.b16 %v282, %v280
      %v343 = vpack.c.b16 %v283, %v281
      %v344 = vpack.c.b16 %v286, %v284
      %v345 = vpack.c.b16 %v287, %v285
      %v346 = vpack.c.b16 %v290, %v288
      %v347 = vpack.c.b16 %v291, %v289
      %v348 = vpack.c.b16 %v294, %v292
      %v349 = vpack.c.b16 %v295, %v293
      %v350 = vpack.c.b16 %v298, %v296
      %v351 = vpack.c.b16 %v299, %v297
      %v352 = vpack.c.b16 %v302, %v300
      %v353 = vpack.c.b16 %v303, %v301
      %v354 = vpack.c.b16 %v306, %v304
      %v355 = vpack.c.b16 %v307, %v305
      %v356 = vpack.c.b16 %v310, %v308
      %v357 = vpack.c.b16 %v311, %v309
      %v358 = vpack.c.b16 %v314, %v312
      %v359 = vpack.c.b16 %v315, %v313
      %v360 = vpack.c.b16 %v318, %v316
      %v361 = vpack.c.b16 %v319, %v317
      %v362 = vpack.c.b16 %v322, %v320
      %v363 = vpack.c.b16 %v323, %v321
      %v364 = vpack.c.b16 %v326, %v324
      %v365 = vpack.c.b16 %v327, %v325
      %v366 = vpack.c.b16 %v330, %v328
      %v367 = vpack.c.b16 %v331, %v329
      %v368 = vpack.c.b16 %v334, %v332
      %v369 = vpack.c.b16 %v335, %v333
      %v370 = vpack.c.b16 %v338, %v336
      %v371 = vpack.c.b16 %v339, %v337
      %v415 = vunpack.c.l.b16 %v210
      %v416 = vunpack.c.l.b16 %v211
      %v417 = vunpack.c.l.b16 %v212
      %v418 = vunpack.c.l.b16 %v213
      %v419 = vunpack.c.l.b16 %v214
      %v420 = vunpack.c.l.b16 %v215
      %v421 = vunpack.c.l.b16 %v216
      %v422 = vunpack.c.l.b16 %v217
      %v423 = vunpack.c.l.b16 %v218
      %v424 = vunpack.c.l.b16 %v219
      %v425 = vunpack.c.l.b16 %v220
      %v426 = vunpack.c.l.b16 %v221
      %v427 = vunpack.c.l.b16 %v222
      %v428 = vunpack.c.l.b16 %v223
      %v429 = vunpack.c.l.b16 %v224
      %v430 = vunpack.c.l.b16 %v225
      %v431 = vunpack.c.l.b16 %v226
      %v432 = vunpack.c.l.b16 %v227
      %v433 = vunpack.c.l.b16 %v228
      %v434 = vunpack.c.l.b16 %v229
      %v435 = vunpack.c.l.b16 %v230
      %v436 = vunpack.c.l.b16 %v231
      %v437 = vunpack.c.l.b16 %v232
      %v438 = vunpack.c.l.b16 %v233
      %v439 = vunpack.c.l.b16 %v234
      %v440 = vunpack.c.l.b16 %v235
      %v441 = vunpack.c.l.b16 %v236
      %v442 = vpack.c.b16 %v416, %v415
      %v443 = vpack.c.b16 %v418, %v417
      %v444 = vpack.c.b16 %v420, %v419
      %v445 = vpack.c.b16 %v422, %v421
      %v446 = vpack.c.b16 %v424, %v423
      %v447 = vpack.c.b16 %v426, %v425
      %v448 = vpack.c.b16 %v428, %v427
      %v449 = vpack.c.b16 %v430, %v429
      %v450 = vpack.c.b16 %v432, %v431
      %v451 = vpack.c.b16 %v434, %v433
      %v452 = vpack.c.b16 %v436, %v435
      %v453 = vpack.c.b16 %v438, %v437
      %v454 = vpack.c.b16 %v440, %v439
      %v455 = vpack.c.b16 %v441, %v441
      %vm469 = vcmask 719872
      %v471 = vsel %vm469, %v341, 0
      %v474 = vsel %vm469, %v343, 0
      %v477 = vsel %vm469, %v345, 0
      %v480 = vsel %vm469, %v347, 0
      %v483 = vsel %vm469, %v349, 0
      %v486 = vsel %vm469, %v351, 0
      %v489 = vsel %vm469, %v353, 0
      %v492 = vsel %vm469, %v355, 0
      %v495 = vsel %vm469, %v357, 0
      %v498 = vsel %vm469, %v359, 0
      %v501 = vsel %vm469, %v361, 0
      %v504 = vsel %vm469, %v363, 0
      %v507 = vsel %vm469, %v365, 0
      %v510 = vsel %vm469, %v367, 0
      %v513 = vsel %vm469, %v369, 0
      %v516 = vsel %vm469, %v371, 0
      %vm518 = vcmask 1043456
      %v520 = vsel %vm518, %v455, 0
      %522 = vmatprep.subr.bf16.mxu0 0
      %523 = vmatpush1.bf16.msra.mxu0 %v442
      %524 = vmatprep.subr.bf16.mxu0 0
      %525 = vmatpush1.bf16.msra.mxu0 %v443
      %526 = vmatprep.subr.bf16.mxu0 0
      %527 = vmatpush1.bf16.msra.mxu0 %v444
      %528 = vmatprep.subr.bf16.mxu0 0
      %529 = vmatpush1.bf16.msra.mxu0 %v445
      %530 = vmatprep.subr.bf16.mxu0 0
      %531 = vmatpush1.bf16.msra.mxu0 %v446
      %532 = vmatprep.subr.bf16.mxu0 0
      %533 = vmatpush1.bf16.msra.mxu0 %v447
      %534 = vmatprep.subr.bf16.mxu0 0
      %535 = vmatpush1.bf16.msra.mxu0 %v448
      %536 = vmatprep.subr.bf16.mxu0 0
      %537 = vmatpush1.bf16.msra.mxu0 %v449
      %538 = vmatprep.subr.bf16.mxu0 0
      %539 = vmatpush1.bf16.msra.mxu0 %v450
      %540 = vmatprep.subr.bf16.mxu0 0
      %541 = vmatpush1.bf16.msra.mxu0 %v451
      %542 = vmatprep.subr.bf16.mxu0 0
      %543 = vmatpush1.bf16.msra.mxu0 %v452
      %544 = vmatprep.subr.bf16.mxu0 0
      %545 = vmatpush1.bf16.msra.mxu0 %v453
      %546 = vmatprep.subr.bf16.mxu0 0
      %547 = vmatpush1.bf16.msra.mxu0 %v454
      %548 = vmatprep.subr.bf16.mxu0 0
      %549 = vmatpush1.bf16.msra.mxu0 %v520
      %550 = vmatprep.subr.bf16.mxu0 0
      %551 = vmatpush1.bf16.msra.mxu0 0
      %552 = vmatprep.subr.bf16.mxu0 0
      %553 = vmatpush1.bf16.msra.mxu0 0
      %554 = vmatprep.mubr.bf16.mxu0 %v471
      %555 = vmatmul.mubr.bf16.gmra.mrb[0].mxu0 %v340
      %v556 = vpop.f32.mrb[0].mxu0
      %v557 = vadd.f32 %v242, %v556
      %v558 = vpop.f32.mrb[0].mxu0
      %v559 = vpop.f32.mrb[0].mxu0
      %v560 = vadd.f32 %v242, %v559
      %v561 = vpop.f32.mrb[0].mxu0
      %562 = vmatprep.mubr.bf16.mxu0 %v474
      %563 = vmatmul.mubr.bf16.gmra.mrb[0].mxu0 %v342
      %v564 = vpop.f32.mrb[0].mxu0
      %v565 = vadd.f32 %v242, %v564
      %v566 = vpop.f32.mrb[0].mxu0
      %v567 = vpop.f32.mrb[0].mxu0
      %v568 = vadd.f32 %v242, %v567
      %v569 = vpop.f32.mrb[0].mxu0
      %570 = vmatprep.mubr.bf16.mxu0 %v477
      %571 = vmatmul.mubr.bf16.gmra.mrb[0].mxu0 %v344
      %v572 = vpop.f32.mrb[0].mxu0
      %v573 = vadd.f32 %v242, %v572
      %v574 = vpop.f32.mrb[0].mxu0
      %v575 = vpop.f32.mrb[0].mxu0
      %v576 = vadd.f32 %v242, %v575
      %v577 = vpop.f32.mrb[0].mxu0
      %578 = vmatprep.mubr.bf16.mxu0 %v480
      %579 = vmatmul.mubr.bf16.gmra.mrb[0].mxu0 %v346
      %v580 = vpop.f32.mrb[0].mxu0
      %v581 = vadd.f32 %v242, %v580
      %v582 = vpop.f32.mrb[0].mxu0
      %v583 = vpop.f32.mrb[0].mxu0
      %v584 = vadd.f32 %v242, %v583
      %v585 = vpop.f32.mrb[0].mxu0
      %586 = vmatprep.mubr.bf16.mxu0 %v483
      %587 = vmatmul.mubr.bf16.gmra.mrb[0].mxu0 %v348
      %v588 = vpop.f32.mrb[0].mxu0
      %v589 = vadd.f32 %v242, %v588
      %v590 = vpop.f32.mrb[0].mxu0
      %v591 = vpop.f32.mrb[0].mxu0
      %v592 = vadd.f32 %v242, %v591
      %v593 = vpop.f32.mrb[0].mxu0
      %594 = vmatprep.mubr.bf16.mxu0 %v486
      %595 = vmatmul.mubr.bf16.gmra.mrb[0].mxu0 %v350
      %v596 = vpop.f32.mrb[0].mxu0
      %v597 = vadd.f32 %v242, %v596
      %v598 = vpop.f32.mrb[0].mxu0
      %v599 = vpop.f32.mrb[0].mxu0
      %v600 = vadd.f32 %v242, %v599
      %v601 = vpop.f32.mrb[0].mxu0
      %602 = vmatprep.mubr.bf16.mxu0 %v489
      %603 = vmatmul.mubr.bf16.gmra.mrb[0].mxu0 %v352
      %v604 = vpop.f32.mrb[0].mxu0
      %v605 = vadd.f32 %v242, %v604
      %v606 = vpop.f32.mrb[0].mxu0
      %v607 = vpop.f32.mrb[0].mxu0
      %v608 = vadd.f32 %v242, %v607
      %v609 = vpop.f32.mrb[0].mxu0
      %610 = vmatprep.mubr.bf16.mxu0 %v492
      %611 = vmatmul.mubr.bf16.gmra.mrb[0].mxu0 %v354
      %v612 = vpop.f32.mrb[0].mxu0
      %v613 = vadd.f32 %v242, %v612
      %v614 = vpop.f32.mrb[0].mxu0
      %v615 = vpop.f32.mrb[0].mxu0
      %v616 = vadd.f32 %v242, %v615
      %v617 = vpop.f32.mrb[0].mxu0
      %618 = vmatprep.mubr.bf16.mxu0 %v495
      %619 = vmatmul.mubr.bf16.gmra.mrb[0].mxu0 %v356
      %v620 = vpop.f32.mrb[0].mxu0
      %v621 = vadd.f32 %v242, %v620
      %v622 = vpop.f32.mrb[0].mxu0
      %v623 = vpop.f32.mrb[0].mxu0
      %v624 = vadd.f32 %v242, %v623
      %v625 = vpop.f32.mrb[0].mxu0
      %626 = vmatprep.mubr.bf16.mxu0 %v498
      %627 = vmatmul.mubr.bf16.gmra.mrb[0].mxu0 %v358
      %v628 = vpop.f32.mrb[0].mxu0
      %v629 = vadd.f32 %v242, %v628
      %v630 = vpop.f32.mrb[0].mxu0
      %v631 = vpop.f32.mrb[0].mxu0
      %v632 = vadd.f32 %v242, %v631
      %v633 = vpop.f32.mrb[0].mxu0
      %634 = vmatprep.mubr.bf16.mxu0 %v501
      %635 = vmatmul.mubr.bf16.gmra.mrb[0].mxu0 %v360
      %v636 = vpop.f32.mrb[0].mxu0
      %v637 = vadd.f32 %v242, %v636
      %v638 = vpop.f32.mrb[0].mxu0
      %v639 = vpop.f32.mrb[0].mxu0
      %v640 = vadd.f32 %v242, %v639
      %v641 = vpop.f32.mrb[0].mxu0
      %642 = vmatprep.mubr.bf16.mxu0 %v504
      %643 = vmatmul.mubr.bf16.gmra.mrb[0].mxu0 %v362
      %v644 = vpop.f32.mrb[0].mxu0
      %v645 = vadd.f32 %v242, %v644
      %v646 = vpop.f32.mrb[0].mxu0
      %v647 = vpop.f32.mrb[0].mxu0
      %v648 = vadd.f32 %v242, %v647
      %v649 = vpop.f32.mrb[0].mxu0
      %650 = vmatprep.mubr.bf16.mxu0 %v507
      %651 = vmatmul.mubr.bf16.gmra.mrb[0].mxu0 %v364
      %v652 = vpop.f32.mrb[0].mxu0
      %v653 = vadd.f32 %v242, %v652
      %v654 = vpop.f32.mrb[0].mxu0
      %v655 = vpop.f32.mrb[0].mxu0
      %v656 = vadd.f32 %v242, %v655
      %v657 = vpop.f32.mrb[0].mxu0
      %658 = vmatprep.mubr.bf16.mxu0 %v510
      %659 = vmatmul.mubr.bf16.gmra.mrb[0].mxu0 %v366
      %v660 = vpop.f32.mrb[0].mxu0
      %v661 = vadd.f32 %v242, %v660
      %v662 = vpop.f32.mrb[0].mxu0
      %v663 = vpop.f32.mrb[0].mxu0
      %v664 = vadd.f32 %v242, %v663
      %v665 = vpop.f32.mrb[0].mxu0
      %666 = vmatprep.mubr.bf16.mxu0 %v513
      %667 = vmatmul.mubr.bf16.gmra.mrb[0].mxu0 %v368
      %v668 = vpop.f32.mrb[0].mxu0
      %v669 = vadd.f32 %v242, %v668
      %v670 = vpop.f32.mrb[0].mxu0
      %v671 = vpop.f32.mrb[0].mxu0
      %v672 = vadd.f32 %v242, %v671
      %v673 = vpop.f32.mrb[0].mxu0
      %674 = vmatprep.mubr.bf16.mxu0 %v516
      %675 = vmatmul.mubr.bf16.gmra.mrb[0].mxu0 %v370
      %v676 = vpop.f32.mrb[0].mxu0
      %v677 = vadd.f32 %v242, %v676
      %v678 = vpop.f32.mrb[0].mxu0
      %v679 = vpop.f32.mrb[0].mxu0
      %v680 = vadd.f32 %v242, %v679
      %v681 = vpop.f32.mrb[0].mxu0
      %682 = vdwg.mxu0
      %v683 = vmax.f32 %v557, 0.0
      %v684 = vmax.f32 %v560, 0.0
      %v685 = vmax.f32 %v565, 0.0
      %v686 = vmax.f32 %v568, 0.0
      %v687 = vmax.f32 %v573, 0.0
      %v688 = vmax.f32 %v576, 0.0
      %v689 = vmax.f32 %v581, 0.0
      %v690 = vmax.f32 %v584, 0.0
      %v691 = vmax.f32 %v589, 0.0
      %v692 = vmax.f32 %v592, 0.0
      %v693 = vmax.f32 %v597, 0.0
      %v694 = vmax.f32 %v600, 0.0
      %v695 = vmax.f32 %v605, 0.0
      %v696 = vmax.f32 %v608, 0.0
      %v697 = vmax.f32 %v613, 0.0
      %v698 = vmax.f32 %v616, 0.0
      %v699 = vmax.f32 %v621, 0.0
      %v700 = vmax.f32 %v624, 0.0
      %v701 = vmax.f32 %v629, 0.0
      %v702 = vmax.f32 %v632, 0.0
      %v703 = vmax.f32 %v637, 0.0
      %v704 = vmax.f32 %v640, 0.0
      %v705 = vmax.f32 %v645, 0.0
      %v706 = vmax.f32 %v648, 0.0
      %v707 = vmax.f32 %v653, 0.0
      %v708 = vmax.f32 %v656, 0.0
      %v709 = vmax.f32 %v661, 0.0
      %v710 = vmax.f32 %v664, 0.0
      %v711 = vmax.f32 %v669, 0.0
      %v712 = vmax.f32 %v672, 0.0
      %v713 = vmax.f32 %v677, 0.0
      %v714 = vmax.f32 %v680, 0.0
      %vm715 = vcmask 64512
      %716 = vst.msk [vmem:[%s175] sm:$0xff] %vm715, %v683
      %717 = vst.msk [vmem:[%s175 + $0x8] sm:$0xff] %vm715, %v684
      %718 = vst.msk [vmem:[%s175 + $0x10] sm:$0xff] %vm715, %v685
      %719 = vst.msk [vmem:[%s175 + $0x18] sm:$0xff] %vm715, %v686
      %720 = vst.msk [vmem:[%s175 + $0x20] sm:$0xff] %vm715, %v687
      %721 = vst.msk [vmem:[%s175 + $0x28] sm:$0xff] %vm715, %v688
      %722 = vst.msk [vmem:[%s175 + $0x30] sm:$0xff] %vm715, %v689
      %723 = vst.msk [vmem:[%s175 + $0x38] sm:$0xff] %vm715, %v690
      %724 = vst.msk [vmem:[%s175 + $0x40] sm:$0xff] %vm715, %v691
      %725 = vst.msk [vmem:[%s175 + $0x48] sm:$0xff] %vm715, %v692
      %726 = vst.msk [vmem:[%s175 + $0x50] sm:$0xff] %vm715, %v693
      %727 = vst.msk [vmem:[%s175 + $0x58] sm:$0xff] %vm715, %v694
      %728 = vst.msk [vmem:[%s175 + $0x60] sm:$0xff] %vm715, %v695
      %729 = vst.msk [vmem:[%s175 + $0x68] sm:$0xff] %vm715, %v696
      %730 = vst.msk [vmem:[%s175 + $0x70] sm:$0xff] %vm715, %v697
      %731 = vst.msk [vmem:[%s175 + $0x78] sm:$0xff] %vm715, %v698
      %732 = vst.msk [vmem:[%s175 + $0x80] sm:$0xff] %vm715, %v699
      %733 = vst.msk [vmem:[%s175 + $0x88] sm:$0xff] %vm715, %v700
      %734 = vst.msk [vmem:[%s175 + $0x90] sm:$0xff] %vm715, %v701
      %735 = vst.msk [vmem:[%s175 + $0x98] sm:$0xff] %vm715, %v702
      %736 = vst.msk [vmem:[%s175 + $0xa0] sm:$0xff] %vm715, %v703
      %737 = vst.msk [vmem:[%s175 + $0xa8] sm:$0xff] %vm715, %v704
      %738 = vst.msk [vmem:[%s175 + $0xb0] sm:$0xff] %vm715, %v705
      %739 = vst.msk [vmem:[%s175 + $0xb8] sm:$0xff] %vm715, %v706
      %740 = vst.msk [vmem:[%s175 + $0xc0] sm:$0xff] %vm715, %v707
      %741 = vst.msk [vmem:[%s175 + $0xc8] sm:$0xff] %vm715, %v708
      %742 = vst.msk [vmem:[%s175 + $0xd0] sm:$0xff] %vm715, %v709
      %743 = vst.msk [vmem:[%s175 + $0xd8] sm:$0xff] %vm715, %v710
      %744 = vst.msk [vmem:[%s175 + $0xe0] sm:$0xff] %vm715, %v711
      %745 = vst.msk [vmem:[%s175 + $0xe8] sm:$0xff] %vm715, %v712
      %746 = vst.msk [vmem:[%s175 + $0xf0] sm:$0xff] %vm715, %v713
      %747 = vst.msk [vmem:[%s175 + $0xf8] sm:$0xff] %vm715, %v714
      %s748 = smul.u32 32, %s14
      %p749 = scmp.lt.s32.totalorder %s748, 63
      %s750 = scalar_select %p749, %s748, 63
      %s751 = smul.addr %s750, 8
      %s752 = scalar_lea.vmem %s3, %s751
      // Predicated region
      $region33: #{i3dd_forward.16} parent=31 // pred_check
        %p753 = pneg %p100
      $region34: #{i3dd_forward.16} parent=31 // pred_check_branch
        %755 = sbr.rel (%p753) target = $region36
      $region35: #{i3dd_forward.16} parent=31 // pred_region
        %s756 = smul.u32 32, %s14
      $region36: #{i3dd_forward.16} parent=31 // pred_fallthru
        _
    $region32: #{i3dd_forward.16} parent=5 // pred_fallthru
      _
    %p757 = scmp.le.s32.totalorder 2, %s9
    // Predicated region
    $region37: #{i3dd_forward.16} parent=5 // pred_check
      %p758 = pneg %p757
    $region38: #{i3dd_forward.16} parent=5 // pred_check_branch
      %760 = sbr.rel (%p758) target = $region40
    $region39: #{i3dd_forward.16} parent=5 // pred_region
      %s761 = ssub.s32 %s9, 2
      // Predicated region
      $region41: #{i3dd_forward.16} parent=39 // pred_check
        %p762 = pneg %p106
      $region42: #{i3dd_forward.16} parent=39 // pred_check_branch
        %764 = sbr.rel (%p762) target = $region44
      $region43: #{i3dd_forward.16} parent=39 // pred_region
        %s765 = smul.u32 32, %s15
        %p766 = scmp.lt.s32.totalorder %s765, 63
        %s767 = scalar_select %p766, %s765, 63
        %s768 = smul.addr %s767, 8
        %s769 = scalar_lea.vmem %s3, %s768
      $region44: #{i3dd_forward.16} parent=39 // pred_fallthru
        _
    $region40: #{i3dd_forward.16} parent=5 // pred_fallthru
      _
  $region6: #{i3dd_forward.16} parent=0 // loop_footer
    %s13 = sadd.s32 1, %s9
  $region7: #{i3dd_forward.16} parent=0 // loop_footer_branch
    %8 = sbr.rel target = $region3
  $region8: #{i3dd_forward.16} parent=0 // loop_exit
    _

// kernel: i3dd_forward.17
$region0: #{i3dd_forward.17}
  #allocation0 [shape = 'u32[]', space=smem, size = 0x4, offset = 0x4, fixed_abs, tag = 'smem constant byte address 0x4 - core index']
  #allocation1 [shape = 'u32[144,128]{1,0:T(1,128)}', space=vmem, size = 0x12000, scoped, tag = 'internal scratch']
  #allocation2 [shape = 'f32[1,1]{1,0:T(1,128)S(1)}', space=vmem, size = 0x200, scoped, tag = 'scoped memory for i3dd_forward.17']
  %s0 = inlined_call_operand.vmem [shape: f32[512,8], index: 0, kind: input, shape index: {}]
  %s1 = inlined_call_operand.vmem [shape: f32[1,8], index: 1, kind: input, shape index: {}]
  %s2 = inlined_call_operand.<no memory space> [shape: f32[1,1], index: 2, kind: input, shape index: {}]
  %s3 = inlined_call_operand.vmem [shape: f32[512,1], index: 3, kind: output, shape index: {}]
  %s4 = sld [smem:[#allocation0]]
  $region45: #{i3dd_forward.17} parent=0
    _
  %s6 = ssub.s32 1, %s4
  %s7 = scalar_select 0, %s6, %s4
  %v8 = vstv %s2
  %9 = vst [vmem:[#allocation2] sm:$0x1] %v8
  loop: start=0, step=1, limit=4
  $region2: #{i3dd_forward.17} parent=0 // loop_pre_header
    _
  $region3: #{i3dd_forward.17} parent=0 // loop_header
    %s11 = sphi 0, %s15
    %p12 = scmp.ge.s32.totalorder %s11, 4
    %s21 = sphi 0, %s23
    %s24 = sphi 0, %s21
    %s25 = sphi 0, %s24
    %s41 = sphi 0, %s25
    %s45 = sphi 0, %s45
    %s47 = sphi 0, %s45
    %s48 = sphi 0, %s47
    %s62 = sphi 0, %s48
    %s66 = sphi 0, %s66
    %s68 = sphi 0, %s66
    %s69 = sphi 0, %s68
    %s83 = sphi 0, %s69
    %s89 = sphi 0, %s91
    %s92 = sphi 0, %s89
    %s93 = sphi 0, %s92
    %s109 = sphi 0, %s93
  $region4: #{i3dd_forward.17} parent=0 // loop_header_branch
    %14 = sbr.rel (%p12) target = $region8
  $region5: #{i3dd_forward.17} parent=0 // loop_body
    %s16 = ssub.s32 %s11, 1
    %s17 = ssub.s32 %s11, 2
    %s18 = sadd.s32 %s11, 1
    %s19 = ssub.s32 %s11, %s18
    %p20 = scmp.eq.s32.totalorder %s19, 0
    %s22 = sadd.s32 %s21, 1
    %s23 = scalar_select %p20, %s21, %s22
    %p26 = pneg %p20
    %p27 = scmp.eq.s32.totalorder %s11, 1
    %p28 = por %p26, %p27
    %p29 = scmp.ne.s32.totalorder %s21, %s24
    %p30 = scmp.eq.s32.totalorder %s11, 0
    %p31 = por %p29, %p30
    %p32 = scmp.ne.s32.totalorder %s21, %s24
    %p33 = scmp.eq.s32.totalorder %s16, 1
    %p34 = por %p32, %p33
    %p35 = scmp.ne.s32.totalorder %s24, %s25
    %p36 = scmp.eq.s32.totalorder %s16, 0
    %p37 = por %p35, %p36
    %p38 = scmp.ne.s32.totalorder %s24, %s25
    %p39 = scmp.eq.s32.totalorder %s17, 1
    %p40 = por %p38, %p39
    %p42 = scmp.ne.s32.totalorder %s25, %s41
    %p43 = scmp.eq.s32.totalorder %s17, 0
    %p44 = por %p42, %p43
    %s46 = sadd.s32 %s45, 1
    %p49 = scmp.eq.s32.totalorder %s11, 1
    %p50 = scmp.ne.s32.totalorder %s45, %s47
    %p51 = scmp.eq.s32.totalorder %s11, 0
    %p52 = por %p50, %p51
    %p53 = scmp.ne.s32.totalorder %s45, %s47
    %p54 = scmp.eq.s32.totalorder %s16, 1
    %p55 = por %p53, %p54
    %p56 = scmp.ne.s32.totalorder %s47, %s48
    %p57 = scmp.eq.s32.totalorder %s16, 0
    %p58 = por %p56, %p57
    %p59 = scmp.ne.s32.totalorder %s47, %s48
    %p60 = scmp.eq.s32.totalorder %s17, 1
    %p61 = por %p59, %p60
    %p63 = scmp.ne.s32.totalorder %s48, %s62
    %p64 = scmp.eq.s32.totalorder %s17, 0
    %p65 = por %p63, %p64
    %s67 = sadd.s32 %s66, 1
    %p70 = scmp.eq.s32.totalorder %s11, 1
    %p71 = scmp.ne.s32.totalorder %s66, %s68
    %p72 = scmp.eq.s32.totalorder %s11, 0
    %p73 = por %p71, %p72
    %p74 = scmp.ne.s32.totalorder %s66, %s68
    %p75 = scmp.eq.s32.totalorder %s16, 1
    %p76 = por %p74, %p75
    %p77 = scmp.ne.s32.totalorder %s68, %s69
    %p78 = scmp.eq.s32.totalorder %s16, 0
    %p79 = por %p77, %p78
    %p80 = scmp.ne.s32.totalorder %s68, %s69
    %p81 = scmp.eq.s32.totalorder %s17, 1
    %p82 = por %p80, %p81
    %p84 = scmp.ne.s32.totalorder %s69, %s83
    %p85 = scmp.eq.s32.totalorder %s17, 0
    %p86 = por %p84, %p85
    %s87 = ssub.s32 %s11, %s18
    %p88 = scmp.eq.s32.totalorder %s87, 0
    %s90 = sadd.s32 %s89, 1
    %s91 = scalar_select %p88, %s89, %s90
    %p94 = pneg %p88
    %p95 = scmp.eq.s32.totalorder %s11, 1
    %p96 = por %p94, %p95
    %p97 = scmp.ne.s32.totalorder %s89, %s92
    %p98 = scmp.eq.s32.totalorder %s11, 0
    %p99 = por %p97, %p98
    %p100 = scmp.ne.s32.totalorder %s89, %s92
    %p101 = scmp.eq.s32.totalorder %s16, 1
    %p102 = por %p100, %p101
    %p103 = scmp.ne.s32.totalorder %s92, %s93
    %p104 = scmp.eq.s32.totalorder %s16, 0
    %p105 = por %p103, %p104
    %p106 = scmp.ne.s32.totalorder %s92, %s93
    %p107 = scmp.eq.s32.totalorder %s17, 1
    %p108 = por %p106, %p107
    %p110 = scmp.ne.s32.totalorder %s93, %s109
    %p111 = scmp.eq.s32.totalorder %s17, 0
    %p112 = por %p110, %p111
    %p113 = scmp.le.s32.totalorder 1, %s11
    %p114 = scmp.lt.s32.totalorder %s11, 3
    %p115 = pnand %p113, %p114
    %p116 = pneg %p115
    // Predicated region
    $region9: #{i3dd_forward.17} parent=5 // pred_check
      _
    $region10: #{i3dd_forward.17} parent=5 // pred_check_branch
      %118 = sbr.rel (%p115) target = $region12
    $region11: #{i3dd_forward.17} parent=5 // pred_region
      %s119 = ssub.s32 %s11, 1
      // Predicated region
      $region13: #{i3dd_forward.17} parent=11 // pred_check
        %p120 = pneg %p58
      $region14: #{i3dd_forward.17} parent=11 // pred_check_branch
        %122 = sbr.rel (%p120) target = $region16
      $region15: #{i3dd_forward.17} parent=11 // pred_region
        _
      $region16: #{i3dd_forward.17} parent=11 // pred_fallthru
        _
      // Predicated region
      $region17: #{i3dd_forward.17} parent=11 // pred_check
        %p123 = pneg %p79
      $region18: #{i3dd_forward.17} parent=11 // pred_check_branch
        %125 = sbr.rel (%p123) target = $region20
      $region19: #{i3dd_forward.17} parent=11 // pred_region
        _
      $region20: #{i3dd_forward.17} parent=11 // pred_fallthru
        _
    $region12: #{i3dd_forward.17} parent=5 // pred_fallthru
      _
    %p126 = scmp.lt.s32.totalorder %s11, 2
    // Predicated region
    $region21: #{i3dd_forward.17} parent=5 // pred_check
      %p127 = pneg %p126
    $region22: #{i3dd_forward.17} parent=5 // pred_check_branch
      %129 = sbr.rel (%p127) target = $region24
    $region23: #{i3dd_forward.17} parent=5 // pred_region
      // Predicated region
      $region25: #{i3dd_forward.17} parent=23 // pred_check
        %p130 = pneg %p31
      $region26: #{i3dd_forward.17} parent=23 // pred_check_branch
        %132 = sbr.rel (%p130) target = $region28
      $region27: #{i3dd_forward.17} parent=23 // pred_region
        %s133 = smul.u32 32, %s11
        %p134 = scmp.lt.s32.totalorder %s133, 63
        %s135 = scalar_select %p134, %s133, 63
        %s136 = smul.addr %s135, 8
        %s137 = scalar_lea.vmem %s0, %s136
        %s138 = smul.u32 32, %s11
      $region28: #{i3dd_forward.17} parent=23 // pred_fallthru
        _
    $region24: #{i3dd_forward.17} parent=5 // pred_fallthru
      _
    %p139 = scmp.le.s32.totalorder 1, %s11
    %p140 = scmp.lt.s32.totalorder %s11, 3
    %p141 = pnand %p139, %p140
    %p142 = pneg %p141
    // Predicated region
    $region29: #{i3dd_forward.17} parent=5 // pred_check
      _
    $region30: #{i3dd_forward.17} parent=5 // pred_check_branch
      %144 = sbr.rel (%p141) target = $region32
    $region31: #{i3dd_forward.17} parent=5 // pred_region
      %s145 = ssub.s32 %s11, 1
      %s146 = smul.u32 32, %s16
      %p147 = scmp.lt.s32.totalorder %s146, 63
      %s148 = scalar_select %p147, %s146, 63
      %s149 = smul.addr %s148, 8
      %s150 = scalar_lea.vmem %s0, %s149
      %p151 = pneg %p37
      %p152 = pneg %p34
      %p153 = pneg %p58
      %p154 = pneg %p55
      %p155 = pneg %p79
      %p156 = pneg %p76
      %p157 = pneg %p105
      %p158 = pneg %p102
      %s159 = smul.u32 32, %s16
      %p160 = scmp.lt.s32.totalorder %s159, 63
      %s161 = scalar_select %p160, %s159, 63
      %s162 = smul.addr %s161, 8
      %s163 = scalar_lea.vmem %s3, %s162
      %s164 = smul.u32 32, %s16
      %p165 = scmp.lt.s32.totalorder %s164, 63
      %s166 = scalar_select %p165, %s164, 63
      %s167 = smul.addr %s166, 8
      %s168 = scalar_lea.vmem %s0, %s167
      %s169 = smul.u32 32, %s16
      %s170 = smul.u32 32, %s16
      %p171 = scmp.lt.s32.totalorder %s170, 63
      %s172 = scalar_select %p171, %s170, 63
      %s173 = smul.addr %s172, 8
      %s174 = scalar_lea.vmem %s3, %s173
      %s175 = smul.u32 32, %s16
      %v176 = vld [vmem:[%s168] sm:$0xff]
      %v177 = vld [vmem:[%s168 + $0x8] sm:$0xff]
      %v178 = vld [vmem:[%s168 + $0x10] sm:$0xff]
      %v179 = vld [vmem:[%s168 + $0x18] sm:$0xff]
      %v180 = vld [vmem:[%s168 + $0x20] sm:$0xff]
      %v181 = vld [vmem:[%s168 + $0x28] sm:$0xff]
      %v182 = vld [vmem:[%s168 + $0x30] sm:$0xff]
      %v183 = vld [vmem:[%s168 + $0x38] sm:$0xff]
      %v184 = vld [vmem:[%s168 + $0x40] sm:$0xff]
      %v185 = vld [vmem:[%s168 + $0x48] sm:$0xff]
      %v186 = vld [vmem:[%s168 + $0x50] sm:$0xff]
      %v187 = vld [vmem:[%s168 + $0x58] sm:$0xff]
      %v188 = vld [vmem:[%s168 + $0x60] sm:$0xff]
      %v189 = vld [vmem:[%s168 + $0x68] sm:$0xff]
      %v190 = vld [vmem:[%s168 + $0x70] sm:$0xff]
      %v191 = vld [vmem:[%s168 + $0x78] sm:$0xff]
      %v192 = vld [vmem:[%s168 + $0x80] sm:$0xff]
      %v193 = vld [vmem:[%s168 + $0x88] sm:$0xff]
      %v194 = vld [vmem:[%s168 + $0x90] sm:$0xff]
      %v195 = vld [vmem:[%s168 + $0x98] sm:$0xff]
      %v196 = vld [vmem:[%s168 + $0xa0] sm:$0xff]
      %v197 = vld [vmem:[%s168 + $0xa8] sm:$0xff]
      %v198 = vld [vmem:[%s168 + $0xb0] sm:$0xff]
      %v199 = vld [vmem:[%s168 + $0xb8] sm:$0xff]
      %v200 = vld [vmem:[%s168 + $0xc0] sm:$0xff]
      %v201 = vld [vmem:[%s168 + $0xc8] sm:$0xff]
      %v202 = vld [vmem:[%s168 + $0xd0] sm:$0xff]
      %v203 = vld [vmem:[%s168 + $0xd8] sm:$0xff]
      %v204 = vld [vmem:[%s168 + $0xe0] sm:$0xff]
      %v205 = vld [vmem:[%s168 + $0xe8] sm:$0xff]
      %v206 = vld [vmem:[%s168 + $0xf0] sm:$0xff]
      %v207 = vld [vmem:[%s168 + $0xf8] sm:$0xff]
      %v208 = vld [vmem:[%s1] sm:$0x1]
      %v210 = vlaneseq
      %v211 = vshrl.u32 %v210, 7
      %v212 = vsub.s32 0, %v211
      %v213 = vrot.slane %v208, %v212
      %v215 = vmul.f32 %v176, %v213
      %v216 = vmul.f32 %v177, %v213
      %v217 = vmul.f32 %v178, %v213
      %v218 = vmul.f32 %v179, %v213
      %v219 = vmul.f32 %v180, %v213
      %v220 = vmul.f32 %v181, %v213
      %v221 = vmul.f32 %v182, %v213
      %v222 = vmul.f32 %v183, %v213
      %v223 = vmul.f32 %v184, %v213
      %v224 = vmul.f32 %v185, %v213
      %v225 = vmul.f32 %v186, %v213
      %v226 = vmul.f32 %v187, %v213
      %v227 = vmul.f32 %v188, %v213
      %v228 = vmul.f32 %v189, %v213
      %v229 = vmul.f32 %v190, %v213
      %v230 = vmul.f32 %v191, %v213
      %v231 = vmul.f32 %v192, %v213
      %v232 = vmul.f32 %v193, %v213
      %v233 = vmul.f32 %v194, %v213
      %v234 = vmul.f32 %v195, %v213
      %v235 = vmul.f32 %v196, %v213
      %v236 = vmul.f32 %v197, %v213
      %v237 = vmul.f32 %v198, %v213
      %v238 = vmul.f32 %v199, %v213
      %v239 = vmul.f32 %v200, %v213
      %v240 = vmul.f32 %v201, %v213
      %v241 = vmul.f32 %v202, %v213
      %v242 = vmul.f32 %v203, %v213
      %v243 = vmul.f32 %v204, %v213
      %v244 = vmul.f32 %v205, %v213
      %v245 = vmul.f32 %v206, %v213
      %v246 = vmul.f32 %v207, %v213
      %vm247 = vcmask 64512
      %v248 = vsel %vm247, %v215, 0.0
      %249 = vadd.xlane.f32.xlu0 %v248
      %v250 = vpop.xlane.xlu0 %249
      %v251 = vsel %vm247, %v216, 0.0
      %252 = vadd.xlane.f32.xlu0 %v251
      %v253 = vpop.xlane.xlu0 %252
      %v254 = vsel %vm247, %v217, 0.0
      %255 = vadd.xlane.f32.xlu0 %v254
      %v256 = vpop.xlane.xlu0 %255
      %v257 = vsel %vm247, %v218, 0.0
      %258 = vadd.xlane.f32.xlu0 %v257
      %v259 = vpop.xlane.xlu0 %258
      %v260 = vsel %vm247, %v219, 0.0
      %261 = vadd.xlane.f32.xlu0 %v260
      %v262 = vpop.xlane.xlu0 %261
      %v263 = vsel %vm247, %v220, 0.0
      %264 = vadd.xlane.f32.xlu0 %v263
      %v265 = vpop.xlane.xlu0 %264
      %v266 = vsel %vm247, %v221, 0.0
      %267 = vadd.xlane.f32.xlu0 %v266
      %v268 = vpop.xlane.xlu0 %267
      %v269 = vsel %vm247, %v222, 0.0
      %270 = vadd.xlane.f32.xlu0 %v269
      %v271 = vpop.xlane.xlu0 %270
      %v272 = vsel %vm247, %v223, 0.0
      %273 = vadd.xlane.f32.xlu0 %v272
      %v274 = vpop.xlane.xlu0 %273
      %v275 = vsel %vm247, %v224, 0.0
      %276 = vadd.xlane.f32.xlu0 %v275
      %v277 = vpop.xlane.xlu0 %276
      %v278 = vsel %vm247, %v225, 0.0
      %279 = vadd.xlane.f32.xlu0 %v278
      %v280 = vpop.xlane.xlu0 %279
      %v281 = vsel %vm247, %v226, 0.0
      %282 = vadd.xlane.f32.xlu0 %v281
      %v283 = vpop.xlane.xlu0 %282
      %v284 = vsel %vm247, %v227, 0.0
      %285 = vadd.xlane.f32.xlu0 %v284
      %v286 = vpop.xlane.xlu0 %285
      %v287 = vsel %vm247, %v228, 0.0
      %288 = vadd.xlane.f32.xlu0 %v287
      %v289 = vpop.xlane.xlu0 %288
      %v290 = vsel %vm247, %v229, 0.0
      %291 = vadd.xlane.f32.xlu0 %v290
      %v292 = vpop.xlane.xlu0 %291
      %v293 = vsel %vm247, %v230, 0.0
      %294 = vadd.xlane.f32.xlu0 %v293
      %v295 = vpop.xlane.xlu0 %294
      %v296 = vsel %vm247, %v231, 0.0
      %297 = vadd.xlane.f32.xlu0 %v296
      %v298 = vpop.xlane.xlu0 %297
      %v299 = vsel %vm247, %v232, 0.0
      %300 = vadd.xlane.f32.xlu0 %v299
      %v301 = vpop.xlane.xlu0 %300
      %v302 = vsel %vm247, %v233, 0.0
      %303 = vadd.xlane.f32.xlu0 %v302
      %v304 = vpop.xlane.xlu0 %303
      %v305 = vsel %vm247, %v234, 0.0
      %306 = vadd.xlane.f32.xlu0 %v305
      %v307 = vpop.xlane.xlu0 %306
      %v308 = vsel %vm247, %v235, 0.0
      %309 = vadd.xlane.f32.xlu0 %v308
      %v310 = vpop.xlane.xlu0 %309
      %v311 = vsel %vm247, %v236, 0.0
      %312 = vadd.xlane.f32.xlu0 %v311
      %v313 = vpop.xlane.xlu0 %312
      %v314 = vsel %vm247, %v237, 0.0
      %315 = vadd.xlane.f32.xlu0 %v314
      %v316 = vpop.xlane.xlu0 %315
      %v317 = vsel %vm247, %v238, 0.0
      %318 = vadd.xlane.f32.xlu0 %v317
      %v319 = vpop.xlane.xlu0 %318
      %v320 = vsel %vm247, %v239, 0.0
      %321 = vadd.xlane.f32.xlu0 %v320
      %v322 = vpop.xlane.xlu0 %321
      %v323 = vsel %vm247, %v240, 0.0
      %324 = vadd.xlane.f32.xlu0 %v323
      %v325 = vpop.xlane.xlu0 %324
      %v326 = vsel %vm247, %v241, 0.0
      %327 = vadd.xlane.f32.xlu0 %v326
      %v328 = vpop.xlane.xlu0 %327
      %v329 = vsel %vm247, %v242, 0.0
      %330 = vadd.xlane.f32.xlu0 %v329
      %v331 = vpop.xlane.xlu0 %330
      %v332 = vsel %vm247, %v243, 0.0
      %333 = vadd.xlane.f32.xlu0 %v332
      %v334 = vpop.xlane.xlu0 %333
      %v335 = vsel %vm247, %v244, 0.0
      %336 = vadd.xlane.f32.xlu0 %v335
      %v337 = vpop.xlane.xlu0 %336
      %v338 = vsel %vm247, %v245, 0.0
      %339 = vadd.xlane.f32.xlu0 %v338
      %v340 = vpop.xlane.xlu0 %339
      %v341 = vsel %vm247, %v246, 0.0
      %342 = vadd.xlane.f32.xlu0 %v341
      %v343 = vpop.xlane.xlu0 %342
      %v344 = vld [vmem:[#allocation2] sm:$0x1]
      %v346 = vlaneseq
      %v347 = vshrl.u32 %v346, 7
      %v348 = vsub.s32 0, %v347
      %v349 = vrot.slane %v344, %v348
      %v351 = vadd.f32 %v250, %v349
      %v352 = vadd.f32 %v253, %v349
      %v353 = vadd.f32 %v256, %v349
      %v354 = vadd.f32 %v259, %v349
      %v355 = vadd.f32 %v262, %v349
      %v356 = vadd.f32 %v265, %v349
      %v357 = vadd.f32 %v268, %v349
      %v358 = vadd.f32 %v271, %v349
      %v359 = vadd.f32 %v274, %v349
      %v360 = vadd.f32 %v277, %v349
      %v361 = vadd.f32 %v280, %v349
      %v362 = vadd.f32 %v283, %v349
      %v363 = vadd.f32 %v286, %v349
      %v364 = vadd.f32 %v289, %v349
      %v365 = vadd.f32 %v292, %v349
      %v366 = vadd.f32 %v295, %v349
      %v367 = vadd.f32 %v298, %v349
      %v368 = vadd.f32 %v301, %v349
      %v369 = vadd.f32 %v304, %v349
      %v370 = vadd.f32 %v307, %v349
      %v371 = vadd.f32 %v310, %v349
      %v372 = vadd.f32 %v313, %v349
      %v373 = vadd.f32 %v316, %v349
      %v374 = vadd.f32 %v319, %v349
      %v375 = vadd.f32 %v322, %v349
      %v376 = vadd.f32 %v325, %v349
      %v377 = vadd.f32 %v328, %v349
      %v378 = vadd.f32 %v331, %v349
      %v379 = vadd.f32 %v334, %v349
      %v380 = vadd.f32 %v337, %v349
      %v381 = vadd.f32 %v340, %v349
      %v382 = vadd.f32 %v343, %v349
      %vm383 = vcmask 7168
      %384 = vst.msk [vmem:[%s174] sm:$0xff] %vm383, %v351
      %385 = vst.msk [vmem:[%s174 + $0x8] sm:$0xff] %vm383, %v352
      %386 = vst.msk [vmem:[%s174 + $0x10] sm:$0xff] %vm383, %v353
      %387 = vst.msk [vmem:[%s174 + $0x18] sm:$0xff] %vm383, %v354
      %388 = vst.msk [vmem:[%s174 + $0x20] sm:$0xff] %vm383, %v355
      %389 = vst.msk [vmem:[%s174 + $0x28] sm:$0xff] %vm383, %v356
      %390 = vst.msk [vmem:[%s174 + $0x30] sm:$0xff] %vm383, %v357
      %391 = vst.msk [vmem:[%s174 + $0x38] sm:$0xff] %vm383, %v358
      %392 = vst.msk [vmem:[%s174 + $0x40] sm:$0xff] %vm383, %v359
      %393 = vst.msk [vmem:[%s174 + $0x48] sm:$0xff] %vm383, %v360
      %394 = vst.msk [vmem:[%s174 + $0x50] sm:$0xff] %vm383, %v361
      %395 = vst.msk [vmem:[%s174 + $0x58] sm:$0xff] %vm383, %v362
      %396 = vst.msk [vmem:[%s174 + $0x60] sm:$0xff] %vm383, %v363
      %397 = vst.msk [vmem:[%s174 + $0x68] sm:$0xff] %vm383, %v364
      %398 = vst.msk [vmem:[%s174 + $0x70] sm:$0xff] %vm383, %v365
      %399 = vst.msk [vmem:[%s174 + $0x78] sm:$0xff] %vm383, %v366
      %400 = vst.msk [vmem:[%s174 + $0x80] sm:$0xff] %vm383, %v367
      %401 = vst.msk [vmem:[%s174 + $0x88] sm:$0xff] %vm383, %v368
      %402 = vst.msk [vmem:[%s174 + $0x90] sm:$0xff] %vm383, %v369
      %403 = vst.msk [vmem:[%s174 + $0x98] sm:$0xff] %vm383, %v370
      %404 = vst.msk [vmem:[%s174 + $0xa0] sm:$0xff] %vm383, %v371
      %405 = vst.msk [vmem:[%s174 + $0xa8] sm:$0xff] %vm383, %v372
      %406 = vst.msk [vmem:[%s174 + $0xb0] sm:$0xff] %vm383, %v373
      %407 = vst.msk [vmem:[%s174 + $0xb8] sm:$0xff] %vm383, %v374
      %408 = vst.msk [vmem:[%s174 + $0xc0] sm:$0xff] %vm383, %v375
      %409 = vst.msk [vmem:[%s174 + $0xc8] sm:$0xff] %vm383, %v376
      %410 = vst.msk [vmem:[%s174 + $0xd0] sm:$0xff] %vm383, %v377
      %411 = vst.msk [vmem:[%s174 + $0xd8] sm:$0xff] %vm383, %v378
      %412 = vst.msk [vmem:[%s174 + $0xe0] sm:$0xff] %vm383, %v379
      %413 = vst.msk [vmem:[%s174 + $0xe8] sm:$0xff] %vm383, %v380
      %414 = vst.msk [vmem:[%s174 + $0xf0] sm:$0xff] %vm383, %v381
      %415 = vst.msk [vmem:[%s174 + $0xf8] sm:$0xff] %vm383, %v382
      %s416 = smul.u32 32, %s16
      %p417 = scmp.lt.s32.totalorder %s416, 63
      %s418 = scalar_select %p417, %s416, 63
      %s419 = smul.addr %s418, 8
      %s420 = scalar_lea.vmem %s3, %s419
      // Predicated region
      $region33: #{i3dd_forward.17} parent=31 // pred_check
        %p421 = pneg %p102
      $region34: #{i3dd_forward.17} parent=31 // pred_check_branch
        %423 = sbr.rel (%p421) target = $region36
      $region35: #{i3dd_forward.17} parent=31 // pred_region
        %s424 = smul.u32 32, %s16
      $region36: #{i3dd_forward.17} parent=31 // pred_fallthru
        _
    $region32: #{i3dd_forward.17} parent=5 // pred_fallthru
      _
    %p425 = scmp.le.s32.totalorder 2, %s11
    // Predicated region
    $region37: #{i3dd_forward.17} parent=5 // pred_check
      %p426 = pneg %p425
    $region38: #{i3dd_forward.17} parent=5 // pred_check_branch
      %428 = sbr.rel (%p426) target = $region40
    $region39: #{i3dd_forward.17} parent=5 // pred_region
      %s429 = ssub.s32 %s11, 2
      // Predicated region
      $region41: #{i3dd_forward.17} parent=39 // pred_check
        %p430 = pneg %p108
      $region42: #{i3dd_forward.17} parent=39 // pred_check_branch
        %432 = sbr.rel (%p430) target = $region44
      $region43: #{i3dd_forward.17} parent=39 // pred_region
        %s433 = smul.u32 32, %s17
        %p434 = scmp.lt.s32.totalorder %s433, 63
        %s435 = scalar_select %p434, %s433, 63
        %s436 = smul.addr %s435, 8
        %s437 = scalar_lea.vmem %s3, %s436
      $region44: #{i3dd_forward.17} parent=39 // pred_fallthru
        _
    $region40: #{i3dd_forward.17} parent=5 // pred_fallthru
      _
  $region6: #{i3dd_forward.17} parent=0 // loop_footer
    %s15 = sadd.s32 1, %s11
  $region7: #{i3dd_forward.17} parent=0 // loop_footer_branch
    %10 = sbr.rel target = $region3
  $region8: #{i3dd_forward.17} parent=0 // loop_exit
    _

</llo_original>
